<compile_context>
chip_gen: v5e
topology: v5e:2x2
jax: 0.10.0
libtpu: 0.0.40
codegen_flags: <defaults>
</compile_context>

<pallas_src>
import jax
import jax.numpy as jnp
from jax.experimental import pallas as pl
from jax.experimental.pallas import tpu as pltpu

# ---------------- config (small, consistent with the module) ----------------
B = 2            # batch
S_SRC = 8        # source sequence length
S_TGT = 6        # target sequence length
EMB = 16         # embedding_size
HID = 16         # hidden_size (encoder LSTM hidden; decoder uses 2*HID)
NUM_LAYERS = 2
IN_VOCAB = 11    # len(train_vocab)  (synthetic, original was an empty set)
OUT_VOCAB = 13   # len(test_vocab)   (synthetic)
VPAD = 128       # lane-dense padded vocab width for the fc / log-softmax
H2 = 2 * HID     # decoder hidden size

_VMEM = pl.BlockSpec(memory_space=pltpu.MemorySpace.VMEM)


# ----------------------------- the fused kernel -------------------------------
def _seq2seq_kernel(
    emb_src_ref,    # (S_SRC*B, EMB)   time-major flattened source embeddings
    emb_tgt_ref,    # (S_TGT*B, EMB)   time-major flattened target embeddings
    enc_wih0_ref,   # (EMB, 8*HID)     [Wih_f | Wih_b] lane-concat, layer 0
    enc_whh0_ref,   # (2*HID, 8*HID)   block-diag [Whh_f, 0; 0, Whh_b], layer 0
    enc_b0_ref,     # (1, 8*HID)
    enc_wih1_ref,   # (2*HID, 8*HID)   layer 1
    enc_whh1_ref,   # (2*HID, 8*HID)
    enc_b1_ref,     # (1, 8*HID)
    dec_wih0e_ref,  # (EMB, 4*H2)      decoder layer-0 W_ih, embedding rows
    dec_wih0c_ref,  # (2*HID, 4*H2)    decoder layer-0 W_ih, context rows
    dec_whh0_ref,   # (H2, 4*H2)
    dec_b0_ref,     # (1, 4*H2)
    dec_wih1_ref,   # (H2, 4*H2)
    dec_whh1_ref,   # (H2, 4*H2)
    dec_b1_ref,     # (1, 4*H2)
    fc_w_ref,       # (4*H2, VPAD)     zero rows except the h1 slot (rows 3*H2:4*H2)
    fc_b_ref,       # (1, VPAD)        -1e30 in padded lanes
    h_init_ref,     # (NUM_LAYERS, B, H2)  decoder initial hidden (randn)
    c_init_ref,     # (NUM_LAYERS, B, H2)  decoder initial cell   (randn)
    # outputs
    logp_ref,       # (S_TGT*B, VPAD)  log-softmax(fc(lstm_out)), lane-dense
    dec_packed_ref, # (S_TGT*B, 4*H2)  per (t,b): [c0 | c1 | h0 | h1]
    # scratch
    enc0_buf,       # (S_SRC*B, 2*HID) layer-0 bidir outputs, time-aligned rows
):
    f32 = jnp.float32
    G1 = 4 * HID     # per-direction gate width (encoder)
    G2 = 4 * H2      # decoder gate width

    def lstm_cell(gates, c_prev, H):
        # PyTorch gate order: i, f, g, o
        i = jax.nn.sigmoid(gates[:, 0 * H:1 * H])
        f = jax.nn.sigmoid(gates[:, 1 * H:2 * H])
        g = jnp.tanh(gates[:, 2 * H:3 * H])
        o = jax.nn.sigmoid(gates[:, 3 * H:4 * H])
        c = f * c_prev + i * g
        return o * jnp.tanh(c), c

    # =============== encoder layer 0 (bidirectional, fused) ===============
    # TODO(synk): dropout (p=0.5) on embeddings/between layers treated as eval-mode identity.
    # Hoisted input projection for BOTH directions at all timesteps, bias folded in.
    proj0 = (jnp.dot(emb_src_ref[...], enc_wih0_ref[...], preferred_element_type=f32)
             + enc_b0_ref[...])                                   # (S_SRC*B, 8*HID)
    whh0e = enc_whh0_ref[...]
    z16 = jnp.zeros((B, HID), f32)
    h_cat, cf, cb = jnp.zeros((B, 2 * HID), f32), z16, z16
    for s in range(S_SRC):                                        # static unroll (8 steps)
        gh = jnp.dot(h_cat, whh0e, preferred_element_type=f32)    # (B, 8*HID), K=32
        gf = proj0[s * B:(s + 1) * B, :G1] + gh[:, :G1]
        gb = proj0[(S_SRC - 1 - s) * B:(S_SRC - s) * B, G1:] + gh[:, G1:]
        hf, cf = lstm_cell(gf, cf, HID)
        hb, cb = lstm_cell(gb, cb, HID)
        # stream layer-0 outputs into VMEM, time-aligned: row-block t = [o0f[t] | o0b[t]]
        enc0_buf[s * B:(s + 1) * B, 0:HID] = hf
        enc0_buf[(S_SRC - 1 - s) * B:(S_SRC - s) * B, HID:2 * HID] = hb
        h_cat = jnp.concatenate([hf, hb], axis=1)

    # =============== encoder layer 1 (bidirectional, fused) ===============
    proj1 = (jnp.dot(enc0_buf[...], enc_wih1_ref[...], preferred_element_type=f32)
             + enc_b1_ref[...])                                   # (S_SRC*B, 8*HID)
    whh1e = enc_whh1_ref[...]
    h_cat, cf, cb = jnp.zeros((B, 2 * HID), f32), z16, z16
    # Attention: Softmax(dim=1) acts on a size-1 axis => weights == 1.0 and the context is
    # the unweighted sum of encoder outputs; accumulate it here, never materialize outputs.
    ctx = jnp.zeros((B, 2 * HID), f32)
    for s in range(S_SRC):                                        # static unroll (8 steps)
        gh = jnp.dot(h_cat, whh1e, preferred_element_type=f32)
        gf = proj1[s * B:(s + 1) * B, :G1] + gh[:, :G1]
        gb = proj1[(S_SRC - 1 - s) * B:(S_SRC - s) * B, G1:] + gh[:, G1:]
        hf, cf = lstm_cell(gf, cf, HID)
        hb, cb = lstm_cell(gb, cb, HID)
        h_cat = jnp.concatenate([hf, hb], axis=1)
        ctx = ctx + h_cat        # sum over source positions == attention context

    # =============== decoder: 2-layer LSTM with hidden = 2*HID ===============
    # TODO(synk): dropout on the target embedding treated as eval-mode identity.
    whh0d = dec_whh0_ref[...]
    wih1d = dec_wih1_ref[...]
    whh1d = dec_whh1_ref[...]
    b1d = dec_b1_ref[...]

    # Hoisted input projection (bias folded) and loop-invariant context term.
    proj_tgt = (jnp.dot(emb_tgt_ref[...], dec_wih0e_ref[...], preferred_element_type=f32)
                + dec_b0_ref[...])                                # (S_TGT*B, 4*H2)
    ctx_ih = jnp.dot(ctx, dec_wih0c_ref[...], preferred_element_type=f32)   # (B, 4*H2)

    # ---- t == 0: uses (initial_hidden, initial_cell) ----
    g0 = proj_tgt[0:B] + ctx_ih + jnp.dot(h_init_ref[0], whh0d, preferred_element_type=f32)
    h0, c0 = lstm_cell(g0, c_init_ref[0], H2)
    g1 = (jnp.dot(h0, wih1d, preferred_element_type=f32)
          + jnp.dot(h_init_ref[1], whh1d, preferred_element_type=f32) + b1d)
    h1, c1 = lstm_cell(g1, c_init_ref[1], H2)
    dec_packed_ref[0:B, :] = jnp.concatenate([c0, c1, h0, h1], axis=1)   # 128-lane store

    # ---- t >= 1: the reference re-feeds the t==0 hidden forever and ctx is constant,
    #      so the recurrent-h and context terms are loop invariant. ----
    const0 = ctx_ih + jnp.dot(h0, whh0d, preferred_element_type=f32)
    const1 = jnp.dot(h1, whh1d, preferred_element_type=f32) + b1d

    c0_t, c1_t = c0, c1
    for t in range(1, S_TGT):                                     # static unroll (5 steps)
        h0_t, c0_t = lstm_cell(proj_tgt[t * B:(t + 1) * B] + const0, c0_t, H2)
        g1 = jnp.dot(h0_t, wih1d, preferred_element_type=f32) + const1
        h1_t, c1_t = lstm_cell(g1, c1_t, H2)
        dec_packed_ref[t * B:(t + 1) * B, :] = jnp.concatenate(
            [c0_t, c1_t, h0_t, h1_t], axis=1)                     # 128-lane store

    # =============== fc + LogSoftmax over the vocab lanes ===============
    # fc weight rows are zero except the h1 slot of the packed rows, so the packed output
    # buffer is used directly as the (lane-dense) fc input — no per-step h1 gathering.
    x = dec_packed_ref[...]                                       # (S_TGT*B, 4*H2)
    logits = jnp.dot(x, fc_w_ref[...], preferred_element_type=f32) + fc_b_ref[...]
    m = jnp.max(logits, axis=1, keepdims=True)
    sh = logits - m
    lse = jnp.log(jnp.sum(jnp.exp(sh), axis=1, keepdims=True))
    logp_ref[...] = sh - lse                                      # (S_TGT*B, VPAD), dense


# ----------------------------- parameter setup --------------------------------
def _uniform(key, shape, scale):
    return jax.random.uniform(key, shape, jnp.float32, -scale, scale)


def init_params(key):
    ks = iter(jax.random.split(key, 64))
    p = {}
    p["enc_embedding"] = jax.random.normal(next(ks), (IN_VOCAB, EMB), jnp.float32)
    p["dec_embedding"] = jax.random.normal(next(ks), (OUT_VOCAB, EMB), jnp.float32)

    # encoder: bidirectional, 2 layers, hidden=HID (weights stored transposed vs PyTorch)
    sc = 1.0 / jnp.sqrt(HID)
    for layer in range(NUM_LAYERS):
        in_dim = EMB if layer == 0 else 2 * HID
        for d in ("f", "b"):
            p[f"enc_wih{layer}{d}"] = _uniform(next(ks), (in_dim, 4 * HID), sc)
            p[f"enc_whh{layer}{d}"] = _uniform(next(ks), (HID, 4 * HID), sc)
            p[f"enc_b{layer}{d}"] = _uniform(next(ks), (1, 4 * HID), sc)

    # decoder: 2 layers, hidden=2*HID, layer-0 input = EMB + 2*HID (order: embedding, context)
    sc2 = 1.0 / jnp.sqrt(H2)
    p["dec_wih0"] = _uniform(next(ks), (EMB + H2, 4 * H2), sc2)
    p["dec_whh0"] = _uniform(next(ks), (H2, 4 * H2), sc2)
    p["dec_b0"] = _uniform(next(ks), (1, 4 * H2), sc2)
    p["dec_wih1"] = _uniform(next(ks), (H2, 4 * H2), sc2)
    p["dec_whh1"] = _uniform(next(ks), (H2, 4 * H2), sc2)
    p["dec_b1"] = _uniform(next(ks), (1, 4 * H2), sc2)

    p["fc_w"] = _uniform(next(ks), (H2, OUT_VOCAB), sc2)
    p["fc_b"] = _uniform(next(ks), (1, 1, OUT_VOCAB), sc2)
    return p


def pack_params(params):
    """One-time packing into kernel-friendly layouts (NOT part of the per-call jit)."""
    packed = {
        "enc_embedding": params["enc_embedding"],
        "dec_embedding": params["dec_embedding"],
    }
    for layer in range(NUM_LAYERS):
        whhf, whhb = params[f"enc_whh{layer}f"], params[f"enc_whh{layer}b"]
        packed[f"enc_wih{layer}"] = jnp.concatenate(
            [params[f"enc_wih{layer}f"], params[f"enc_wih{layer}b"]], axis=1)     # (in, 8H)
        packed[f"enc_whh{layer}"] = jnp.concatenate(                               # block-diag
            [jnp.concatenate([whhf, jnp.zeros_like(whhf)], axis=1),
             jnp.concatenate([jnp.zeros_like(whhb), whhb], axis=1)], axis=0)       # (2H, 8H)
        packed[f"enc_b{layer}"] = jnp.concatenate(
            [params[f"enc_b{layer}f"], params[f"enc_b{layer}b"]], axis=1)          # (1, 8H)

    packed["dec_wih0e"] = params["dec_wih0"][:EMB]
    packed["dec_wih0c"] = params["dec_wih0"][EMB:]
    packed["dec_whh0"] = params["dec_whh0"]
    packed["dec_b0"] = params["dec_b0"]
    packed["dec_wih1"] = params["dec_wih1"]
    packed["dec_whh1"] = params["dec_whh1"]
    packed["dec_b1"] = params["dec_b1"]

    # fc: rows aligned with the packed per-step layout [c0|c1|h0|h1] -> only h1 rows nonzero;
    # padded vocab lanes get a -1e30 bias so the log-softmax over real columns is unchanged.
    fc_w_full = jnp.zeros((4 * H2, VPAD), jnp.float32)
    fc_w_full = fc_w_full.at[3 * H2:, :OUT_VOCAB].set(params["fc_w"])
    fc_b_pad = jnp.full((1, VPAD), -1e30, jnp.float32).at[:, :OUT_VOCAB].set(
        params["fc_b"].reshape(1, OUT_VOCAB))
    packed["fc_w"] = fc_w_full
    packed["fc_b"] = fc_b_pad
    return packed


# ------------------------------- wrapper ---------------------------------------
def seq2seq_forward(packed, source, target, state_key, teacher_forcing=1.0):
    del teacher_forcing           # ratio == 1.0 -> teacher forcing always taken
    Bb, S = source.shape
    _, T = target.shape

    # Embedding gathers stay in plain JAX; flattened time-major for the hoisted projections.
    emb_src = jnp.transpose(packed["enc_embedding"][source], (1, 0, 2)).reshape(S * Bb, EMB)
    emb_tgt = jnp.transpose(packed["dec_embedding"][target], (1, 0, 2)).reshape(T * Bb, EMB)

    # torch.randn initial decoder states -> deterministic jax.random.normal
    k1, k2 = jax.random.split(state_key)
    initial_hidden = jax.random.normal(k1, (NUM_LAYERS, Bb, H2), jnp.float32)
    initial_cell = jax.random.normal(k2, (NUM_LAYERS, Bb, H2), jnp.float32)

    logp_flat, dec_packed = pl.pallas_call(
        _seq2seq_kernel,
        in_specs=[_VMEM] * 19,
        out_specs=(_VMEM, _VMEM),
        out_shape=(
            jax.ShapeDtypeStruct((T * Bb, VPAD), jnp.float32),
            jax.ShapeDtypeStruct((T * Bb, 4 * H2), jnp.float32),
        ),
        scratch_shapes=[pltpu.VMEM((S * Bb, 2 * HID), jnp.float32)],
    )(emb_src, emb_tgt,
      packed["enc_wih0"], packed["enc_whh0"], packed["enc_b0"],
      packed["enc_wih1"], packed["enc_whh1"], packed["enc_b1"],
      packed["dec_wih0e"], packed["dec_wih0c"], packed["dec_whh0"], packed["dec_b0"],
      packed["dec_wih1"], packed["dec_whh1"], packed["dec_b1"],
      packed["fc_w"], packed["fc_b"],
      initial_hidden, initial_cell)

    # Unpack in plain JAX (free XLA plumbing).
    log_probs = jnp.transpose(logp_flat.reshape(T, Bb, VPAD), (1, 0, 2))[:, :, :OUT_VOCAB]
    packed3 = dec_packed.reshape(T, Bb, 4 * H2)
    cell_states = jnp.stack([packed3[:, :, 0:H2], packed3[:, :, H2:2 * H2]], axis=0)
    dec_hid0 = jnp.stack([packed3[0, :, 2 * H2:3 * H2], packed3[0, :, 3 * H2:4 * H2]], axis=0)
    # hidden_states = [initial_hidden] + T copies of the t==0 hidden (faithful to the
    # reference, where dec_hidden is only ever assigned at timestep 0).
    hidden_states = jnp.concatenate(
        [initial_hidden[:, None],
         jnp.broadcast_to(dec_hid0[:, None], (NUM_LAYERS, T, Bb, H2))], axis=1)
    return log_probs, hidden_states, cell_states


# --------------------------------- main ----------------------------------------
if __name__ == "__main__":
    root = jax.random.PRNGKey(0)
    k_params, k_src, k_tgt, k_state = jax.random.split(root, 4)

    params = init_params(k_params)
    packed = pack_params(params)          # one-time weight packing, outside the jitted forward

    source = jax.random.randint(k_src, (B, S_SRC), 0, IN_VOCAB, dtype=jnp.int32)
    target = jax.random.randint(k_tgt, (B, S_TGT), 0, OUT_VOCAB, dtype=jnp.int32)

    fwd = jax.jit(seq2seq_forward)
    outs, hiddens, cells = fwd(packed, source, target, k_state)
    jax.block_until_ready((outs, hiddens, cells))

    assert outs.shape == (B, S_TGT, OUT_VOCAB)
    assert hiddens.shape == (NUM_LAYERS, S_TGT + 1, B, 2 * HID)
    assert cells.shape == (NUM_LAYERS, S_TGT, B, 2 * HID)
    # log-softmax sanity: probabilities along vocab sum to ~1 and are finite
    assert jnp.allclose(jnp.exp(outs).sum(-1), 1.0, atol=1e-4)
    assert bool(jnp.all(jnp.isfinite(outs)))
    print("KERNEL_OK")
</pallas_src>

<mosaic_0001>
module attributes {stable_mosaic.version = 11 : i64} {
  func.func @_seq2seq_kernel(%arg0: memref<16x16xf32, #tpu.memory_space<vmem>>, %arg1: memref<12x16xf32, #tpu.memory_space<vmem>>, %arg2: memref<16x128xf32, #tpu.memory_space<vmem>>, %arg3: memref<32x128xf32, #tpu.memory_space<vmem>>, %arg4: memref<1x128xf32, #tpu.memory_space<vmem>>, %arg5: memref<32x128xf32, #tpu.memory_space<vmem>>, %arg6: memref<32x128xf32, #tpu.memory_space<vmem>>, %arg7: memref<1x128xf32, #tpu.memory_space<vmem>>, %arg8: memref<16x128xf32, #tpu.memory_space<vmem>>, %arg9: memref<32x128xf32, #tpu.memory_space<vmem>>, %arg10: memref<32x128xf32, #tpu.memory_space<vmem>>, %arg11: memref<1x128xf32, #tpu.memory_space<vmem>>, %arg12: memref<32x128xf32, #tpu.memory_space<vmem>>, %arg13: memref<32x128xf32, #tpu.memory_space<vmem>>, %arg14: memref<1x128xf32, #tpu.memory_space<vmem>>, %arg15: memref<128x128xf32, #tpu.memory_space<vmem>>, %arg16: memref<1x128xf32, #tpu.memory_space<vmem>>, %arg17: memref<2x2x32xf32, #tpu.memory_space<vmem>>, %arg18: memref<2x2x32xf32, #tpu.memory_space<vmem>>, %arg19: memref<12x128xf32, #tpu.memory_space<vmem>>, %arg20: memref<12x128xf32, #tpu.memory_space<vmem>>, %arg21: memref<16x32xf32, #tpu.memory_space<vmem>>) attributes {dimension_semantics = [], scalar_prefetch = 0 : i64, scratch_operands = 1 : i64, tpu.core_type = #tpu.core_type<tc>} {
    %c0 = arith.constant 0 : index
    %c0_0 = arith.constant 0 : index
    %0 = vector.load %arg0[%c0, %c0_0] : memref<16x16xf32, #tpu.memory_space<vmem>>, vector<16x16xf32>
    %c0_1 = arith.constant 0 : index
    %c0_2 = arith.constant 0 : index
    %1 = vector.load %arg2[%c0_1, %c0_2] : memref<16x128xf32, #tpu.memory_space<vmem>>, vector<16x128xf32>
    %cst = arith.constant dense<0.000000e+00> : vector<16x128xf32>
    %2 = tpu.matmul %0, %1, %cst {dimension_numbers = #tpu.dot_dimension_numbers<[1], [0], [0], [1], [0, 0, 1, 1], [], []>} : vector<16x16xf32>, vector<16x128xf32>, vector<16x128xf32> -> vector<16x128xf32>
    %c0_3 = arith.constant 0 : index
    %c0_4 = arith.constant 0 : index
    %3 = vector.load %arg4[%c0_3, %c0_4] : memref<1x128xf32, #tpu.memory_space<vmem>>, vector<1x128xf32>
    %4 = vector.broadcast %3 : vector<1x128xf32> to vector<16x128xf32>
    %5 = arith.addf %2, %4 : vector<16x128xf32>
    %c0_5 = arith.constant 0 : index
    %c0_6 = arith.constant 0 : index
    %6 = vector.load %arg3[%c0_5, %c0_6] : memref<32x128xf32, #tpu.memory_space<vmem>>, vector<32x128xf32>
    %cst_7 = arith.constant 0.000000e+00 : f32
    %7 = vector.broadcast %cst_7 : f32 to vector<2x16xf32>
    %cst_8 = arith.constant 0.000000e+00 : f32
    %8 = vector.broadcast %cst_8 : f32 to vector<2x32xf32>
    %cst_9 = arith.constant dense<0.000000e+00> : vector<2x128xf32>
    %9 = tpu.matmul %8, %6, %cst_9 {dimension_numbers = #tpu.dot_dimension_numbers<[1], [0], [0], [1], [0, 0, 1, 1], [], []>} : vector<2x32xf32>, vector<32x128xf32>, vector<2x128xf32> -> vector<2x128xf32>
    %10 = vector.extract_strided_slice %5 {offsets = [0, 0], sizes = [2, 64], strides = [1, 1]} : vector<16x128xf32> to vector<2x64xf32>
    %11 = vector.extract_strided_slice %9 {offsets = [0, 0], sizes = [2, 64], strides = [1, 1]} : vector<2x128xf32> to vector<2x64xf32>
    %12 = arith.addf %10, %11 : vector<2x64xf32>
    %13 = vector.extract_strided_slice %5 {offsets = [14, 64], sizes = [2, 64], strides = [1, 1]} : vector<16x128xf32> to vector<2x64xf32>
    %14 = vector.extract_strided_slice %9 {offsets = [0, 64], sizes = [2, 64], strides = [1, 1]} : vector<2x128xf32> to vector<2x64xf32>
    %15 = arith.addf %13, %14 : vector<2x64xf32>
    %16 = vector.extract_strided_slice %12 {offsets = [0, 0], sizes = [2, 16], strides = [1, 1]} : vector<2x64xf32> to vector<2x16xf32>
    %17 = arith.negf %16 : vector<2x16xf32>
    %18 = math.exp %17 : vector<2x16xf32>
    %cst_10 = arith.constant 1.000000e+00 : f32
    %19 = vector.broadcast %cst_10 : f32 to vector<2x16xf32>
    %20 = arith.addf %19, %18 : vector<2x16xf32>
    %21 = arith.divf %19, %20 : vector<2x16xf32>
    %22 = vector.extract_strided_slice %12 {offsets = [0, 16], sizes = [2, 16], strides = [1, 1]} : vector<2x64xf32> to vector<2x16xf32>
    %23 = arith.negf %22 : vector<2x16xf32>
    %24 = math.exp %23 : vector<2x16xf32>
    %cst_11 = arith.constant 1.000000e+00 : f32
    %25 = vector.broadcast %cst_11 : f32 to vector<2x16xf32>
    %26 = arith.addf %25, %24 : vector<2x16xf32>
    %27 = arith.divf %25, %26 : vector<2x16xf32>
    %28 = vector.extract_strided_slice %12 {offsets = [0, 32], sizes = [2, 16], strides = [1, 1]} : vector<2x64xf32> to vector<2x16xf32>
    %29 = math.tanh %28 : vector<2x16xf32>
    %30 = vector.extract_strided_slice %12 {offsets = [0, 48], sizes = [2, 16], strides = [1, 1]} : vector<2x64xf32> to vector<2x16xf32>
    %31 = arith.negf %30 : vector<2x16xf32>
    %32 = math.exp %31 : vector<2x16xf32>
    %cst_12 = arith.constant 1.000000e+00 : f32
    %33 = vector.broadcast %cst_12 : f32 to vector<2x16xf32>
    %34 = arith.addf %33, %32 : vector<2x16xf32>
    %35 = arith.divf %33, %34 : vector<2x16xf32>
    %36 = arith.mulf %27, %7 : vector<2x16xf32>
    %37 = arith.mulf %21, %29 : vector<2x16xf32>
    %38 = arith.addf %36, %37 : vector<2x16xf32>
    %39 = math.tanh %38 : vector<2x16xf32>
    %40 = arith.mulf %35, %39 : vector<2x16xf32>
    %41 = vector.extract_strided_slice %15 {offsets = [0, 0], sizes = [2, 16], strides = [1, 1]} : vector<2x64xf32> to vector<2x16xf32>
    %42 = arith.negf %41 : vector<2x16xf32>
    %43 = math.exp %42 : vector<2x16xf32>
    %cst_13 = arith.constant 1.000000e+00 : f32
    %44 = vector.broadcast %cst_13 : f32 to vector<2x16xf32>
    %45 = arith.addf %44, %43 : vector<2x16xf32>
    %46 = arith.divf %44, %45 : vector<2x16xf32>
    %47 = vector.extract_strided_slice %15 {offsets = [0, 16], sizes = [2, 16], strides = [1, 1]} : vector<2x64xf32> to vector<2x16xf32>
    %48 = arith.negf %47 : vector<2x16xf32>
    %49 = math.exp %48 : vector<2x16xf32>
    %cst_14 = arith.constant 1.000000e+00 : f32
    %50 = vector.broadcast %cst_14 : f32 to vector<2x16xf32>
    %51 = arith.addf %50, %49 : vector<2x16xf32>
    %52 = arith.divf %50, %51 : vector<2x16xf32>
    %53 = vector.extract_strided_slice %15 {offsets = [0, 32], sizes = [2, 16], strides = [1, 1]} : vector<2x64xf32> to vector<2x16xf32>
    %54 = math.tanh %53 : vector<2x16xf32>
    %55 = vector.extract_strided_slice %15 {offsets = [0, 48], sizes = [2, 16], strides = [1, 1]} : vector<2x64xf32> to vector<2x16xf32>
    %56 = arith.negf %55 : vector<2x16xf32>
    %57 = math.exp %56 : vector<2x16xf32>
    %cst_15 = arith.constant 1.000000e+00 : f32
    %58 = vector.broadcast %cst_15 : f32 to vector<2x16xf32>
    %59 = arith.addf %58, %57 : vector<2x16xf32>
    %60 = arith.divf %58, %59 : vector<2x16xf32>
    %61 = arith.mulf %52, %7 : vector<2x16xf32>
    %62 = arith.mulf %46, %54 : vector<2x16xf32>
    %63 = arith.addf %61, %62 : vector<2x16xf32>
    %64 = math.tanh %63 : vector<2x16xf32>
    %65 = arith.mulf %60, %64 : vector<2x16xf32>
    %c0_16 = arith.constant 0 : index
    %c0_17 = arith.constant 0 : index
    %66 = vector.load %arg21[%c0_16, %c0_17] : memref<16x32xf32, #tpu.memory_space<vmem>>, vector<2x16xf32>
    tpu.vector_store %arg21[%c0_16, %c0_17], %40 {strides = array<i32>} : memref<16x32xf32, #tpu.memory_space<vmem>>, vector<2x16xf32>,
    %c14 = arith.constant 14 : index
    %c16 = arith.constant 16 : index
    %67 = vector.load %arg21[%c14, %c16] : memref<16x32xf32, #tpu.memory_space<vmem>>, vector<2x16xf32>
    tpu.vector_store %arg21[%c14, %c16], %65 {strides = array<i32>} : memref<16x32xf32, #tpu.memory_space<vmem>>, vector<2x16xf32>,
    %68 = tpu.concatenate %40, %65 in 1 : vector<2x16xf32>, vector<2x16xf32> -> vector<2x32xf32>
    %cst_18 = arith.constant dense<0.000000e+00> : vector<2x128xf32>
    %69 = tpu.matmul %68, %6, %cst_18 {dimension_numbers = #tpu.dot_dimension_numbers<[1], [0], [0], [1], [0, 0, 1, 1], [], []>} : vector<2x32xf32>, vector<32x128xf32>, vector<2x128xf32> -> vector<2x128xf32>
    %70 = vector.extract_strided_slice %5 {offsets = [2, 0], sizes = [2, 64], strides = [1, 1]} : vector<16x128xf32> to vector<2x64xf32>
    %71 = vector.extract_strided_slice %69 {offsets = [0, 0], sizes = [2, 64], strides = [1, 1]} : vector<2x128xf32> to vector<2x64xf32>
    %72 = arith.addf %70, %71 : vector<2x64xf32>
    %73 = vector.extract_strided_slice %5 {offsets = [12, 64], sizes = [2, 64], strides = [1, 1]} : vector<16x128xf32> to vector<2x64xf32>
    %74 = vector.extract_strided_slice %69 {offsets = [0, 64], sizes = [2, 64], strides = [1, 1]} : vector<2x128xf32> to vector<2x64xf32>
    %75 = arith.addf %73, %74 : vector<2x64xf32>
    %76 = vector.extract_strided_slice %72 {offsets = [0, 0], sizes = [2, 16], strides = [1, 1]} : vector<2x64xf32> to vector<2x16xf32>
    %77 = arith.negf %76 : vector<2x16xf32>
    %78 = math.exp %77 : vector<2x16xf32>
    %cst_19 = arith.constant 1.000000e+00 : f32
    %79 = vector.broadcast %cst_19 : f32 to vector<2x16xf32>
    %80 = arith.addf %79, %78 : vector<2x16xf32>
    %81 = arith.divf %79, %80 : vector<2x16xf32>
    %82 = vector.extract_strided_slice %72 {offsets = [0, 16], sizes = [2, 16], strides = [1, 1]} : vector<2x64xf32> to vector<2x16xf32>
    %83 = arith.negf %82 : vector<2x16xf32>
    %84 = math.exp %83 : vector<2x16xf32>
    %cst_20 = arith.constant 1.000000e+00 : f32
    %85 = vector.broadcast %cst_20 : f32 to vector<2x16xf32>
    %86 = arith.addf %85, %84 : vector<2x16xf32>
    %87 = arith.divf %85, %86 : vector<2x16xf32>
    %88 = vector.extract_strided_slice %72 {offsets = [0, 32], sizes = [2, 16], strides = [1, 1]} : vector<2x64xf32> to vector<2x16xf32>
    %89 = math.tanh %88 : vector<2x16xf32>
    %90 = vector.extract_strided_slice %72 {offsets = [0, 48], sizes = [2, 16], strides = [1, 1]} : vector<2x64xf32> to vector<2x16xf32>
    %91 = arith.negf %90 : vector<2x16xf32>
    %92 = math.exp %91 : vector<2x16xf32>
    %cst_21 = arith.constant 1.000000e+00 : f32
    %93 = vector.broadcast %cst_21 : f32 to vector<2x16xf32>
    %94 = arith.addf %93, %92 : vector<2x16xf32>
    %95 = arith.divf %93, %94 : vector<2x16xf32>
    %96 = arith.mulf %87, %38 : vector<2x16xf32>
    %97 = arith.mulf %81, %89 : vector<2x16xf32>
    %98 = arith.addf %96, %97 : vector<2x16xf32>
    %99 = math.tanh %98 : vector<2x16xf32>
    %100 = arith.mulf %95, %99 : vector<2x16xf32>
    %101 = vector.extract_strided_slice %75 {offsets = [0, 0], sizes = [2, 16], strides = [1, 1]} : vector<2x64xf32> to vector<2x16xf32>
    %102 = arith.negf %101 : vector<2x16xf32>
    %103 = math.exp %102 : vector<2x16xf32>
    %cst_22 = arith.constant 1.000000e+00 : f32
    %104 = vector.broadcast %cst_22 : f32 to vector<2x16xf32>
    %105 = arith.addf %104, %103 : vector<2x16xf32>
    %106 = arith.divf %104, %105 : vector<2x16xf32>
    %107 = vector.extract_strided_slice %75 {offsets = [0, 16], sizes = [2, 16], strides = [1, 1]} : vector<2x64xf32> to vector<2x16xf32>
    %108 = arith.negf %107 : vector<2x16xf32>
    %109 = math.exp %108 : vector<2x16xf32>
    %cst_23 = arith.constant 1.000000e+00 : f32
    %110 = vector.broadcast %cst_23 : f32 to vector<2x16xf32>
    %111 = arith.addf %110, %109 : vector<2x16xf32>
    %112 = arith.divf %110, %111 : vector<2x16xf32>
    %113 = vector.extract_strided_slice %75 {offsets = [0, 32], sizes = [2, 16], strides = [1, 1]} : vector<2x64xf32> to vector<2x16xf32>
    %114 = math.tanh %113 : vector<2x16xf32>
    %115 = vector.extract_strided_slice %75 {offsets = [0, 48], sizes = [2, 16], strides = [1, 1]} : vector<2x64xf32> to vector<2x16xf32>
    %116 = arith.negf %115 : vector<2x16xf32>
    %117 = math.exp %116 : vector<2x16xf32>
    %cst_24 = arith.constant 1.000000e+00 : f32
    %118 = vector.broadcast %cst_24 : f32 to vector<2x16xf32>
    %119 = arith.addf %118, %117 : vector<2x16xf32>
    %120 = arith.divf %118, %119 : vector<2x16xf32>
    %121 = arith.mulf %112, %63 : vector<2x16xf32>
    %122 = arith.mulf %106, %114 : vector<2x16xf32>
    %123 = arith.addf %121, %122 : vector<2x16xf32>
    %124 = math.tanh %123 : vector<2x16xf32>
    %125 = arith.mulf %120, %124 : vector<2x16xf32>
    %c2 = arith.constant 2 : index
    %c0_25 = arith.constant 0 : index
    %126 = vector.load %arg21[%c2, %c0_25] : memref<16x32xf32, #tpu.memory_space<vmem>>, vector<2x16xf32>
    tpu.vector_store %arg21[%c2, %c0_25], %100 {strides = array<i32>} : memref<16x32xf32, #tpu.memory_space<vmem>>, vector<2x16xf32>,
    %c12 = arith.constant 12 : index
    %c16_26 = arith.constant 16 : index
    %127 = vector.load %arg21[%c12, %c16_26] : memref<16x32xf32, #tpu.memory_space<vmem>>, vector<2x16xf32>
    tpu.vector_store %arg21[%c12, %c16_26], %125 {strides = array<i32>} : memref<16x32xf32, #tpu.memory_space<vmem>>, vector<2x16xf32>,
    %128 = tpu.concatenate %100, %125 in 1 : vector<2x16xf32>, vector<2x16xf32> -> vector<2x32xf32>
    %cst_27 = arith.constant dense<0.000000e+00> : vector<2x128xf32>
    %129 = tpu.matmul %128, %6, %cst_27 {dimension_numbers = #tpu.dot_dimension_numbers<[1], [0], [0], [1], [0, 0, 1, 1], [], []>} : vector<2x32xf32>, vector<32x128xf32>, vector<2x128xf32> -> vector<2x128xf32>
    %130 = vector.extract_strided_slice %5 {offsets = [4, 0], sizes = [2, 64], strides = [1, 1]} : vector<16x128xf32> to vector<2x64xf32>
    %131 = vector.extract_strided_slice %129 {offsets = [0, 0], sizes = [2, 64], strides = [1, 1]} : vector<2x128xf32> to vector<2x64xf32>
    %132 = arith.addf %130, %131 : vector<2x64xf32>
    %133 = vector.extract_strided_slice %5 {offsets = [10, 64], sizes = [2, 64], strides = [1, 1]} : vector<16x128xf32> to vector<2x64xf32>
    %134 = vector.extract_strided_slice %129 {offsets = [0, 64], sizes = [2, 64], strides = [1, 1]} : vector<2x128xf32> to vector<2x64xf32>
    %135 = arith.addf %133, %134 : vector<2x64xf32>
    %136 = vector.extract_strided_slice %132 {offsets = [0, 0], sizes = [2, 16], strides = [1, 1]} : vector<2x64xf32> to vector<2x16xf32>
    %137 = arith.negf %136 : vector<2x16xf32>
    %138 = math.exp %137 : vector<2x16xf32>
    %cst_28 = arith.constant 1.000000e+00 : f32
    %139 = vector.broadcast %cst_28 : f32 to vector<2x16xf32>
    %140 = arith.addf %139, %138 : vector<2x16xf32>
    %141 = arith.divf %139, %140 : vector<2x16xf32>
    %142 = vector.extract_strided_slice %132 {offsets = [0, 16], sizes = [2, 16], strides = [1, 1]} : vector<2x64xf32> to vector<2x16xf32>
    %143 = arith.negf %142 : vector<2x16xf32>
    %144 = math.exp %143 : vector<2x16xf32>
    %cst_29 = arith.constant 1.000000e+00 : f32
    %145 = vector.broadcast %cst_29 : f32 to vector<2x16xf32>
    %146 = arith.addf %145, %144 : vector<2x16xf32>
    %147 = arith.divf %145, %146 : vector<2x16xf32>
    %148 = vector.extract_strided_slice %132 {offsets = [0, 32], sizes = [2, 16], strides = [1, 1]} : vector<2x64xf32> to vector<2x16xf32>
    %149 = math.tanh %148 : vector<2x16xf32>
    %150 = vector.extract_strided_slice %132 {offsets = [0, 48], sizes = [2, 16], strides = [1, 1]} : vector<2x64xf32> to vector<2x16xf32>
    %151 = arith.negf %150 : vector<2x16xf32>
    %152 = math.exp %151 : vector<2x16xf32>
    %cst_30 = arith.constant 1.000000e+00 : f32
    %153 = vector.broadcast %cst_30 : f32 to vector<2x16xf32>
    %154 = arith.addf %153, %152 : vector<2x16xf32>
    %155 = arith.divf %153, %154 : vector<2x16xf32>
    %156 = arith.mulf %147, %98 : vector<2x16xf32>
    %157 = arith.mulf %141, %149 : vector<2x16xf32>
    %158 = arith.addf %156, %157 : vector<2x16xf32>
    %159 = math.tanh %158 : vector<2x16xf32>
    %160 = arith.mulf %155, %159 : vector<2x16xf32>
    %161 = vector.extract_strided_slice %135 {offsets = [0, 0], sizes = [2, 16], strides = [1, 1]} : vector<2x64xf32> to vector<2x16xf32>
    %162 = arith.negf %161 : vector<2x16xf32>
    %163 = math.exp %162 : vector<2x16xf32>
    %cst_31 = arith.constant 1.000000e+00 : f32
    %164 = vector.broadcast %cst_31 : f32 to vector<2x16xf32>
    %165 = arith.addf %164, %163 : vector<2x16xf32>
    %166 = arith.divf %164, %165 : vector<2x16xf32>
    %167 = vector.extract_strided_slice %135 {offsets = [0, 16], sizes = [2, 16], strides = [1, 1]} : vector<2x64xf32> to vector<2x16xf32>
    %168 = arith.negf %167 : vector<2x16xf32>
    %169 = math.exp %168 : vector<2x16xf32>
    %cst_32 = arith.constant 1.000000e+00 : f32
    %170 = vector.broadcast %cst_32 : f32 to vector<2x16xf32>
    %171 = arith.addf %170, %169 : vector<2x16xf32>
    %172 = arith.divf %170, %171 : vector<2x16xf32>
    %173 = vector.extract_strided_slice %135 {offsets = [0, 32], sizes = [2, 16], strides = [1, 1]} : vector<2x64xf32> to vector<2x16xf32>
    %174 = math.tanh %173 : vector<2x16xf32>
    %175 = vector.extract_strided_slice %135 {offsets = [0, 48], sizes = [2, 16], strides = [1, 1]} : vector<2x64xf32> to vector<2x16xf32>
    %176 = arith.negf %175 : vector<2x16xf32>
    %177 = math.exp %176 : vector<2x16xf32>
    %cst_33 = arith.constant 1.000000e+00 : f32
    %178 = vector.broadcast %cst_33 : f32 to vector<2x16xf32>
    %179 = arith.addf %178, %177 : vector<2x16xf32>
    %180 = arith.divf %178, %179 : vector<2x16xf32>
    %181 = arith.mulf %172, %123 : vector<2x16xf32>
    %182 = arith.mulf %166, %174 : vector<2x16xf32>
    %183 = arith.addf %181, %182 : vector<2x16xf32>
    %184 = math.tanh %183 : vector<2x16xf32>
    %185 = arith.mulf %180, %184 : vector<2x16xf32>
    %c4 = arith.constant 4 : index
    %c0_34 = arith.constant 0 : index
    %186 = vector.load %arg21[%c4, %c0_34] : memref<16x32xf32, #tpu.memory_space<vmem>>, vector<2x16xf32>
    tpu.vector_store %arg21[%c4, %c0_34], %160 {strides = array<i32>} : memref<16x32xf32, #tpu.memory_space<vmem>>, vector<2x16xf32>,
    %c10 = arith.constant 10 : index
    %c16_35 = arith.constant 16 : index
    %187 = vector.load %arg21[%c10, %c16_35] : memref<16x32xf32, #tpu.memory_space<vmem>>, vector<2x16xf32>
    tpu.vector_store %arg21[%c10, %c16_35], %185 {strides = array<i32>} : memref<16x32xf32, #tpu.memory_space<vmem>>, vector<2x16xf32>,
    %188 = tpu.concatenate %160, %185 in 1 : vector<2x16xf32>, vector<2x16xf32> -> vector<2x32xf32>
    %cst_36 = arith.constant dense<0.000000e+00> : vector<2x128xf32>
    %189 = tpu.matmul %188, %6, %cst_36 {dimension_numbers = #tpu.dot_dimension_numbers<[1], [0], [0], [1], [0, 0, 1, 1], [], []>} : vector<2x32xf32>, vector<32x128xf32>, vector<2x128xf32> -> vector<2x128xf32>
    %190 = vector.extract_strided_slice %5 {offsets = [6, 0], sizes = [2, 64], strides = [1, 1]} : vector<16x128xf32> to vector<2x64xf32>
    %191 = vector.extract_strided_slice %189 {offsets = [0, 0], sizes = [2, 64], strides = [1, 1]} : vector<2x128xf32> to vector<2x64xf32>
    %192 = arith.addf %190, %191 : vector<2x64xf32>
    %193 = vector.extract_strided_slice %5 {offsets = [8, 64], sizes = [2, 64], strides = [1, 1]} : vector<16x128xf32> to vector<2x64xf32>
    %194 = vector.extract_strided_slice %189 {offsets = [0, 64], sizes = [2, 64], strides = [1, 1]} : vector<2x128xf32> to vector<2x64xf32>
    %195 = arith.addf %193, %194 : vector<2x64xf32>
    %196 = vector.extract_strided_slice %192 {offsets = [0, 0], sizes = [2, 16], strides = [1, 1]} : vector<2x64xf32> to vector<2x16xf32>
    %197 = arith.negf %196 : vector<2x16xf32>
    %198 = math.exp %197 : vector<2x16xf32>
    %cst_37 = arith.constant 1.000000e+00 : f32
    %199 = vector.broadcast %cst_37 : f32 to vector<2x16xf32>
    %200 = arith.addf %199, %198 : vector<2x16xf32>
    %201 = arith.divf %199, %200 : vector<2x16xf32>
    %202 = vector.extract_strided_slice %192 {offsets = [0, 16], sizes = [2, 16], strides = [1, 1]} : vector<2x64xf32> to vector<2x16xf32>
    %203 = arith.negf %202 : vector<2x16xf32>
    %204 = math.exp %203 : vector<2x16xf32>
    %cst_38 = arith.constant 1.000000e+00 : f32
    %205 = vector.broadcast %cst_38 : f32 to vector<2x16xf32>
    %206 = arith.addf %205, %204 : vector<2x16xf32>
    %207 = arith.divf %205, %206 : vector<2x16xf32>
    %208 = vector.extract_strided_slice %192 {offsets = [0, 32], sizes = [2, 16], strides = [1, 1]} : vector<2x64xf32> to vector<2x16xf32>
    %209 = math.tanh %208 : vector<2x16xf32>
    %210 = vector.extract_strided_slice %192 {offsets = [0, 48], sizes = [2, 16], strides = [1, 1]} : vector<2x64xf32> to vector<2x16xf32>
    %211 = arith.negf %210 : vector<2x16xf32>
    %212 = math.exp %211 : vector<2x16xf32>
    %cst_39 = arith.constant 1.000000e+00 : f32
    %213 = vector.broadcast %cst_39 : f32 to vector<2x16xf32>
    %214 = arith.addf %213, %212 : vector<2x16xf32>
    %215 = arith.divf %213, %214 : vector<2x16xf32>
    %216 = arith.mulf %207, %158 : vector<2x16xf32>
    %217 = arith.mulf %201, %209 : vector<2x16xf32>
    %218 = arith.addf %216, %217 : vector<2x16xf32>
    %219 = math.tanh %218 : vector<2x16xf32>
    %220 = arith.mulf %215, %219 : vector<2x16xf32>
    %221 = vector.extract_strided_slice %195 {offsets = [0, 0], sizes = [2, 16], strides = [1, 1]} : vector<2x64xf32> to vector<2x16xf32>
    %222 = arith.negf %221 : vector<2x16xf32>
    %223 = math.exp %222 : vector<2x16xf32>
    %cst_40 = arith.constant 1.000000e+00 : f32
    %224 = vector.broadcast %cst_40 : f32 to vector<2x16xf32>
    %225 = arith.addf %224, %223 : vector<2x16xf32>
    %226 = arith.divf %224, %225 : vector<2x16xf32>
    %227 = vector.extract_strided_slice %195 {offsets = [0, 16], sizes = [2, 16], strides = [1, 1]} : vector<2x64xf32> to vector<2x16xf32>
    %228 = arith.negf %227 : vector<2x16xf32>
    %229 = math.exp %228 : vector<2x16xf32>
    %cst_41 = arith.constant 1.000000e+00 : f32
    %230 = vector.broadcast %cst_41 : f32 to vector<2x16xf32>
    %231 = arith.addf %230, %229 : vector<2x16xf32>
    %232 = arith.divf %230, %231 : vector<2x16xf32>
    %233 = vector.extract_strided_slice %195 {offsets = [0, 32], sizes = [2, 16], strides = [1, 1]} : vector<2x64xf32> to vector<2x16xf32>
    %234 = math.tanh %233 : vector<2x16xf32>
    %235 = vector.extract_strided_slice %195 {offsets = [0, 48], sizes = [2, 16], strides = [1, 1]} : vector<2x64xf32> to vector<2x16xf32>
    %236 = arith.negf %235 : vector<2x16xf32>
    %237 = math.exp %236 : vector<2x16xf32>
    %cst_42 = arith.constant 1.000000e+00 : f32
    %238 = vector.broadcast %cst_42 : f32 to vector<2x16xf32>
    %239 = arith.addf %238, %237 : vector<2x16xf32>
    %240 = arith.divf %238, %239 : vector<2x16xf32>
    %241 = arith.mulf %232, %183 : vector<2x16xf32>
    %242 = arith.mulf %226, %234 : vector<2x16xf32>
    %243 = arith.addf %241, %242 : vector<2x16xf32>
    %244 = math.tanh %243 : vector<2x16xf32>
    %245 = arith.mulf %240, %244 : vector<2x16xf32>
    %c6 = arith.constant 6 : index
    %c0_43 = arith.constant 0 : index
    %246 = vector.load %arg21[%c6, %c0_43] : memref<16x32xf32, #tpu.memory_space<vmem>>, vector<2x16xf32>
    tpu.vector_store %arg21[%c6, %c0_43], %220 {strides = array<i32>} : memref<16x32xf32, #tpu.memory_space<vmem>>, vector<2x16xf32>,
    %c8 = arith.constant 8 : index
    %c16_44 = arith.constant 16 : index
    %247 = vector.load %arg21[%c8, %c16_44] : memref<16x32xf32, #tpu.memory_space<vmem>>, vector<2x16xf32>
    tpu.vector_store %arg21[%c8, %c16_44], %245 {strides = array<i32>} : memref<16x32xf32, #tpu.memory_space<vmem>>, vector<2x16xf32>,
    %248 = tpu.concatenate %220, %245 in 1 : vector<2x16xf32>, vector<2x16xf32> -> vector<2x32xf32>
    %cst_45 = arith.constant dense<0.000000e+00> : vector<2x128xf32>
    %249 = tpu.matmul %248, %6, %cst_45 {dimension_numbers = #tpu.dot_dimension_numbers<[1], [0], [0], [1], [0, 0, 1, 1], [], []>} : vector<2x32xf32>, vector<32x128xf32>, vector<2x128xf32> -> vector<2x128xf32>
    %250 = vector.extract_strided_slice %5 {offsets = [8, 0], sizes = [2, 64], strides = [1, 1]} : vector<16x128xf32> to vector<2x64xf32>
    %251 = vector.extract_strided_slice %249 {offsets = [0, 0], sizes = [2, 64], strides = [1, 1]} : vector<2x128xf32> to vector<2x64xf32>
    %252 = arith.addf %250, %251 : vector<2x64xf32>
    %253 = vector.extract_strided_slice %5 {offsets = [6, 64], sizes = [2, 64], strides = [1, 1]} : vector<16x128xf32> to vector<2x64xf32>
    %254 = vector.extract_strided_slice %249 {offsets = [0, 64], sizes = [2, 64], strides = [1, 1]} : vector<2x128xf32> to vector<2x64xf32>
    %255 = arith.addf %253, %254 : vector<2x64xf32>
    %256 = vector.extract_strided_slice %252 {offsets = [0, 0], sizes = [2, 16], strides = [1, 1]} : vector<2x64xf32> to vector<2x16xf32>
    %257 = arith.negf %256 : vector<2x16xf32>
    %258 = math.exp %257 : vector<2x16xf32>
    %cst_46 = arith.constant 1.000000e+00 : f32
    %259 = vector.broadcast %cst_46 : f32 to vector<2x16xf32>
    %260 = arith.addf %259, %258 : vector<2x16xf32>
    %261 = arith.divf %259, %260 : vector<2x16xf32>
    %262 = vector.extract_strided_slice %252 {offsets = [0, 16], sizes = [2, 16], strides = [1, 1]} : vector<2x64xf32> to vector<2x16xf32>
    %263 = arith.negf %262 : vector<2x16xf32>
    %264 = math.exp %263 : vector<2x16xf32>
    %cst_47 = arith.constant 1.000000e+00 : f32
    %265 = vector.broadcast %cst_47 : f32 to vector<2x16xf32>
    %266 = arith.addf %265, %264 : vector<2x16xf32>
    %267 = arith.divf %265, %266 : vector<2x16xf32>
    %268 = vector.extract_strided_slice %252 {offsets = [0, 32], sizes = [2, 16], strides = [1, 1]} : vector<2x64xf32> to vector<2x16xf32>
    %269 = math.tanh %268 : vector<2x16xf32>
    %270 = vector.extract_strided_slice %252 {offsets = [0, 48], sizes = [2, 16], strides = [1, 1]} : vector<2x64xf32> to vector<2x16xf32>
    %271 = arith.negf %270 : vector<2x16xf32>
    %272 = math.exp %271 : vector<2x16xf32>
    %cst_48 = arith.constant 1.000000e+00 : f32
    %273 = vector.broadcast %cst_48 : f32 to vector<2x16xf32>
    %274 = arith.addf %273, %272 : vector<2x16xf32>
    %275 = arith.divf %273, %274 : vector<2x16xf32>
    %276 = arith.mulf %267, %218 : vector<2x16xf32>
    %277 = arith.mulf %261, %269 : vector<2x16xf32>
    %278 = arith.addf %276, %277 : vector<2x16xf32>
    %279 = math.tanh %278 : vector<2x16xf32>
    %280 = arith.mulf %275, %279 : vector<2x16xf32>
    %281 = vector.extract_strided_slice %255 {offsets = [0, 0], sizes = [2, 16], strides = [1, 1]} : vector<2x64xf32> to vector<2x16xf32>
    %282 = arith.negf %281 : vector<2x16xf32>
    %283 = math.exp %282 : vector<2x16xf32>
    %cst_49 = arith.constant 1.000000e+00 : f32
    %284 = vector.broadcast %cst_49 : f32 to vector<2x16xf32>
    %285 = arith.addf %284, %283 : vector<2x16xf32>
    %286 = arith.divf %284, %285 : vector<2x16xf32>
    %287 = vector.extract_strided_slice %255 {offsets = [0, 16], sizes = [2, 16], strides = [1, 1]} : vector<2x64xf32> to vector<2x16xf32>
    %288 = arith.negf %287 : vector<2x16xf32>
    %289 = math.exp %288 : vector<2x16xf32>
    %cst_50 = arith.constant 1.000000e+00 : f32
    %290 = vector.broadcast %cst_50 : f32 to vector<2x16xf32>
    %291 = arith.addf %290, %289 : vector<2x16xf32>
    %292 = arith.divf %290, %291 : vector<2x16xf32>
    %293 = vector.extract_strided_slice %255 {offsets = [0, 32], sizes = [2, 16], strides = [1, 1]} : vector<2x64xf32> to vector<2x16xf32>
    %294 = math.tanh %293 : vector<2x16xf32>
    %295 = vector.extract_strided_slice %255 {offsets = [0, 48], sizes = [2, 16], strides = [1, 1]} : vector<2x64xf32> to vector<2x16xf32>
    %296 = arith.negf %295 : vector<2x16xf32>
    %297 = math.exp %296 : vector<2x16xf32>
    %cst_51 = arith.constant 1.000000e+00 : f32
    %298 = vector.broadcast %cst_51 : f32 to vector<2x16xf32>
    %299 = arith.addf %298, %297 : vector<2x16xf32>
    %300 = arith.divf %298, %299 : vector<2x16xf32>
    %301 = arith.mulf %292, %243 : vector<2x16xf32>
    %302 = arith.mulf %286, %294 : vector<2x16xf32>
    %303 = arith.addf %301, %302 : vector<2x16xf32>
    %304 = math.tanh %303 : vector<2x16xf32>
    %305 = arith.mulf %300, %304 : vector<2x16xf32>
    %c8_52 = arith.constant 8 : index
    %c0_53 = arith.constant 0 : index
    %306 = vector.load %arg21[%c8_52, %c0_53] : memref<16x32xf32, #tpu.memory_space<vmem>>, vector<2x16xf32>
    tpu.vector_store %arg21[%c8_52, %c0_53], %280 {strides = array<i32>} : memref<16x32xf32, #tpu.memory_space<vmem>>, vector<2x16xf32>,
    %c6_54 = arith.constant 6 : index
    %c16_55 = arith.constant 16 : index
    %307 = vector.load %arg21[%c6_54, %c16_55] : memref<16x32xf32, #tpu.memory_space<vmem>>, vector<2x16xf32>
    tpu.vector_store %arg21[%c6_54, %c16_55], %305 {strides = array<i32>} : memref<16x32xf32, #tpu.memory_space<vmem>>, vector<2x16xf32>,
    %308 = tpu.concatenate %280, %305 in 1 : vector<2x16xf32>, vector<2x16xf32> -> vector<2x32xf32>
    %cst_56 = arith.constant dense<0.000000e+00> : vector<2x128xf32>
    %309 = tpu.matmul %308, %6, %cst_56 {dimension_numbers = #tpu.dot_dimension_numbers<[1], [0], [0], [1], [0, 0, 1, 1], [], []>} : vector<2x32xf32>, vector<32x128xf32>, vector<2x128xf32> -> vector<2x128xf32>
    %310 = vector.extract_strided_slice %5 {offsets = [10, 0], sizes = [2, 64], strides = [1, 1]} : vector<16x128xf32> to vector<2x64xf32>
    %311 = vector.extract_strided_slice %309 {offsets = [0, 0], sizes = [2, 64], strides = [1, 1]} : vector<2x128xf32> to vector<2x64xf32>
    %312 = arith.addf %310, %311 : vector<2x64xf32>
    %313 = vector.extract_strided_slice %5 {offsets = [4, 64], sizes = [2, 64], strides = [1, 1]} : vector<16x128xf32> to vector<2x64xf32>
    %314 = vector.extract_strided_slice %309 {offsets = [0, 64], sizes = [2, 64], strides = [1, 1]} : vector<2x128xf32> to vector<2x64xf32>
    %315 = arith.addf %313, %314 : vector<2x64xf32>
    %316 = vector.extract_strided_slice %312 {offsets = [0, 0], sizes = [2, 16], strides = [1, 1]} : vector<2x64xf32> to vector<2x16xf32>
    %317 = arith.negf %316 : vector<2x16xf32>
    %318 = math.exp %317 : vector<2x16xf32>
    %cst_57 = arith.constant 1.000000e+00 : f32
    %319 = vector.broadcast %cst_57 : f32 to vector<2x16xf32>
    %320 = arith.addf %319, %318 : vector<2x16xf32>
    %321 = arith.divf %319, %320 : vector<2x16xf32>
    %322 = vector.extract_strided_slice %312 {offsets = [0, 16], sizes = [2, 16], strides = [1, 1]} : vector<2x64xf32> to vector<2x16xf32>
    %323 = arith.negf %322 : vector<2x16xf32>
    %324 = math.exp %323 : vector<2x16xf32>
    %cst_58 = arith.constant 1.000000e+00 : f32
    %325 = vector.broadcast %cst_58 : f32 to vector<2x16xf32>
    %326 = arith.addf %325, %324 : vector<2x16xf32>
    %327 = arith.divf %325, %326 : vector<2x16xf32>
    %328 = vector.extract_strided_slice %312 {offsets = [0, 32], sizes = [2, 16], strides = [1, 1]} : vector<2x64xf32> to vector<2x16xf32>
    %329 = math.tanh %328 : vector<2x16xf32>
    %330 = vector.extract_strided_slice %312 {offsets = [0, 48], sizes = [2, 16], strides = [1, 1]} : vector<2x64xf32> to vector<2x16xf32>
    %331 = arith.negf %330 : vector<2x16xf32>
    %332 = math.exp %331 : vector<2x16xf32>
    %cst_59 = arith.constant 1.000000e+00 : f32
    %333 = vector.broadcast %cst_59 : f32 to vector<2x16xf32>
    %334 = arith.addf %333, %332 : vector<2x16xf32>
    %335 = arith.divf %333, %334 : vector<2x16xf32>
    %336 = arith.mulf %327, %278 : vector<2x16xf32>
    %337 = arith.mulf %321, %329 : vector<2x16xf32>
    %338 = arith.addf %336, %337 : vector<2x16xf32>
    %339 = math.tanh %338 : vector<2x16xf32>
    %340 = arith.mulf %335, %339 : vector<2x16xf32>
    %341 = vector.extract_strided_slice %315 {offsets = [0, 0], sizes = [2, 16], strides = [1, 1]} : vector<2x64xf32> to vector<2x16xf32>
    %342 = arith.negf %341 : vector<2x16xf32>
    %343 = math.exp %342 : vector<2x16xf32>
    %cst_60 = arith.constant 1.000000e+00 : f32
    %344 = vector.broadcast %cst_60 : f32 to vector<2x16xf32>
    %345 = arith.addf %344, %343 : vector<2x16xf32>
    %346 = arith.divf %344, %345 : vector<2x16xf32>
    %347 = vector.extract_strided_slice %315 {offsets = [0, 16], sizes = [2, 16], strides = [1, 1]} : vector<2x64xf32> to vector<2x16xf32>
    %348 = arith.negf %347 : vector<2x16xf32>
    %349 = math.exp %348 : vector<2x16xf32>
    %cst_61 = arith.constant 1.000000e+00 : f32
    %350 = vector.broadcast %cst_61 : f32 to vector<2x16xf32>
    %351 = arith.addf %350, %349 : vector<2x16xf32>
    %352 = arith.divf %350, %351 : vector<2x16xf32>
    %353 = vector.extract_strided_slice %315 {offsets = [0, 32], sizes = [2, 16], strides = [1, 1]} : vector<2x64xf32> to vector<2x16xf32>
    %354 = math.tanh %353 : vector<2x16xf32>
    %355 = vector.extract_strided_slice %315 {offsets = [0, 48], sizes = [2, 16], strides = [1, 1]} : vector<2x64xf32> to vector<2x16xf32>
    %356 = arith.negf %355 : vector<2x16xf32>
    %357 = math.exp %356 : vector<2x16xf32>
    %cst_62 = arith.constant 1.000000e+00 : f32
    %358 = vector.broadcast %cst_62 : f32 to vector<2x16xf32>
    %359 = arith.addf %358, %357 : vector<2x16xf32>
    %360 = arith.divf %358, %359 : vector<2x16xf32>
    %361 = arith.mulf %352, %303 : vector<2x16xf32>
    %362 = arith.mulf %346, %354 : vector<2x16xf32>
    %363 = arith.addf %361, %362 : vector<2x16xf32>
    %364 = math.tanh %363 : vector<2x16xf32>
    %365 = arith.mulf %360, %364 : vector<2x16xf32>
    %c10_63 = arith.constant 10 : index
    %c0_64 = arith.constant 0 : index
    %366 = vector.load %arg21[%c10_63, %c0_64] : memref<16x32xf32, #tpu.memory_space<vmem>>, vector<2x16xf32>
    tpu.vector_store %arg21[%c10_63, %c0_64], %340 {strides = array<i32>} : memref<16x32xf32, #tpu.memory_space<vmem>>, vector<2x16xf32>,
    %c4_65 = arith.constant 4 : index
    %c16_66 = arith.constant 16 : index
    %367 = vector.load %arg21[%c4_65, %c16_66] : memref<16x32xf32, #tpu.memory_space<vmem>>, vector<2x16xf32>
    tpu.vector_store %arg21[%c4_65, %c16_66], %365 {strides = array<i32>} : memref<16x32xf32, #tpu.memory_space<vmem>>, vector<2x16xf32>,
    %368 = tpu.concatenate %340, %365 in 1 : vector<2x16xf32>, vector<2x16xf32> -> vector<2x32xf32>
    %cst_67 = arith.constant dense<0.000000e+00> : vector<2x128xf32>
    %369 = tpu.matmul %368, %6, %cst_67 {dimension_numbers = #tpu.dot_dimension_numbers<[1], [0], [0], [1], [0, 0, 1, 1], [], []>} : vector<2x32xf32>, vector<32x128xf32>, vector<2x128xf32> -> vector<2x128xf32>
    %370 = vector.extract_strided_slice %5 {offsets = [12, 0], sizes = [2, 64], strides = [1, 1]} : vector<16x128xf32> to vector<2x64xf32>
    %371 = vector.extract_strided_slice %369 {offsets = [0, 0], sizes = [2, 64], strides = [1, 1]} : vector<2x128xf32> to vector<2x64xf32>
    %372 = arith.addf %370, %371 : vector<2x64xf32>
    %373 = vector.extract_strided_slice %5 {offsets = [2, 64], sizes = [2, 64], strides = [1, 1]} : vector<16x128xf32> to vector<2x64xf32>
    %374 = vector.extract_strided_slice %369 {offsets = [0, 64], sizes = [2, 64], strides = [1, 1]} : vector<2x128xf32> to vector<2x64xf32>
    %375 = arith.addf %373, %374 : vector<2x64xf32>
    %376 = vector.extract_strided_slice %372 {offsets = [0, 0], sizes = [2, 16], strides = [1, 1]} : vector<2x64xf32> to vector<2x16xf32>
    %377 = arith.negf %376 : vector<2x16xf32>
    %378 = math.exp %377 : vector<2x16xf32>
    %cst_68 = arith.constant 1.000000e+00 : f32
    %379 = vector.broadcast %cst_68 : f32 to vector<2x16xf32>
    %380 = arith.addf %379, %378 : vector<2x16xf32>
    %381 = arith.divf %379, %380 : vector<2x16xf32>
    %382 = vector.extract_strided_slice %372 {offsets = [0, 16], sizes = [2, 16], strides = [1, 1]} : vector<2x64xf32> to vector<2x16xf32>
    %383 = arith.negf %382 : vector<2x16xf32>
    %384 = math.exp %383 : vector<2x16xf32>
    %cst_69 = arith.constant 1.000000e+00 : f32
    %385 = vector.broadcast %cst_69 : f32 to vector<2x16xf32>
    %386 = arith.addf %385, %384 : vector<2x16xf32>
    %387 = arith.divf %385, %386 : vector<2x16xf32>
    %388 = vector.extract_strided_slice %372 {offsets = [0, 32], sizes = [2, 16], strides = [1, 1]} : vector<2x64xf32> to vector<2x16xf32>
    %389 = math.tanh %388 : vector<2x16xf32>
    %390 = vector.extract_strided_slice %372 {offsets = [0, 48], sizes = [2, 16], strides = [1, 1]} : vector<2x64xf32> to vector<2x16xf32>
    %391 = arith.negf %390 : vector<2x16xf32>
    %392 = math.exp %391 : vector<2x16xf32>
    %cst_70 = arith.constant 1.000000e+00 : f32
    %393 = vector.broadcast %cst_70 : f32 to vector<2x16xf32>
    %394 = arith.addf %393, %392 : vector<2x16xf32>
    %395 = arith.divf %393, %394 : vector<2x16xf32>
    %396 = arith.mulf %387, %338 : vector<2x16xf32>
    %397 = arith.mulf %381, %389 : vector<2x16xf32>
    %398 = arith.addf %396, %397 : vector<2x16xf32>
    %399 = math.tanh %398 : vector<2x16xf32>
    %400 = arith.mulf %395, %399 : vector<2x16xf32>
    %401 = vector.extract_strided_slice %375 {offsets = [0, 0], sizes = [2, 16], strides = [1, 1]} : vector<2x64xf32> to vector<2x16xf32>
    %402 = arith.negf %401 : vector<2x16xf32>
    %403 = math.exp %402 : vector<2x16xf32>
    %cst_71 = arith.constant 1.000000e+00 : f32
    %404 = vector.broadcast %cst_71 : f32 to vector<2x16xf32>
    %405 = arith.addf %404, %403 : vector<2x16xf32>
    %406 = arith.divf %404, %405 : vector<2x16xf32>
    %407 = vector.extract_strided_slice %375 {offsets = [0, 16], sizes = [2, 16], strides = [1, 1]} : vector<2x64xf32> to vector<2x16xf32>
    %408 = arith.negf %407 : vector<2x16xf32>
    %409 = math.exp %408 : vector<2x16xf32>
    %cst_72 = arith.constant 1.000000e+00 : f32
    %410 = vector.broadcast %cst_72 : f32 to vector<2x16xf32>
    %411 = arith.addf %410, %409 : vector<2x16xf32>
    %412 = arith.divf %410, %411 : vector<2x16xf32>
    %413 = vector.extract_strided_slice %375 {offsets = [0, 32], sizes = [2, 16], strides = [1, 1]} : vector<2x64xf32> to vector<2x16xf32>
    %414 = math.tanh %413 : vector<2x16xf32>
    %415 = vector.extract_strided_slice %375 {offsets = [0, 48], sizes = [2, 16], strides = [1, 1]} : vector<2x64xf32> to vector<2x16xf32>
    %416 = arith.negf %415 : vector<2x16xf32>
    %417 = math.exp %416 : vector<2x16xf32>
    %cst_73 = arith.constant 1.000000e+00 : f32
    %418 = vector.broadcast %cst_73 : f32 to vector<2x16xf32>
    %419 = arith.addf %418, %417 : vector<2x16xf32>
    %420 = arith.divf %418, %419 : vector<2x16xf32>
    %421 = arith.mulf %412, %363 : vector<2x16xf32>
    %422 = arith.mulf %406, %414 : vector<2x16xf32>
    %423 = arith.addf %421, %422 : vector<2x16xf32>
    %424 = math.tanh %423 : vector<2x16xf32>
    %425 = arith.mulf %420, %424 : vector<2x16xf32>
    %c12_74 = arith.constant 12 : index
    %c0_75 = arith.constant 0 : index
    %426 = vector.load %arg21[%c12_74, %c0_75] : memref<16x32xf32, #tpu.memory_space<vmem>>, vector<2x16xf32>
    tpu.vector_store %arg21[%c12_74, %c0_75], %400 {strides = array<i32>} : memref<16x32xf32, #tpu.memory_space<vmem>>, vector<2x16xf32>,
    %c2_76 = arith.constant 2 : index
    %c16_77 = arith.constant 16 : index
    %427 = vector.load %arg21[%c2_76, %c16_77] : memref<16x32xf32, #tpu.memory_space<vmem>>, vector<2x16xf32>
    tpu.vector_store %arg21[%c2_76, %c16_77], %425 {strides = array<i32>} : memref<16x32xf32, #tpu.memory_space<vmem>>, vector<2x16xf32>,
    %428 = tpu.concatenate %400, %425 in 1 : vector<2x16xf32>, vector<2x16xf32> -> vector<2x32xf32>
    %cst_78 = arith.constant dense<0.000000e+00> : vector<2x128xf32>
    %429 = tpu.matmul %428, %6, %cst_78 {dimension_numbers = #tpu.dot_dimension_numbers<[1], [0], [0], [1], [0, 0, 1, 1], [], []>} : vector<2x32xf32>, vector<32x128xf32>, vector<2x128xf32> -> vector<2x128xf32>
    %430 = vector.extract_strided_slice %5 {offsets = [14, 0], sizes = [2, 64], strides = [1, 1]} : vector<16x128xf32> to vector<2x64xf32>
    %431 = vector.extract_strided_slice %429 {offsets = [0, 0], sizes = [2, 64], strides = [1, 1]} : vector<2x128xf32> to vector<2x64xf32>
    %432 = arith.addf %430, %431 : vector<2x64xf32>
    %433 = vector.extract_strided_slice %5 {offsets = [0, 64], sizes = [2, 64], strides = [1, 1]} : vector<16x128xf32> to vector<2x64xf32>
    %434 = vector.extract_strided_slice %429 {offsets = [0, 64], sizes = [2, 64], strides = [1, 1]} : vector<2x128xf32> to vector<2x64xf32>
    %435 = arith.addf %433, %434 : vector<2x64xf32>
    %436 = vector.extract_strided_slice %432 {offsets = [0, 0], sizes = [2, 16], strides = [1, 1]} : vector<2x64xf32> to vector<2x16xf32>
    %437 = arith.negf %436 : vector<2x16xf32>
    %438 = math.exp %437 : vector<2x16xf32>
    %cst_79 = arith.constant 1.000000e+00 : f32
    %439 = vector.broadcast %cst_79 : f32 to vector<2x16xf32>
    %440 = arith.addf %439, %438 : vector<2x16xf32>
    %441 = arith.divf %439, %440 : vector<2x16xf32>
    %442 = vector.extract_strided_slice %432 {offsets = [0, 16], sizes = [2, 16], strides = [1, 1]} : vector<2x64xf32> to vector<2x16xf32>
    %443 = arith.negf %442 : vector<2x16xf32>
    %444 = math.exp %443 : vector<2x16xf32>
    %cst_80 = arith.constant 1.000000e+00 : f32
    %445 = vector.broadcast %cst_80 : f32 to vector<2x16xf32>
    %446 = arith.addf %445, %444 : vector<2x16xf32>
    %447 = arith.divf %445, %446 : vector<2x16xf32>
    %448 = vector.extract_strided_slice %432 {offsets = [0, 32], sizes = [2, 16], strides = [1, 1]} : vector<2x64xf32> to vector<2x16xf32>
    %449 = math.tanh %448 : vector<2x16xf32>
    %450 = vector.extract_strided_slice %432 {offsets = [0, 48], sizes = [2, 16], strides = [1, 1]} : vector<2x64xf32> to vector<2x16xf32>
    %451 = arith.negf %450 : vector<2x16xf32>
    %452 = math.exp %451 : vector<2x16xf32>
    %cst_81 = arith.constant 1.000000e+00 : f32
    %453 = vector.broadcast %cst_81 : f32 to vector<2x16xf32>
    %454 = arith.addf %453, %452 : vector<2x16xf32>
    %455 = arith.divf %453, %454 : vector<2x16xf32>
    %456 = arith.mulf %447, %398 : vector<2x16xf32>
    %457 = arith.mulf %441, %449 : vector<2x16xf32>
    %458 = arith.addf %456, %457 : vector<2x16xf32>
    %459 = math.tanh %458 : vector<2x16xf32>
    %460 = arith.mulf %455, %459 : vector<2x16xf32>
    %461 = vector.extract_strided_slice %435 {offsets = [0, 0], sizes = [2, 16], strides = [1, 1]} : vector<2x64xf32> to vector<2x16xf32>
    %462 = arith.negf %461 : vector<2x16xf32>
    %463 = math.exp %462 : vector<2x16xf32>
    %cst_82 = arith.constant 1.000000e+00 : f32
    %464 = vector.broadcast %cst_82 : f32 to vector<2x16xf32>
    %465 = arith.addf %464, %463 : vector<2x16xf32>
    %466 = arith.divf %464, %465 : vector<2x16xf32>
    %467 = vector.extract_strided_slice %435 {offsets = [0, 16], sizes = [2, 16], strides = [1, 1]} : vector<2x64xf32> to vector<2x16xf32>
    %468 = arith.negf %467 : vector<2x16xf32>
    %469 = math.exp %468 : vector<2x16xf32>
    %cst_83 = arith.constant 1.000000e+00 : f32
    %470 = vector.broadcast %cst_83 : f32 to vector<2x16xf32>
    %471 = arith.addf %470, %469 : vector<2x16xf32>
    %472 = arith.divf %470, %471 : vector<2x16xf32>
    %473 = vector.extract_strided_slice %435 {offsets = [0, 32], sizes = [2, 16], strides = [1, 1]} : vector<2x64xf32> to vector<2x16xf32>
    %474 = math.tanh %473 : vector<2x16xf32>
    %475 = vector.extract_strided_slice %435 {offsets = [0, 48], sizes = [2, 16], strides = [1, 1]} : vector<2x64xf32> to vector<2x16xf32>
    %476 = arith.negf %475 : vector<2x16xf32>
    %477 = math.exp %476 : vector<2x16xf32>
    %cst_84 = arith.constant 1.000000e+00 : f32
    %478 = vector.broadcast %cst_84 : f32 to vector<2x16xf32>
    %479 = arith.addf %478, %477 : vector<2x16xf32>
    %480 = arith.divf %478, %479 : vector<2x16xf32>
    %481 = arith.mulf %472, %423 : vector<2x16xf32>
    %482 = arith.mulf %466, %474 : vector<2x16xf32>
    %483 = arith.addf %481, %482 : vector<2x16xf32>
    %484 = math.tanh %483 : vector<2x16xf32>
    %485 = arith.mulf %480, %484 : vector<2x16xf32>
    %c14_85 = arith.constant 14 : index
    %c0_86 = arith.constant 0 : index
    %486 = vector.load %arg21[%c14_85, %c0_86] : memref<16x32xf32, #tpu.memory_space<vmem>>, vector<2x16xf32>
    tpu.vector_store %arg21[%c14_85, %c0_86], %460 {strides = array<i32>} : memref<16x32xf32, #tpu.memory_space<vmem>>, vector<2x16xf32>,
    %c0_87 = arith.constant 0 : index
    %c16_88 = arith.constant 16 : index
    %487 = vector.load %arg21[%c0_87, %c16_88] : memref<16x32xf32, #tpu.memory_space<vmem>>, vector<2x16xf32>
    tpu.vector_store %arg21[%c0_87, %c16_88], %485 {strides = array<i32>} : memref<16x32xf32, #tpu.memory_space<vmem>>, vector<2x16xf32>,
    %c0_89 = arith.constant 0 : index
    %c0_90 = arith.constant 0 : index
    %488 = vector.load %arg21[%c0_89, %c0_90] : memref<16x32xf32, #tpu.memory_space<vmem>>, vector<16x32xf32>
    %c0_91 = arith.constant 0 : index
    %c0_92 = arith.constant 0 : index
    %489 = vector.load %arg5[%c0_91, %c0_92] : memref<32x128xf32, #tpu.memory_space<vmem>>, vector<32x128xf32>
    %cst_93 = arith.constant dense<0.000000e+00> : vector<16x128xf32>
    %490 = tpu.matmul %488, %489, %cst_93 {dimension_numbers = #tpu.dot_dimension_numbers<[1], [0], [0], [1], [0, 0, 1, 1], [], []>} : vector<16x32xf32>, vector<32x128xf32>, vector<16x128xf32> -> vector<16x128xf32>
    %c0_94 = arith.constant 0 : index
    %c0_95 = arith.constant 0 : index
    %491 = vector.load %arg7[%c0_94, %c0_95] : memref<1x128xf32, #tpu.memory_space<vmem>>, vector<1x128xf32>
    %492 = vector.broadcast %491 : vector<1x128xf32> to vector<16x128xf32>
    %493 = arith.addf %490, %492 : vector<16x128xf32>
    %c0_96 = arith.constant 0 : index
    %c0_97 = arith.constant 0 : index
    %494 = vector.load %arg6[%c0_96, %c0_97] : memref<32x128xf32, #tpu.memory_space<vmem>>, vector<32x128xf32>
    %cst_98 = arith.constant 0.000000e+00 : f32
    %495 = vector.broadcast %cst_98 : f32 to vector<2x32xf32>
    %cst_99 = arith.constant 0.000000e+00 : f32
    %496 = vector.broadcast %cst_99 : f32 to vector<2x32xf32>
    %cst_100 = arith.constant dense<0.000000e+00> : vector<2x128xf32>
    %497 = tpu.matmul %495, %494, %cst_100 {dimension_numbers = #tpu.dot_dimension_numbers<[1], [0], [0], [1], [0, 0, 1, 1], [], []>} : vector<2x32xf32>, vector<32x128xf32>, vector<2x128xf32> -> vector<2x128xf32>
    %498 = vector.extract_strided_slice %493 {offsets = [0, 0], sizes = [2, 64], strides = [1, 1]} : vector<16x128xf32> to vector<2x64xf32>
    %499 = vector.extract_strided_slice %497 {offsets = [0, 0], sizes = [2, 64], strides = [1, 1]} : vector<2x128xf32> to vector<2x64xf32>
    %500 = arith.addf %498, %499 : vector<2x64xf32>
    %501 = vector.extract_strided_slice %493 {offsets = [14, 64], sizes = [2, 64], strides = [1, 1]} : vector<16x128xf32> to vector<2x64xf32>
    %502 = vector.extract_strided_slice %497 {offsets = [0, 64], sizes = [2, 64], strides = [1, 1]} : vector<2x128xf32> to vector<2x64xf32>
    %503 = arith.addf %501, %502 : vector<2x64xf32>
    %504 = vector.extract_strided_slice %500 {offsets = [0, 0], sizes = [2, 16], strides = [1, 1]} : vector<2x64xf32> to vector<2x16xf32>
    %505 = arith.negf %504 : vector<2x16xf32>
    %506 = math.exp %505 : vector<2x16xf32>
    %cst_101 = arith.constant 1.000000e+00 : f32
    %507 = vector.broadcast %cst_101 : f32 to vector<2x16xf32>
    %508 = arith.addf %507, %506 : vector<2x16xf32>
    %509 = arith.divf %507, %508 : vector<2x16xf32>
    %510 = vector.extract_strided_slice %500 {offsets = [0, 16], sizes = [2, 16], strides = [1, 1]} : vector<2x64xf32> to vector<2x16xf32>
    %511 = arith.negf %510 : vector<2x16xf32>
    %512 = math.exp %511 : vector<2x16xf32>
    %cst_102 = arith.constant 1.000000e+00 : f32
    %513 = vector.broadcast %cst_102 : f32 to vector<2x16xf32>
    %514 = arith.addf %513, %512 : vector<2x16xf32>
    %515 = arith.divf %513, %514 : vector<2x16xf32>
    %516 = vector.extract_strided_slice %500 {offsets = [0, 32], sizes = [2, 16], strides = [1, 1]} : vector<2x64xf32> to vector<2x16xf32>
    %517 = math.tanh %516 : vector<2x16xf32>
    %518 = vector.extract_strided_slice %500 {offsets = [0, 48], sizes = [2, 16], strides = [1, 1]} : vector<2x64xf32> to vector<2x16xf32>
    %519 = arith.negf %518 : vector<2x16xf32>
    %520 = math.exp %519 : vector<2x16xf32>
    %cst_103 = arith.constant 1.000000e+00 : f32
    %521 = vector.broadcast %cst_103 : f32 to vector<2x16xf32>
    %522 = arith.addf %521, %520 : vector<2x16xf32>
    %523 = arith.divf %521, %522 : vector<2x16xf32>
    %524 = arith.mulf %515, %7 : vector<2x16xf32>
    %525 = arith.mulf %509, %517 : vector<2x16xf32>
    %526 = arith.addf %524, %525 : vector<2x16xf32>
    %527 = math.tanh %526 : vector<2x16xf32>
    %528 = arith.mulf %523, %527 : vector<2x16xf32>
    %529 = vector.extract_strided_slice %503 {offsets = [0, 0], sizes = [2, 16], strides = [1, 1]} : vector<2x64xf32> to vector<2x16xf32>
    %530 = arith.negf %529 : vector<2x16xf32>
    %531 = math.exp %530 : vector<2x16xf32>
    %cst_104 = arith.constant 1.000000e+00 : f32
    %532 = vector.broadcast %cst_104 : f32 to vector<2x16xf32>
    %533 = arith.addf %532, %531 : vector<2x16xf32>
    %534 = arith.divf %532, %533 : vector<2x16xf32>
    %535 = vector.extract_strided_slice %503 {offsets = [0, 16], sizes = [2, 16], strides = [1, 1]} : vector<2x64xf32> to vector<2x16xf32>
    %536 = arith.negf %535 : vector<2x16xf32>
    %537 = math.exp %536 : vector<2x16xf32>
    %cst_105 = arith.constant 1.000000e+00 : f32
    %538 = vector.broadcast %cst_105 : f32 to vector<2x16xf32>
    %539 = arith.addf %538, %537 : vector<2x16xf32>
    %540 = arith.divf %538, %539 : vector<2x16xf32>
    %541 = vector.extract_strided_slice %503 {offsets = [0, 32], sizes = [2, 16], strides = [1, 1]} : vector<2x64xf32> to vector<2x16xf32>
    %542 = math.tanh %541 : vector<2x16xf32>
    %543 = vector.extract_strided_slice %503 {offsets = [0, 48], sizes = [2, 16], strides = [1, 1]} : vector<2x64xf32> to vector<2x16xf32>
    %544 = arith.negf %543 : vector<2x16xf32>
    %545 = math.exp %544 : vector<2x16xf32>
    %cst_106 = arith.constant 1.000000e+00 : f32
    %546 = vector.broadcast %cst_106 : f32 to vector<2x16xf32>
    %547 = arith.addf %546, %545 : vector<2x16xf32>
    %548 = arith.divf %546, %547 : vector<2x16xf32>
    %549 = arith.mulf %540, %7 : vector<2x16xf32>
    %550 = arith.mulf %534, %542 : vector<2x16xf32>
    %551 = arith.addf %549, %550 : vector<2x16xf32>
    %552 = math.tanh %551 : vector<2x16xf32>
    %553 = arith.mulf %548, %552 : vector<2x16xf32>
    %554 = tpu.concatenate %528, %553 in 1 : vector<2x16xf32>, vector<2x16xf32> -> vector<2x32xf32>
    %555 = arith.addf %496, %554 : vector<2x32xf32>
    %cst_107 = arith.constant dense<0.000000e+00> : vector<2x128xf32>
    %556 = tpu.matmul %554, %494, %cst_107 {dimension_numbers = #tpu.dot_dimension_numbers<[1], [0], [0], [1], [0, 0, 1, 1], [], []>} : vector<2x32xf32>, vector<32x128xf32>, vector<2x128xf32> -> vector<2x128xf32>
    %557 = vector.extract_strided_slice %493 {offsets = [2, 0], sizes = [2, 64], strides = [1, 1]} : vector<16x128xf32> to vector<2x64xf32>
    %558 = vector.extract_strided_slice %556 {offsets = [0, 0], sizes = [2, 64], strides = [1, 1]} : vector<2x128xf32> to vector<2x64xf32>
    %559 = arith.addf %557, %558 : vector<2x64xf32>
    %560 = vector.extract_strided_slice %493 {offsets = [12, 64], sizes = [2, 64], strides = [1, 1]} : vector<16x128xf32> to vector<2x64xf32>
    %561 = vector.extract_strided_slice %556 {offsets = [0, 64], sizes = [2, 64], strides = [1, 1]} : vector<2x128xf32> to vector<2x64xf32>
    %562 = arith.addf %560, %561 : vector<2x64xf32>
    %563 = vector.extract_strided_slice %559 {offsets = [0, 0], sizes = [2, 16], strides = [1, 1]} : vector<2x64xf32> to vector<2x16xf32>
    %564 = arith.negf %563 : vector<2x16xf32>
    %565 = math.exp %564 : vector<2x16xf32>
    %cst_108 = arith.constant 1.000000e+00 : f32
    %566 = vector.broadcast %cst_108 : f32 to vector<2x16xf32>
    %567 = arith.addf %566, %565 : vector<2x16xf32>
    %568 = arith.divf %566, %567 : vector<2x16xf32>
    %569 = vector.extract_strided_slice %559 {offsets = [0, 16], sizes = [2, 16], strides = [1, 1]} : vector<2x64xf32> to vector<2x16xf32>
    %570 = arith.negf %569 : vector<2x16xf32>
    %571 = math.exp %570 : vector<2x16xf32>
    %cst_109 = arith.constant 1.000000e+00 : f32
    %572 = vector.broadcast %cst_109 : f32 to vector<2x16xf32>
    %573 = arith.addf %572, %571 : vector<2x16xf32>
    %574 = arith.divf %572, %573 : vector<2x16xf32>
    %575 = vector.extract_strided_slice %559 {offsets = [0, 32], sizes = [2, 16], strides = [1, 1]} : vector<2x64xf32> to vector<2x16xf32>
    %576 = math.tanh %575 : vector<2x16xf32>
    %577 = vector.extract_strided_slice %559 {offsets = [0, 48], sizes = [2, 16], strides = [1, 1]} : vector<2x64xf32> to vector<2x16xf32>
    %578 = arith.negf %577 : vector<2x16xf32>
    %579 = math.exp %578 : vector<2x16xf32>
    %cst_110 = arith.constant 1.000000e+00 : f32
    %580 = vector.broadcast %cst_110 : f32 to vector<2x16xf32>
    %581 = arith.addf %580, %579 : vector<2x16xf32>
    %582 = arith.divf %580, %581 : vector<2x16xf32>
    %583 = arith.mulf %574, %526 : vector<2x16xf32>
    %584 = arith.mulf %568, %576 : vector<2x16xf32>
    %585 = arith.addf %583, %584 : vector<2x16xf32>
    %586 = math.tanh %585 : vector<2x16xf32>
    %587 = arith.mulf %582, %586 : vector<2x16xf32>
    %588 = vector.extract_strided_slice %562 {offsets = [0, 0], sizes = [2, 16], strides = [1, 1]} : vector<2x64xf32> to vector<2x16xf32>
    %589 = arith.negf %588 : vector<2x16xf32>
    %590 = math.exp %589 : vector<2x16xf32>
    %cst_111 = arith.constant 1.000000e+00 : f32
    %591 = vector.broadcast %cst_111 : f32 to vector<2x16xf32>
    %592 = arith.addf %591, %590 : vector<2x16xf32>
    %593 = arith.divf %591, %592 : vector<2x16xf32>
    %594 = vector.extract_strided_slice %562 {offsets = [0, 16], sizes = [2, 16], strides = [1, 1]} : vector<2x64xf32> to vector<2x16xf32>
    %595 = arith.negf %594 : vector<2x16xf32>
    %596 = math.exp %595 : vector<2x16xf32>
    %cst_112 = arith.constant 1.000000e+00 : f32
    %597 = vector.broadcast %cst_112 : f32 to vector<2x16xf32>
    %598 = arith.addf %597, %596 : vector<2x16xf32>
    %599 = arith.divf %597, %598 : vector<2x16xf32>
    %600 = vector.extract_strided_slice %562 {offsets = [0, 32], sizes = [2, 16], strides = [1, 1]} : vector<2x64xf32> to vector<2x16xf32>
    %601 = math.tanh %600 : vector<2x16xf32>
    %602 = vector.extract_strided_slice %562 {offsets = [0, 48], sizes = [2, 16], strides = [1, 1]} : vector<2x64xf32> to vector<2x16xf32>
    %603 = arith.negf %602 : vector<2x16xf32>
    %604 = math.exp %603 : vector<2x16xf32>
    %cst_113 = arith.constant 1.000000e+00 : f32
    %605 = vector.broadcast %cst_113 : f32 to vector<2x16xf32>
    %606 = arith.addf %605, %604 : vector<2x16xf32>
    %607 = arith.divf %605, %606 : vector<2x16xf32>
    %608 = arith.mulf %599, %551 : vector<2x16xf32>
    %609 = arith.mulf %593, %601 : vector<2x16xf32>
    %610 = arith.addf %608, %609 : vector<2x16xf32>
    %611 = math.tanh %610 : vector<2x16xf32>
    %612 = arith.mulf %607, %611 : vector<2x16xf32>
    %613 = tpu.concatenate %587, %612 in 1 : vector<2x16xf32>, vector<2x16xf32> -> vector<2x32xf32>
    %614 = arith.addf %555, %613 : vector<2x32xf32>
    %cst_114 = arith.constant dense<0.000000e+00> : vector<2x128xf32>
    %615 = tpu.matmul %613, %494, %cst_114 {dimension_numbers = #tpu.dot_dimension_numbers<[1], [0], [0], [1], [0, 0, 1, 1], [], []>} : vector<2x32xf32>, vector<32x128xf32>, vector<2x128xf32> -> vector<2x128xf32>
    %616 = vector.extract_strided_slice %493 {offsets = [4, 0], sizes = [2, 64], strides = [1, 1]} : vector<16x128xf32> to vector<2x64xf32>
    %617 = vector.extract_strided_slice %615 {offsets = [0, 0], sizes = [2, 64], strides = [1, 1]} : vector<2x128xf32> to vector<2x64xf32>
    %618 = arith.addf %616, %617 : vector<2x64xf32>
    %619 = vector.extract_strided_slice %493 {offsets = [10, 64], sizes = [2, 64], strides = [1, 1]} : vector<16x128xf32> to vector<2x64xf32>
    %620 = vector.extract_strided_slice %615 {offsets = [0, 64], sizes = [2, 64], strides = [1, 1]} : vector<2x128xf32> to vector<2x64xf32>
    %621 = arith.addf %619, %620 : vector<2x64xf32>
    %622 = vector.extract_strided_slice %618 {offsets = [0, 0], sizes = [2, 16], strides = [1, 1]} : vector<2x64xf32> to vector<2x16xf32>
    %623 = arith.negf %622 : vector<2x16xf32>
    %624 = math.exp %623 : vector<2x16xf32>
    %cst_115 = arith.constant 1.000000e+00 : f32
    %625 = vector.broadcast %cst_115 : f32 to vector<2x16xf32>
    %626 = arith.addf %625, %624 : vector<2x16xf32>
    %627 = arith.divf %625, %626 : vector<2x16xf32>
    %628 = vector.extract_strided_slice %618 {offsets = [0, 16], sizes = [2, 16], strides = [1, 1]} : vector<2x64xf32> to vector<2x16xf32>
    %629 = arith.negf %628 : vector<2x16xf32>
    %630 = math.exp %629 : vector<2x16xf32>
    %cst_116 = arith.constant 1.000000e+00 : f32
    %631 = vector.broadcast %cst_116 : f32 to vector<2x16xf32>
    %632 = arith.addf %631, %630 : vector<2x16xf32>
    %633 = arith.divf %631, %632 : vector<2x16xf32>
    %634 = vector.extract_strided_slice %618 {offsets = [0, 32], sizes = [2, 16], strides = [1, 1]} : vector<2x64xf32> to vector<2x16xf32>
    %635 = math.tanh %634 : vector<2x16xf32>
    %636 = vector.extract_strided_slice %618 {offsets = [0, 48], sizes = [2, 16], strides = [1, 1]} : vector<2x64xf32> to vector<2x16xf32>
    %637 = arith.negf %636 : vector<2x16xf32>
    %638 = math.exp %637 : vector<2x16xf32>
    %cst_117 = arith.constant 1.000000e+00 : f32
    %639 = vector.broadcast %cst_117 : f32 to vector<2x16xf32>
    %640 = arith.addf %639, %638 : vector<2x16xf32>
    %641 = arith.divf %639, %640 : vector<2x16xf32>
    %642 = arith.mulf %633, %585 : vector<2x16xf32>
    %643 = arith.mulf %627, %635 : vector<2x16xf32>
    %644 = arith.addf %642, %643 : vector<2x16xf32>
    %645 = math.tanh %644 : vector<2x16xf32>
    %646 = arith.mulf %641, %645 : vector<2x16xf32>
    %647 = vector.extract_strided_slice %621 {offsets = [0, 0], sizes = [2, 16], strides = [1, 1]} : vector<2x64xf32> to vector<2x16xf32>
    %648 = arith.negf %647 : vector<2x16xf32>
    %649 = math.exp %648 : vector<2x16xf32>
    %cst_118 = arith.constant 1.000000e+00 : f32
    %650 = vector.broadcast %cst_118 : f32 to vector<2x16xf32>
    %651 = arith.addf %650, %649 : vector<2x16xf32>
    %652 = arith.divf %650, %651 : vector<2x16xf32>
    %653 = vector.extract_strided_slice %621 {offsets = [0, 16], sizes = [2, 16], strides = [1, 1]} : vector<2x64xf32> to vector<2x16xf32>
    %654 = arith.negf %653 : vector<2x16xf32>
    %655 = math.exp %654 : vector<2x16xf32>
    %cst_119 = arith.constant 1.000000e+00 : f32
    %656 = vector.broadcast %cst_119 : f32 to vector<2x16xf32>
    %657 = arith.addf %656, %655 : vector<2x16xf32>
    %658 = arith.divf %656, %657 : vector<2x16xf32>
    %659 = vector.extract_strided_slice %621 {offsets = [0, 32], sizes = [2, 16], strides = [1, 1]} : vector<2x64xf32> to vector<2x16xf32>
    %660 = math.tanh %659 : vector<2x16xf32>
    %661 = vector.extract_strided_slice %621 {offsets = [0, 48], sizes = [2, 16], strides = [1, 1]} : vector<2x64xf32> to vector<2x16xf32>
    %662 = arith.negf %661 : vector<2x16xf32>
    %663 = math.exp %662 : vector<2x16xf32>
    %cst_120 = arith.constant 1.000000e+00 : f32
    %664 = vector.broadcast %cst_120 : f32 to vector<2x16xf32>
    %665 = arith.addf %664, %663 : vector<2x16xf32>
    %666 = arith.divf %664, %665 : vector<2x16xf32>
    %667 = arith.mulf %658, %610 : vector<2x16xf32>
    %668 = arith.mulf %652, %660 : vector<2x16xf32>
    %669 = arith.addf %667, %668 : vector<2x16xf32>
    %670 = math.tanh %669 : vector<2x16xf32>
    %671 = arith.mulf %666, %670 : vector<2x16xf32>
    %672 = tpu.concatenate %646, %671 in 1 : vector<2x16xf32>, vector<2x16xf32> -> vector<2x32xf32>
    %673 = arith.addf %614, %672 : vector<2x32xf32>
    %cst_121 = arith.constant dense<0.000000e+00> : vector<2x128xf32>
    %674 = tpu.matmul %672, %494, %cst_121 {dimension_numbers = #tpu.dot_dimension_numbers<[1], [0], [0], [1], [0, 0, 1, 1], [], []>} : vector<2x32xf32>, vector<32x128xf32>, vector<2x128xf32> -> vector<2x128xf32>
    %675 = vector.extract_strided_slice %493 {offsets = [6, 0], sizes = [2, 64], strides = [1, 1]} : vector<16x128xf32> to vector<2x64xf32>
    %676 = vector.extract_strided_slice %674 {offsets = [0, 0], sizes = [2, 64], strides = [1, 1]} : vector<2x128xf32> to vector<2x64xf32>
    %677 = arith.addf %675, %676 : vector<2x64xf32>
    %678 = vector.extract_strided_slice %493 {offsets = [8, 64], sizes = [2, 64], strides = [1, 1]} : vector<16x128xf32> to vector<2x64xf32>
    %679 = vector.extract_strided_slice %674 {offsets = [0, 64], sizes = [2, 64], strides = [1, 1]} : vector<2x128xf32> to vector<2x64xf32>
    %680 = arith.addf %678, %679 : vector<2x64xf32>
    %681 = vector.extract_strided_slice %677 {offsets = [0, 0], sizes = [2, 16], strides = [1, 1]} : vector<2x64xf32> to vector<2x16xf32>
    %682 = arith.negf %681 : vector<2x16xf32>
    %683 = math.exp %682 : vector<2x16xf32>
    %cst_122 = arith.constant 1.000000e+00 : f32
    %684 = vector.broadcast %cst_122 : f32 to vector<2x16xf32>
    %685 = arith.addf %684, %683 : vector<2x16xf32>
    %686 = arith.divf %684, %685 : vector<2x16xf32>
    %687 = vector.extract_strided_slice %677 {offsets = [0, 16], sizes = [2, 16], strides = [1, 1]} : vector<2x64xf32> to vector<2x16xf32>
    %688 = arith.negf %687 : vector<2x16xf32>
    %689 = math.exp %688 : vector<2x16xf32>
    %cst_123 = arith.constant 1.000000e+00 : f32
    %690 = vector.broadcast %cst_123 : f32 to vector<2x16xf32>
    %691 = arith.addf %690, %689 : vector<2x16xf32>
    %692 = arith.divf %690, %691 : vector<2x16xf32>
    %693 = vector.extract_strided_slice %677 {offsets = [0, 32], sizes = [2, 16], strides = [1, 1]} : vector<2x64xf32> to vector<2x16xf32>
    %694 = math.tanh %693 : vector<2x16xf32>
    %695 = vector.extract_strided_slice %677 {offsets = [0, 48], sizes = [2, 16], strides = [1, 1]} : vector<2x64xf32> to vector<2x16xf32>
    %696 = arith.negf %695 : vector<2x16xf32>
    %697 = math.exp %696 : vector<2x16xf32>
    %cst_124 = arith.constant 1.000000e+00 : f32
    %698 = vector.broadcast %cst_124 : f32 to vector<2x16xf32>
    %699 = arith.addf %698, %697 : vector<2x16xf32>
    %700 = arith.divf %698, %699 : vector<2x16xf32>
    %701 = arith.mulf %692, %644 : vector<2x16xf32>
    %702 = arith.mulf %686, %694 : vector<2x16xf32>
    %703 = arith.addf %701, %702 : vector<2x16xf32>
    %704 = math.tanh %703 : vector<2x16xf32>
    %705 = arith.mulf %700, %704 : vector<2x16xf32>
    %706 = vector.extract_strided_slice %680 {offsets = [0, 0], sizes = [2, 16], strides = [1, 1]} : vector<2x64xf32> to vector<2x16xf32>
    %707 = arith.negf %706 : vector<2x16xf32>
    %708 = math.exp %707 : vector<2x16xf32>
    %cst_125 = arith.constant 1.000000e+00 : f32
    %709 = vector.broadcast %cst_125 : f32 to vector<2x16xf32>
    %710 = arith.addf %709, %708 : vector<2x16xf32>
    %711 = arith.divf %709, %710 : vector<2x16xf32>
    %712 = vector.extract_strided_slice %680 {offsets = [0, 16], sizes = [2, 16], strides = [1, 1]} : vector<2x64xf32> to vector<2x16xf32>
    %713 = arith.negf %712 : vector<2x16xf32>
    %714 = math.exp %713 : vector<2x16xf32>
    %cst_126 = arith.constant 1.000000e+00 : f32
    %715 = vector.broadcast %cst_126 : f32 to vector<2x16xf32>
    %716 = arith.addf %715, %714 : vector<2x16xf32>
    %717 = arith.divf %715, %716 : vector<2x16xf32>
    %718 = vector.extract_strided_slice %680 {offsets = [0, 32], sizes = [2, 16], strides = [1, 1]} : vector<2x64xf32> to vector<2x16xf32>
    %719 = math.tanh %718 : vector<2x16xf32>
    %720 = vector.extract_strided_slice %680 {offsets = [0, 48], sizes = [2, 16], strides = [1, 1]} : vector<2x64xf32> to vector<2x16xf32>
    %721 = arith.negf %720 : vector<2x16xf32>
    %722 = math.exp %721 : vector<2x16xf32>
    %cst_127 = arith.constant 1.000000e+00 : f32
    %723 = vector.broadcast %cst_127 : f32 to vector<2x16xf32>
    %724 = arith.addf %723, %722 : vector<2x16xf32>
    %725 = arith.divf %723, %724 : vector<2x16xf32>
    %726 = arith.mulf %717, %669 : vector<2x16xf32>
    %727 = arith.mulf %711, %719 : vector<2x16xf32>
    %728 = arith.addf %726, %727 : vector<2x16xf32>
    %729 = math.tanh %728 : vector<2x16xf32>
    %730 = arith.mulf %725, %729 : vector<2x16xf32>
    %731 = tpu.concatenate %705, %730 in 1 : vector<2x16xf32>, vector<2x16xf32> -> vector<2x32xf32>
    %732 = arith.addf %673, %731 : vector<2x32xf32>
    %cst_128 = arith.constant dense<0.000000e+00> : vector<2x128xf32>
    %733 = tpu.matmul %731, %494, %cst_128 {dimension_numbers = #tpu.dot_dimension_numbers<[1], [0], [0], [1], [0, 0, 1, 1], [], []>} : vector<2x32xf32>, vector<32x128xf32>, vector<2x128xf32> -> vector<2x128xf32>
    %734 = vector.extract_strided_slice %493 {offsets = [8, 0], sizes = [2, 64], strides = [1, 1]} : vector<16x128xf32> to vector<2x64xf32>
    %735 = vector.extract_strided_slice %733 {offsets = [0, 0], sizes = [2, 64], strides = [1, 1]} : vector<2x128xf32> to vector<2x64xf32>
    %736 = arith.addf %734, %735 : vector<2x64xf32>
    %737 = vector.extract_strided_slice %493 {offsets = [6, 64], sizes = [2, 64], strides = [1, 1]} : vector<16x128xf32> to vector<2x64xf32>
    %738 = vector.extract_strided_slice %733 {offsets = [0, 64], sizes = [2, 64], strides = [1, 1]} : vector<2x128xf32> to vector<2x64xf32>
    %739 = arith.addf %737, %738 : vector<2x64xf32>
    %740 = vector.extract_strided_slice %736 {offsets = [0, 0], sizes = [2, 16], strides = [1, 1]} : vector<2x64xf32> to vector<2x16xf32>
    %741 = arith.negf %740 : vector<2x16xf32>
    %742 = math.exp %741 : vector<2x16xf32>
    %cst_129 = arith.constant 1.000000e+00 : f32
    %743 = vector.broadcast %cst_129 : f32 to vector<2x16xf32>
    %744 = arith.addf %743, %742 : vector<2x16xf32>
    %745 = arith.divf %743, %744 : vector<2x16xf32>
    %746 = vector.extract_strided_slice %736 {offsets = [0, 16], sizes = [2, 16], strides = [1, 1]} : vector<2x64xf32> to vector<2x16xf32>
    %747 = arith.negf %746 : vector<2x16xf32>
    %748 = math.exp %747 : vector<2x16xf32>
    %cst_130 = arith.constant 1.000000e+00 : f32
    %749 = vector.broadcast %cst_130 : f32 to vector<2x16xf32>
    %750 = arith.addf %749, %748 : vector<2x16xf32>
    %751 = arith.divf %749, %750 : vector<2x16xf32>
    %752 = vector.extract_strided_slice %736 {offsets = [0, 32], sizes = [2, 16], strides = [1, 1]} : vector<2x64xf32> to vector<2x16xf32>
    %753 = math.tanh %752 : vector<2x16xf32>
    %754 = vector.extract_strided_slice %736 {offsets = [0, 48], sizes = [2, 16], strides = [1, 1]} : vector<2x64xf32> to vector<2x16xf32>
    %755 = arith.negf %754 : vector<2x16xf32>
    %756 = math.exp %755 : vector<2x16xf32>
    %cst_131 = arith.constant 1.000000e+00 : f32
    %757 = vector.broadcast %cst_131 : f32 to vector<2x16xf32>
    %758 = arith.addf %757, %756 : vector<2x16xf32>
    %759 = arith.divf %757, %758 : vector<2x16xf32>
    %760 = arith.mulf %751, %703 : vector<2x16xf32>
    %761 = arith.mulf %745, %753 : vector<2x16xf32>
    %762 = arith.addf %760, %761 : vector<2x16xf32>
    %763 = math.tanh %762 : vector<2x16xf32>
    %764 = arith.mulf %759, %763 : vector<2x16xf32>
    %765 = vector.extract_strided_slice %739 {offsets = [0, 0], sizes = [2, 16], strides = [1, 1]} : vector<2x64xf32> to vector<2x16xf32>
    %766 = arith.negf %765 : vector<2x16xf32>
    %767 = math.exp %766 : vector<2x16xf32>
    %cst_132 = arith.constant 1.000000e+00 : f32
    %768 = vector.broadcast %cst_132 : f32 to vector<2x16xf32>
    %769 = arith.addf %768, %767 : vector<2x16xf32>
    %770 = arith.divf %768, %769 : vector<2x16xf32>
    %771 = vector.extract_strided_slice %739 {offsets = [0, 16], sizes = [2, 16], strides = [1, 1]} : vector<2x64xf32> to vector<2x16xf32>
    %772 = arith.negf %771 : vector<2x16xf32>
    %773 = math.exp %772 : vector<2x16xf32>
    %cst_133 = arith.constant 1.000000e+00 : f32
    %774 = vector.broadcast %cst_133 : f32 to vector<2x16xf32>
    %775 = arith.addf %774, %773 : vector<2x16xf32>
    %776 = arith.divf %774, %775 : vector<2x16xf32>
    %777 = vector.extract_strided_slice %739 {offsets = [0, 32], sizes = [2, 16], strides = [1, 1]} : vector<2x64xf32> to vector<2x16xf32>
    %778 = math.tanh %777 : vector<2x16xf32>
    %779 = vector.extract_strided_slice %739 {offsets = [0, 48], sizes = [2, 16], strides = [1, 1]} : vector<2x64xf32> to vector<2x16xf32>
    %780 = arith.negf %779 : vector<2x16xf32>
    %781 = math.exp %780 : vector<2x16xf32>
    %cst_134 = arith.constant 1.000000e+00 : f32
    %782 = vector.broadcast %cst_134 : f32 to vector<2x16xf32>
    %783 = arith.addf %782, %781 : vector<2x16xf32>
    %784 = arith.divf %782, %783 : vector<2x16xf32>
    %785 = arith.mulf %776, %728 : vector<2x16xf32>
    %786 = arith.mulf %770, %778 : vector<2x16xf32>
    %787 = arith.addf %785, %786 : vector<2x16xf32>
    %788 = math.tanh %787 : vector<2x16xf32>
    %789 = arith.mulf %784, %788 : vector<2x16xf32>
    %790 = tpu.concatenate %764, %789 in 1 : vector<2x16xf32>, vector<2x16xf32> -> vector<2x32xf32>
    %791 = arith.addf %732, %790 : vector<2x32xf32>
    %cst_135 = arith.constant dense<0.000000e+00> : vector<2x128xf32>
    %792 = tpu.matmul %790, %494, %cst_135 {dimension_numbers = #tpu.dot_dimension_numbers<[1], [0], [0], [1], [0, 0, 1, 1], [], []>} : vector<2x32xf32>, vector<32x128xf32>, vector<2x128xf32> -> vector<2x128xf32>
    %793 = vector.extract_strided_slice %493 {offsets = [10, 0], sizes = [2, 64], strides = [1, 1]} : vector<16x128xf32> to vector<2x64xf32>
    %794 = vector.extract_strided_slice %792 {offsets = [0, 0], sizes = [2, 64], strides = [1, 1]} : vector<2x128xf32> to vector<2x64xf32>
    %795 = arith.addf %793, %794 : vector<2x64xf32>
    %796 = vector.extract_strided_slice %493 {offsets = [4, 64], sizes = [2, 64], strides = [1, 1]} : vector<16x128xf32> to vector<2x64xf32>
    %797 = vector.extract_strided_slice %792 {offsets = [0, 64], sizes = [2, 64], strides = [1, 1]} : vector<2x128xf32> to vector<2x64xf32>
    %798 = arith.addf %796, %797 : vector<2x64xf32>
    %799 = vector.extract_strided_slice %795 {offsets = [0, 0], sizes = [2, 16], strides = [1, 1]} : vector<2x64xf32> to vector<2x16xf32>
    %800 = arith.negf %799 : vector<2x16xf32>
    %801 = math.exp %800 : vector<2x16xf32>
    %cst_136 = arith.constant 1.000000e+00 : f32
    %802 = vector.broadcast %cst_136 : f32 to vector<2x16xf32>
    %803 = arith.addf %802, %801 : vector<2x16xf32>
    %804 = arith.divf %802, %803 : vector<2x16xf32>
    %805 = vector.extract_strided_slice %795 {offsets = [0, 16], sizes = [2, 16], strides = [1, 1]} : vector<2x64xf32> to vector<2x16xf32>
    %806 = arith.negf %805 : vector<2x16xf32>
    %807 = math.exp %806 : vector<2x16xf32>
    %cst_137 = arith.constant 1.000000e+00 : f32
    %808 = vector.broadcast %cst_137 : f32 to vector<2x16xf32>
    %809 = arith.addf %808, %807 : vector<2x16xf32>
    %810 = arith.divf %808, %809 : vector<2x16xf32>
    %811 = vector.extract_strided_slice %795 {offsets = [0, 32], sizes = [2, 16], strides = [1, 1]} : vector<2x64xf32> to vector<2x16xf32>
    %812 = math.tanh %811 : vector<2x16xf32>
    %813 = vector.extract_strided_slice %795 {offsets = [0, 48], sizes = [2, 16], strides = [1, 1]} : vector<2x64xf32> to vector<2x16xf32>
    %814 = arith.negf %813 : vector<2x16xf32>
    %815 = math.exp %814 : vector<2x16xf32>
    %cst_138 = arith.constant 1.000000e+00 : f32
    %816 = vector.broadcast %cst_138 : f32 to vector<2x16xf32>
    %817 = arith.addf %816, %815 : vector<2x16xf32>
    %818 = arith.divf %816, %817 : vector<2x16xf32>
    %819 = arith.mulf %810, %762 : vector<2x16xf32>
    %820 = arith.mulf %804, %812 : vector<2x16xf32>
    %821 = arith.addf %819, %820 : vector<2x16xf32>
    %822 = math.tanh %821 : vector<2x16xf32>
    %823 = arith.mulf %818, %822 : vector<2x16xf32>
    %824 = vector.extract_strided_slice %798 {offsets = [0, 0], sizes = [2, 16], strides = [1, 1]} : vector<2x64xf32> to vector<2x16xf32>
    %825 = arith.negf %824 : vector<2x16xf32>
    %826 = math.exp %825 : vector<2x16xf32>
    %cst_139 = arith.constant 1.000000e+00 : f32
    %827 = vector.broadcast %cst_139 : f32 to vector<2x16xf32>
    %828 = arith.addf %827, %826 : vector<2x16xf32>
    %829 = arith.divf %827, %828 : vector<2x16xf32>
    %830 = vector.extract_strided_slice %798 {offsets = [0, 16], sizes = [2, 16], strides = [1, 1]} : vector<2x64xf32> to vector<2x16xf32>
    %831 = arith.negf %830 : vector<2x16xf32>
    %832 = math.exp %831 : vector<2x16xf32>
    %cst_140 = arith.constant 1.000000e+00 : f32
    %833 = vector.broadcast %cst_140 : f32 to vector<2x16xf32>
    %834 = arith.addf %833, %832 : vector<2x16xf32>
    %835 = arith.divf %833, %834 : vector<2x16xf32>
    %836 = vector.extract_strided_slice %798 {offsets = [0, 32], sizes = [2, 16], strides = [1, 1]} : vector<2x64xf32> to vector<2x16xf32>
    %837 = math.tanh %836 : vector<2x16xf32>
    %838 = vector.extract_strided_slice %798 {offsets = [0, 48], sizes = [2, 16], strides = [1, 1]} : vector<2x64xf32> to vector<2x16xf32>
    %839 = arith.negf %838 : vector<2x16xf32>
    %840 = math.exp %839 : vector<2x16xf32>
    %cst_141 = arith.constant 1.000000e+00 : f32
    %841 = vector.broadcast %cst_141 : f32 to vector<2x16xf32>
    %842 = arith.addf %841, %840 : vector<2x16xf32>
    %843 = arith.divf %841, %842 : vector<2x16xf32>
    %844 = arith.mulf %835, %787 : vector<2x16xf32>
    %845 = arith.mulf %829, %837 : vector<2x16xf32>
    %846 = arith.addf %844, %845 : vector<2x16xf32>
    %847 = math.tanh %846 : vector<2x16xf32>
    %848 = arith.mulf %843, %847 : vector<2x16xf32>
    %849 = tpu.concatenate %823, %848 in 1 : vector<2x16xf32>, vector<2x16xf32> -> vector<2x32xf32>
    %850 = arith.addf %791, %849 : vector<2x32xf32>
    %cst_142 = arith.constant dense<0.000000e+00> : vector<2x128xf32>
    %851 = tpu.matmul %849, %494, %cst_142 {dimension_numbers = #tpu.dot_dimension_numbers<[1], [0], [0], [1], [0, 0, 1, 1], [], []>} : vector<2x32xf32>, vector<32x128xf32>, vector<2x128xf32> -> vector<2x128xf32>
    %852 = vector.extract_strided_slice %493 {offsets = [12, 0], sizes = [2, 64], strides = [1, 1]} : vector<16x128xf32> to vector<2x64xf32>
    %853 = vector.extract_strided_slice %851 {offsets = [0, 0], sizes = [2, 64], strides = [1, 1]} : vector<2x128xf32> to vector<2x64xf32>
    %854 = arith.addf %852, %853 : vector<2x64xf32>
    %855 = vector.extract_strided_slice %493 {offsets = [2, 64], sizes = [2, 64], strides = [1, 1]} : vector<16x128xf32> to vector<2x64xf32>
    %856 = vector.extract_strided_slice %851 {offsets = [0, 64], sizes = [2, 64], strides = [1, 1]} : vector<2x128xf32> to vector<2x64xf32>
    %857 = arith.addf %855, %856 : vector<2x64xf32>
    %858 = vector.extract_strided_slice %854 {offsets = [0, 0], sizes = [2, 16], strides = [1, 1]} : vector<2x64xf32> to vector<2x16xf32>
    %859 = arith.negf %858 : vector<2x16xf32>
    %860 = math.exp %859 : vector<2x16xf32>
    %cst_143 = arith.constant 1.000000e+00 : f32
    %861 = vector.broadcast %cst_143 : f32 to vector<2x16xf32>
    %862 = arith.addf %861, %860 : vector<2x16xf32>
    %863 = arith.divf %861, %862 : vector<2x16xf32>
    %864 = vector.extract_strided_slice %854 {offsets = [0, 16], sizes = [2, 16], strides = [1, 1]} : vector<2x64xf32> to vector<2x16xf32>
    %865 = arith.negf %864 : vector<2x16xf32>
    %866 = math.exp %865 : vector<2x16xf32>
    %cst_144 = arith.constant 1.000000e+00 : f32
    %867 = vector.broadcast %cst_144 : f32 to vector<2x16xf32>
    %868 = arith.addf %867, %866 : vector<2x16xf32>
    %869 = arith.divf %867, %868 : vector<2x16xf32>
    %870 = vector.extract_strided_slice %854 {offsets = [0, 32], sizes = [2, 16], strides = [1, 1]} : vector<2x64xf32> to vector<2x16xf32>
    %871 = math.tanh %870 : vector<2x16xf32>
    %872 = vector.extract_strided_slice %854 {offsets = [0, 48], sizes = [2, 16], strides = [1, 1]} : vector<2x64xf32> to vector<2x16xf32>
    %873 = arith.negf %872 : vector<2x16xf32>
    %874 = math.exp %873 : vector<2x16xf32>
    %cst_145 = arith.constant 1.000000e+00 : f32
    %875 = vector.broadcast %cst_145 : f32 to vector<2x16xf32>
    %876 = arith.addf %875, %874 : vector<2x16xf32>
    %877 = arith.divf %875, %876 : vector<2x16xf32>
    %878 = arith.mulf %869, %821 : vector<2x16xf32>
    %879 = arith.mulf %863, %871 : vector<2x16xf32>
    %880 = arith.addf %878, %879 : vector<2x16xf32>
    %881 = math.tanh %880 : vector<2x16xf32>
    %882 = arith.mulf %877, %881 : vector<2x16xf32>
    %883 = vector.extract_strided_slice %857 {offsets = [0, 0], sizes = [2, 16], strides = [1, 1]} : vector<2x64xf32> to vector<2x16xf32>
    %884 = arith.negf %883 : vector<2x16xf32>
    %885 = math.exp %884 : vector<2x16xf32>
    %cst_146 = arith.constant 1.000000e+00 : f32
    %886 = vector.broadcast %cst_146 : f32 to vector<2x16xf32>
    %887 = arith.addf %886, %885 : vector<2x16xf32>
    %888 = arith.divf %886, %887 : vector<2x16xf32>
    %889 = vector.extract_strided_slice %857 {offsets = [0, 16], sizes = [2, 16], strides = [1, 1]} : vector<2x64xf32> to vector<2x16xf32>
    %890 = arith.negf %889 : vector<2x16xf32>
    %891 = math.exp %890 : vector<2x16xf32>
    %cst_147 = arith.constant 1.000000e+00 : f32
    %892 = vector.broadcast %cst_147 : f32 to vector<2x16xf32>
    %893 = arith.addf %892, %891 : vector<2x16xf32>
    %894 = arith.divf %892, %893 : vector<2x16xf32>
    %895 = vector.extract_strided_slice %857 {offsets = [0, 32], sizes = [2, 16], strides = [1, 1]} : vector<2x64xf32> to vector<2x16xf32>
    %896 = math.tanh %895 : vector<2x16xf32>
    %897 = vector.extract_strided_slice %857 {offsets = [0, 48], sizes = [2, 16], strides = [1, 1]} : vector<2x64xf32> to vector<2x16xf32>
    %898 = arith.negf %897 : vector<2x16xf32>
    %899 = math.exp %898 : vector<2x16xf32>
    %cst_148 = arith.constant 1.000000e+00 : f32
    %900 = vector.broadcast %cst_148 : f32 to vector<2x16xf32>
    %901 = arith.addf %900, %899 : vector<2x16xf32>
    %902 = arith.divf %900, %901 : vector<2x16xf32>
    %903 = arith.mulf %894, %846 : vector<2x16xf32>
    %904 = arith.mulf %888, %896 : vector<2x16xf32>
    %905 = arith.addf %903, %904 : vector<2x16xf32>
    %906 = math.tanh %905 : vector<2x16xf32>
    %907 = arith.mulf %902, %906 : vector<2x16xf32>
    %908 = tpu.concatenate %882, %907 in 1 : vector<2x16xf32>, vector<2x16xf32> -> vector<2x32xf32>
    %909 = arith.addf %850, %908 : vector<2x32xf32>
    %cst_149 = arith.constant dense<0.000000e+00> : vector<2x128xf32>
    %910 = tpu.matmul %908, %494, %cst_149 {dimension_numbers = #tpu.dot_dimension_numbers<[1], [0], [0], [1], [0, 0, 1, 1], [], []>} : vector<2x32xf32>, vector<32x128xf32>, vector<2x128xf32> -> vector<2x128xf32>
    %911 = vector.extract_strided_slice %493 {offsets = [14, 0], sizes = [2, 64], strides = [1, 1]} : vector<16x128xf32> to vector<2x64xf32>
    %912 = vector.extract_strided_slice %910 {offsets = [0, 0], sizes = [2, 64], strides = [1, 1]} : vector<2x128xf32> to vector<2x64xf32>
    %913 = arith.addf %911, %912 : vector<2x64xf32>
    %914 = vector.extract_strided_slice %493 {offsets = [0, 64], sizes = [2, 64], strides = [1, 1]} : vector<16x128xf32> to vector<2x64xf32>
    %915 = vector.extract_strided_slice %910 {offsets = [0, 64], sizes = [2, 64], strides = [1, 1]} : vector<2x128xf32> to vector<2x64xf32>
    %916 = arith.addf %914, %915 : vector<2x64xf32>
    %917 = vector.extract_strided_slice %913 {offsets = [0, 0], sizes = [2, 16], strides = [1, 1]} : vector<2x64xf32> to vector<2x16xf32>
    %918 = arith.negf %917 : vector<2x16xf32>
    %919 = math.exp %918 : vector<2x16xf32>
    %cst_150 = arith.constant 1.000000e+00 : f32
    %920 = vector.broadcast %cst_150 : f32 to vector<2x16xf32>
    %921 = arith.addf %920, %919 : vector<2x16xf32>
    %922 = arith.divf %920, %921 : vector<2x16xf32>
    %923 = vector.extract_strided_slice %913 {offsets = [0, 16], sizes = [2, 16], strides = [1, 1]} : vector<2x64xf32> to vector<2x16xf32>
    %924 = arith.negf %923 : vector<2x16xf32>
    %925 = math.exp %924 : vector<2x16xf32>
    %cst_151 = arith.constant 1.000000e+00 : f32
    %926 = vector.broadcast %cst_151 : f32 to vector<2x16xf32>
    %927 = arith.addf %926, %925 : vector<2x16xf32>
    %928 = arith.divf %926, %927 : vector<2x16xf32>
    %929 = vector.extract_strided_slice %913 {offsets = [0, 32], sizes = [2, 16], strides = [1, 1]} : vector<2x64xf32> to vector<2x16xf32>
    %930 = math.tanh %929 : vector<2x16xf32>
    %931 = vector.extract_strided_slice %913 {offsets = [0, 48], sizes = [2, 16], strides = [1, 1]} : vector<2x64xf32> to vector<2x16xf32>
    %932 = arith.negf %931 : vector<2x16xf32>
    %933 = math.exp %932 : vector<2x16xf32>
    %cst_152 = arith.constant 1.000000e+00 : f32
    %934 = vector.broadcast %cst_152 : f32 to vector<2x16xf32>
    %935 = arith.addf %934, %933 : vector<2x16xf32>
    %936 = arith.divf %934, %935 : vector<2x16xf32>
    %937 = arith.mulf %928, %880 : vector<2x16xf32>
    %938 = arith.mulf %922, %930 : vector<2x16xf32>
    %939 = arith.addf %937, %938 : vector<2x16xf32>
    %940 = math.tanh %939 : vector<2x16xf32>
    %941 = arith.mulf %936, %940 : vector<2x16xf32>
    %942 = vector.extract_strided_slice %916 {offsets = [0, 0], sizes = [2, 16], strides = [1, 1]} : vector<2x64xf32> to vector<2x16xf32>
    %943 = arith.negf %942 : vector<2x16xf32>
    %944 = math.exp %943 : vector<2x16xf32>
    %cst_153 = arith.constant 1.000000e+00 : f32
    %945 = vector.broadcast %cst_153 : f32 to vector<2x16xf32>
    %946 = arith.addf %945, %944 : vector<2x16xf32>
    %947 = arith.divf %945, %946 : vector<2x16xf32>
    %948 = vector.extract_strided_slice %916 {offsets = [0, 16], sizes = [2, 16], strides = [1, 1]} : vector<2x64xf32> to vector<2x16xf32>
    %949 = arith.negf %948 : vector<2x16xf32>
    %950 = math.exp %949 : vector<2x16xf32>
    %cst_154 = arith.constant 1.000000e+00 : f32
    %951 = vector.broadcast %cst_154 : f32 to vector<2x16xf32>
    %952 = arith.addf %951, %950 : vector<2x16xf32>
    %953 = arith.divf %951, %952 : vector<2x16xf32>
    %954 = vector.extract_strided_slice %916 {offsets = [0, 32], sizes = [2, 16], strides = [1, 1]} : vector<2x64xf32> to vector<2x16xf32>
    %955 = math.tanh %954 : vector<2x16xf32>
    %956 = vector.extract_strided_slice %916 {offsets = [0, 48], sizes = [2, 16], strides = [1, 1]} : vector<2x64xf32> to vector<2x16xf32>
    %957 = arith.negf %956 : vector<2x16xf32>
    %958 = math.exp %957 : vector<2x16xf32>
    %cst_155 = arith.constant 1.000000e+00 : f32
    %959 = vector.broadcast %cst_155 : f32 to vector<2x16xf32>
    %960 = arith.addf %959, %958 : vector<2x16xf32>
    %961 = arith.divf %959, %960 : vector<2x16xf32>
    %962 = arith.mulf %953, %905 : vector<2x16xf32>
    %963 = arith.mulf %947, %955 : vector<2x16xf32>
    %964 = arith.addf %962, %963 : vector<2x16xf32>
    %965 = math.tanh %964 : vector<2x16xf32>
    %966 = arith.mulf %961, %965 : vector<2x16xf32>
    %967 = tpu.concatenate %941, %966 in 1 : vector<2x16xf32>, vector<2x16xf32> -> vector<2x32xf32>
    %968 = arith.addf %909, %967 : vector<2x32xf32>
    %c0_156 = arith.constant 0 : index
    %c0_157 = arith.constant 0 : index
    %969 = vector.load %arg10[%c0_156, %c0_157] : memref<32x128xf32, #tpu.memory_space<vmem>>, vector<32x128xf32>
    %c0_158 = arith.constant 0 : index
    %c0_159 = arith.constant 0 : index
    %970 = vector.load %arg12[%c0_158, %c0_159] : memref<32x128xf32, #tpu.memory_space<vmem>>, vector<32x128xf32>
    %c0_160 = arith.constant 0 : index
    %c0_161 = arith.constant 0 : index
    %971 = vector.load %arg13[%c0_160, %c0_161] : memref<32x128xf32, #tpu.memory_space<vmem>>, vector<32x128xf32>
    %c0_162 = arith.constant 0 : index
    %c0_163 = arith.constant 0 : index
    %972 = vector.load %arg14[%c0_162, %c0_163] : memref<1x128xf32, #tpu.memory_space<vmem>>, vector<1x128xf32>
    %c0_164 = arith.constant 0 : index
    %c0_165 = arith.constant 0 : index
    %973 = vector.load %arg1[%c0_164, %c0_165] : memref<12x16xf32, #tpu.memory_space<vmem>>, vector<12x16xf32>
    %c0_166 = arith.constant 0 : index
    %c0_167 = arith.constant 0 : index
    %974 = vector.load %arg8[%c0_166, %c0_167] : memref<16x128xf32, #tpu.memory_space<vmem>>, vector<16x128xf32>
    %cst_168 = arith.constant dense<0.000000e+00> : vector<12x128xf32>
    %975 = tpu.matmul %973, %974, %cst_168 {dimension_numbers = #tpu.dot_dimension_numbers<[1], [0], [0], [1], [0, 0, 1, 1], [], []>} : vector<12x16xf32>, vector<16x128xf32>, vector<12x128xf32> -> vector<12x128xf32>
    %c0_169 = arith.constant 0 : index
    %c0_170 = arith.constant 0 : index
    %976 = vector.load %arg11[%c0_169, %c0_170] : memref<1x128xf32, #tpu.memory_space<vmem>>, vector<1x128xf32>
    %977 = vector.broadcast %976 : vector<1x128xf32> to vector<12x128xf32>
    %978 = arith.addf %975, %977 : vector<12x128xf32>
    %c0_171 = arith.constant 0 : index
    %c0_172 = arith.constant 0 : index
    %979 = vector.load %arg9[%c0_171, %c0_172] : memref<32x128xf32, #tpu.memory_space<vmem>>, vector<32x128xf32>
    %cst_173 = arith.constant dense<0.000000e+00> : vector<2x128xf32>
    %980 = tpu.matmul %968, %979, %cst_173 {dimension_numbers = #tpu.dot_dimension_numbers<[1], [0], [0], [1], [0, 0, 1, 1], [], []>} : vector<2x32xf32>, vector<32x128xf32>, vector<2x128xf32> -> vector<2x128xf32>
    %981 = vector.extract_strided_slice %978 {offsets = [0, 0], sizes = [2, 128], strides = [1, 1]} : vector<12x128xf32> to vector<2x128xf32>
    %982 = arith.addf %981, %980 : vector<2x128xf32>
    %c0_174 = arith.constant 0 : index
    %c0_175 = arith.constant 0 : index
    %c0_176 = arith.constant 0 : index
    %983 = vector.load %arg17[%c0_174, %c0_175, %c0_176] : memref<2x2x32xf32, #tpu.memory_space<vmem>>, vector<1x2x32xf32>
    %984 = vector.shape_cast %983 : vector<1x2x32xf32> to vector<2x32xf32>
    %cst_177 = arith.constant dense<0.000000e+00> : vector<2x128xf32>
    %985 = tpu.matmul %984, %969, %cst_177 {dimension_numbers = #tpu.dot_dimension_numbers<[1], [0], [0], [1], [0, 0, 1, 1], [], []>} : vector<2x32xf32>, vector<32x128xf32>, vector<2x128xf32> -> vector<2x128xf32>
    %986 = arith.addf %982, %985 : vector<2x128xf32>
    %c0_178 = arith.constant 0 : index
    %c0_179 = arith.constant 0 : index
    %c0_180 = arith.constant 0 : index
    %987 = vector.load %arg18[%c0_178, %c0_179, %c0_180] : memref<2x2x32xf32, #tpu.memory_space<vmem>>, vector<1x2x32xf32>
    %988 = vector.shape_cast %987 : vector<1x2x32xf32> to vector<2x32xf32>
    %989 = vector.extract_strided_slice %986 {offsets = [0, 0], sizes = [2, 32], strides = [1, 1]} : vector<2x128xf32> to vector<2x32xf32>
    %990 = arith.negf %989 : vector<2x32xf32>
    %991 = math.exp %990 : vector<2x32xf32>
    %cst_181 = arith.constant 1.000000e+00 : f32
    %992 = vector.broadcast %cst_181 : f32 to vector<2x32xf32>
    %993 = arith.addf %992, %991 : vector<2x32xf32>
    %994 = arith.divf %992, %993 : vector<2x32xf32>
    %995 = vector.extract_strided_slice %986 {offsets = [0, 32], sizes = [2, 32], strides = [1, 1]} : vector<2x128xf32> to vector<2x32xf32>
    %996 = arith.negf %995 : vector<2x32xf32>
    %997 = math.exp %996 : vector<2x32xf32>
    %cst_182 = arith.constant 1.000000e+00 : f32
    %998 = vector.broadcast %cst_182 : f32 to vector<2x32xf32>
    %999 = arith.addf %998, %997 : vector<2x32xf32>
    %1000 = arith.divf %998, %999 : vector<2x32xf32>
    %1001 = vector.extract_strided_slice %986 {offsets = [0, 64], sizes = [2, 32], strides = [1, 1]} : vector<2x128xf32> to vector<2x32xf32>
    %1002 = math.tanh %1001 : vector<2x32xf32>
    %1003 = vector.extract_strided_slice %986 {offsets = [0, 96], sizes = [2, 32], strides = [1, 1]} : vector<2x128xf32> to vector<2x32xf32>
    %1004 = arith.negf %1003 : vector<2x32xf32>
    %1005 = math.exp %1004 : vector<2x32xf32>
    %cst_183 = arith.constant 1.000000e+00 : f32
    %1006 = vector.broadcast %cst_183 : f32 to vector<2x32xf32>
    %1007 = arith.addf %1006, %1005 : vector<2x32xf32>
    %1008 = arith.divf %1006, %1007 : vector<2x32xf32>
    %1009 = arith.mulf %1000, %988 : vector<2x32xf32>
    %1010 = arith.mulf %994, %1002 : vector<2x32xf32>
    %1011 = arith.addf %1009, %1010 : vector<2x32xf32>
    %1012 = math.tanh %1011 : vector<2x32xf32>
    %1013 = arith.mulf %1008, %1012 : vector<2x32xf32>
    %cst_184 = arith.constant dense<0.000000e+00> : vector<2x128xf32>
    %1014 = tpu.matmul %1013, %970, %cst_184 {dimension_numbers = #tpu.dot_dimension_numbers<[1], [0], [0], [1], [0, 0, 1, 1], [], []>} : vector<2x32xf32>, vector<32x128xf32>, vector<2x128xf32> -> vector<2x128xf32>
    %c1 = arith.constant 1 : index
    %c0_185 = arith.constant 0 : index
    %c0_186 = arith.constant 0 : index
    %1015 = vector.load %arg17[%c1, %c0_185, %c0_186] : memref<2x2x32xf32, #tpu.memory_space<vmem>>, vector<1x2x32xf32>
    %1016 = vector.shape_cast %1015 : vector<1x2x32xf32> to vector<2x32xf32>
    %cst_187 = arith.constant dense<0.000000e+00> : vector<2x128xf32>
    %1017 = tpu.matmul %1016, %971, %cst_187 {dimension_numbers = #tpu.dot_dimension_numbers<[1], [0], [0], [1], [0, 0, 1, 1], [], []>} : vector<2x32xf32>, vector<32x128xf32>, vector<2x128xf32> -> vector<2x128xf32>
    %1018 = arith.addf %1014, %1017 : vector<2x128xf32>
    %1019 = vector.broadcast %972 : vector<1x128xf32> to vector<2x128xf32>
    %1020 = arith.addf %1018, %1019 : vector<2x128xf32>
    %c1_188 = arith.constant 1 : index
    %c0_189 = arith.constant 0 : index
    %c0_190 = arith.constant 0 : index
    %1021 = vector.load %arg18[%c1_188, %c0_189, %c0_190] : memref<2x2x32xf32, #tpu.memory_space<vmem>>, vector<1x2x32xf32>
    %1022 = vector.shape_cast %1021 : vector<1x2x32xf32> to vector<2x32xf32>
    %1023 = vector.extract_strided_slice %1020 {offsets = [0, 0], sizes = [2, 32], strides = [1, 1]} : vector<2x128xf32> to vector<2x32xf32>
    %1024 = arith.negf %1023 : vector<2x32xf32>
    %1025 = math.exp %1024 : vector<2x32xf32>
    %cst_191 = arith.constant 1.000000e+00 : f32
    %1026 = vector.broadcast %cst_191 : f32 to vector<2x32xf32>
    %1027 = arith.addf %1026, %1025 : vector<2x32xf32>
    %1028 = arith.divf %1026, %1027 : vector<2x32xf32>
    %1029 = vector.extract_strided_slice %1020 {offsets = [0, 32], sizes = [2, 32], strides = [1, 1]} : vector<2x128xf32> to vector<2x32xf32>
    %1030 = arith.negf %1029 : vector<2x32xf32>
    %1031 = math.exp %1030 : vector<2x32xf32>
    %cst_192 = arith.constant 1.000000e+00 : f32
    %1032 = vector.broadcast %cst_192 : f32 to vector<2x32xf32>
    %1033 = arith.addf %1032, %1031 : vector<2x32xf32>
    %1034 = arith.divf %1032, %1033 : vector<2x32xf32>
    %1035 = vector.extract_strided_slice %1020 {offsets = [0, 64], sizes = [2, 32], strides = [1, 1]} : vector<2x128xf32> to vector<2x32xf32>
    %1036 = math.tanh %1035 : vector<2x32xf32>
    %1037 = vector.extract_strided_slice %1020 {offsets = [0, 96], sizes = [2, 32], strides = [1, 1]} : vector<2x128xf32> to vector<2x32xf32>
    %1038 = arith.negf %1037 : vector<2x32xf32>
    %1039 = math.exp %1038 : vector<2x32xf32>
    %cst_193 = arith.constant 1.000000e+00 : f32
    %1040 = vector.broadcast %cst_193 : f32 to vector<2x32xf32>
    %1041 = arith.addf %1040, %1039 : vector<2x32xf32>
    %1042 = arith.divf %1040, %1041 : vector<2x32xf32>
    %1043 = arith.mulf %1034, %1022 : vector<2x32xf32>
    %1044 = arith.mulf %1028, %1036 : vector<2x32xf32>
    %1045 = arith.addf %1043, %1044 : vector<2x32xf32>
    %1046 = math.tanh %1045 : vector<2x32xf32>
    %1047 = arith.mulf %1042, %1046 : vector<2x32xf32>
    %1048 = tpu.concatenate %1011, %1045, %1013, %1047 in 1 : vector<2x32xf32>, vector<2x32xf32>, vector<2x32xf32>, vector<2x32xf32> -> vector<2x128xf32>
    %c0_194 = arith.constant 0 : index
    %c0_195 = arith.constant 0 : index
    %1049 = vector.load %arg20[%c0_194, %c0_195] : memref<12x128xf32, #tpu.memory_space<vmem>>, vector<2x128xf32>
    tpu.vector_store %arg20[%c0_194, %c0_195], %1048 {strides = array<i32>} : memref<12x128xf32, #tpu.memory_space<vmem>>, vector<2x128xf32>,
    %cst_196 = arith.constant dense<0.000000e+00> : vector<2x128xf32>
    %1050 = tpu.matmul %1013, %969, %cst_196 {dimension_numbers = #tpu.dot_dimension_numbers<[1], [0], [0], [1], [0, 0, 1, 1], [], []>} : vector<2x32xf32>, vector<32x128xf32>, vector<2x128xf32> -> vector<2x128xf32>
    %1051 = arith.addf %980, %1050 : vector<2x128xf32>
    %cst_197 = arith.constant dense<0.000000e+00> : vector<2x128xf32>
    %1052 = tpu.matmul %1047, %971, %cst_197 {dimension_numbers = #tpu.dot_dimension_numbers<[1], [0], [0], [1], [0, 0, 1, 1], [], []>} : vector<2x32xf32>, vector<32x128xf32>, vector<2x128xf32> -> vector<2x128xf32>
    %1053 = vector.broadcast %972 : vector<1x128xf32> to vector<2x128xf32>
    %1054 = arith.addf %1052, %1053 : vector<2x128xf32>
    %1055 = vector.extract_strided_slice %978 {offsets = [2, 0], sizes = [2, 128], strides = [1, 1]} : vector<12x128xf32> to vector<2x128xf32>
    %1056 = arith.addf %1055, %1051 : vector<2x128xf32>
    %1057 = vector.extract_strided_slice %1056 {offsets = [0, 0], sizes = [2, 32], strides = [1, 1]} : vector<2x128xf32> to vector<2x32xf32>
    %1058 = arith.negf %1057 : vector<2x32xf32>
    %1059 = math.exp %1058 : vector<2x32xf32>
    %cst_198 = arith.constant 1.000000e+00 : f32
    %1060 = vector.broadcast %cst_198 : f32 to vector<2x32xf32>
    %1061 = arith.addf %1060, %1059 : vector<2x32xf32>
    %1062 = arith.divf %1060, %1061 : vector<2x32xf32>
    %1063 = vector.extract_strided_slice %1056 {offsets = [0, 32], sizes = [2, 32], strides = [1, 1]} : vector<2x128xf32> to vector<2x32xf32>
    %1064 = arith.negf %1063 : vector<2x32xf32>
    %1065 = math.exp %1064 : vector<2x32xf32>
    %cst_199 = arith.constant 1.000000e+00 : f32
    %1066 = vector.broadcast %cst_199 : f32 to vector<2x32xf32>
    %1067 = arith.addf %1066, %1065 : vector<2x32xf32>
    %1068 = arith.divf %1066, %1067 : vector<2x32xf32>
    %1069 = vector.extract_strided_slice %1056 {offsets = [0, 64], sizes = [2, 32], strides = [1, 1]} : vector<2x128xf32> to vector<2x32xf32>
    %1070 = math.tanh %1069 : vector<2x32xf32>
    %1071 = vector.extract_strided_slice %1056 {offsets = [0, 96], sizes = [2, 32], strides = [1, 1]} : vector<2x128xf32> to vector<2x32xf32>
    %1072 = arith.negf %1071 : vector<2x32xf32>
    %1073 = math.exp %1072 : vector<2x32xf32>
    %cst_200 = arith.constant 1.000000e+00 : f32
    %1074 = vector.broadcast %cst_200 : f32 to vector<2x32xf32>
    %1075 = arith.addf %1074, %1073 : vector<2x32xf32>
    %1076 = arith.divf %1074, %1075 : vector<2x32xf32>
    %1077 = arith.mulf %1068, %1011 : vector<2x32xf32>
    %1078 = arith.mulf %1062, %1070 : vector<2x32xf32>
    %1079 = arith.addf %1077, %1078 : vector<2x32xf32>
    %1080 = math.tanh %1079 : vector<2x32xf32>
    %1081 = arith.mulf %1076, %1080 : vector<2x32xf32>
    %cst_201 = arith.constant dense<0.000000e+00> : vector<2x128xf32>
    %1082 = tpu.matmul %1081, %970, %cst_201 {dimension_numbers = #tpu.dot_dimension_numbers<[1], [0], [0], [1], [0, 0, 1, 1], [], []>} : vector<2x32xf32>, vector<32x128xf32>, vector<2x128xf32> -> vector<2x128xf32>
    %1083 = arith.addf %1082, %1054 : vector<2x128xf32>
    %1084 = vector.extract_strided_slice %1083 {offsets = [0, 0], sizes = [2, 32], strides = [1, 1]} : vector<2x128xf32> to vector<2x32xf32>
    %1085 = arith.negf %1084 : vector<2x32xf32>
    %1086 = math.exp %1085 : vector<2x32xf32>
    %cst_202 = arith.constant 1.000000e+00 : f32
    %1087 = vector.broadcast %cst_202 : f32 to vector<2x32xf32>
    %1088 = arith.addf %1087, %1086 : vector<2x32xf32>
    %1089 = arith.divf %1087, %1088 : vector<2x32xf32>
    %1090 = vector.extract_strided_slice %1083 {offsets = [0, 32], sizes = [2, 32], strides = [1, 1]} : vector<2x128xf32> to vector<2x32xf32>
    %1091 = arith.negf %1090 : vector<2x32xf32>
    %1092 = math.exp %1091 : vector<2x32xf32>
    %cst_203 = arith.constant 1.000000e+00 : f32
    %1093 = vector.broadcast %cst_203 : f32 to vector<2x32xf32>
    %1094 = arith.addf %1093, %1092 : vector<2x32xf32>
    %1095 = arith.divf %1093, %1094 : vector<2x32xf32>
    %1096 = vector.extract_strided_slice %1083 {offsets = [0, 64], sizes = [2, 32], strides = [1, 1]} : vector<2x128xf32> to vector<2x32xf32>
    %1097 = math.tanh %1096 : vector<2x32xf32>
    %1098 = vector.extract_strided_slice %1083 {offsets = [0, 96], sizes = [2, 32], strides = [1, 1]} : vector<2x128xf32> to vector<2x32xf32>
    %1099 = arith.negf %1098 : vector<2x32xf32>
    %1100 = math.exp %1099 : vector<2x32xf32>
    %cst_204 = arith.constant 1.000000e+00 : f32
    %1101 = vector.broadcast %cst_204 : f32 to vector<2x32xf32>
    %1102 = arith.addf %1101, %1100 : vector<2x32xf32>
    %1103 = arith.divf %1101, %1102 : vector<2x32xf32>
    %1104 = arith.mulf %1095, %1045 : vector<2x32xf32>
    %1105 = arith.mulf %1089, %1097 : vector<2x32xf32>
    %1106 = arith.addf %1104, %1105 : vector<2x32xf32>
    %1107 = math.tanh %1106 : vector<2x32xf32>
    %1108 = arith.mulf %1103, %1107 : vector<2x32xf32>
    %1109 = tpu.concatenate %1079, %1106, %1081, %1108 in 1 : vector<2x32xf32>, vector<2x32xf32>, vector<2x32xf32>, vector<2x32xf32> -> vector<2x128xf32>
    %c2_205 = arith.constant 2 : index
    %c0_206 = arith.constant 0 : index
    %1110 = vector.load %arg20[%c2_205, %c0_206] : memref<12x128xf32, #tpu.memory_space<vmem>>, vector<2x128xf32>
    tpu.vector_store %arg20[%c2_205, %c0_206], %1109 {strides = array<i32>} : memref<12x128xf32, #tpu.memory_space<vmem>>, vector<2x128xf32>,
    %1111 = vector.extract_strided_slice %978 {offsets = [4, 0], sizes = [2, 128], strides = [1, 1]} : vector<12x128xf32> to vector<2x128xf32>
    %1112 = arith.addf %1111, %1051 : vector<2x128xf32>
    %1113 = vector.extract_strided_slice %1112 {offsets = [0, 0], sizes = [2, 32], strides = [1, 1]} : vector<2x128xf32> to vector<2x32xf32>
    %1114 = arith.negf %1113 : vector<2x32xf32>
    %1115 = math.exp %1114 : vector<2x32xf32>
    %cst_207 = arith.constant 1.000000e+00 : f32
    %1116 = vector.broadcast %cst_207 : f32 to vector<2x32xf32>
    %1117 = arith.addf %1116, %1115 : vector<2x32xf32>
    %1118 = arith.divf %1116, %1117 : vector<2x32xf32>
    %1119 = vector.extract_strided_slice %1112 {offsets = [0, 32], sizes = [2, 32], strides = [1, 1]} : vector<2x128xf32> to vector<2x32xf32>
    %1120 = arith.negf %1119 : vector<2x32xf32>
    %1121 = math.exp %1120 : vector<2x32xf32>
    %cst_208 = arith.constant 1.000000e+00 : f32
    %1122 = vector.broadcast %cst_208 : f32 to vector<2x32xf32>
    %1123 = arith.addf %1122, %1121 : vector<2x32xf32>
    %1124 = arith.divf %1122, %1123 : vector<2x32xf32>
    %1125 = vector.extract_strided_slice %1112 {offsets = [0, 64], sizes = [2, 32], strides = [1, 1]} : vector<2x128xf32> to vector<2x32xf32>
    %1126 = math.tanh %1125 : vector<2x32xf32>
    %1127 = vector.extract_strided_slice %1112 {offsets = [0, 96], sizes = [2, 32], strides = [1, 1]} : vector<2x128xf32> to vector<2x32xf32>
    %1128 = arith.negf %1127 : vector<2x32xf32>
    %1129 = math.exp %1128 : vector<2x32xf32>
    %cst_209 = arith.constant 1.000000e+00 : f32
    %1130 = vector.broadcast %cst_209 : f32 to vector<2x32xf32>
    %1131 = arith.addf %1130, %1129 : vector<2x32xf32>
    %1132 = arith.divf %1130, %1131 : vector<2x32xf32>
    %1133 = arith.mulf %1124, %1079 : vector<2x32xf32>
    %1134 = arith.mulf %1118, %1126 : vector<2x32xf32>
    %1135 = arith.addf %1133, %1134 : vector<2x32xf32>
    %1136 = math.tanh %1135 : vector<2x32xf32>
    %1137 = arith.mulf %1132, %1136 : vector<2x32xf32>
    %cst_210 = arith.constant dense<0.000000e+00> : vector<2x128xf32>
    %1138 = tpu.matmul %1137, %970, %cst_210 {dimension_numbers = #tpu.dot_dimension_numbers<[1], [0], [0], [1], [0, 0, 1, 1], [], []>} : vector<2x32xf32>, vector<32x128xf32>, vector<2x128xf32> -> vector<2x128xf32>
    %1139 = arith.addf %1138, %1054 : vector<2x128xf32>
    %1140 = vector.extract_strided_slice %1139 {offsets = [0, 0], sizes = [2, 32], strides = [1, 1]} : vector<2x128xf32> to vector<2x32xf32>
    %1141 = arith.negf %1140 : vector<2x32xf32>
    %1142 = math.exp %1141 : vector<2x32xf32>
    %cst_211 = arith.constant 1.000000e+00 : f32
    %1143 = vector.broadcast %cst_211 : f32 to vector<2x32xf32>
    %1144 = arith.addf %1143, %1142 : vector<2x32xf32>
    %1145 = arith.divf %1143, %1144 : vector<2x32xf32>
    %1146 = vector.extract_strided_slice %1139 {offsets = [0, 32], sizes = [2, 32], strides = [1, 1]} : vector<2x128xf32> to vector<2x32xf32>
    %1147 = arith.negf %1146 : vector<2x32xf32>
    %1148 = math.exp %1147 : vector<2x32xf32>
    %cst_212 = arith.constant 1.000000e+00 : f32
    %1149 = vector.broadcast %cst_212 : f32 to vector<2x32xf32>
    %1150 = arith.addf %1149, %1148 : vector<2x32xf32>
    %1151 = arith.divf %1149, %1150 : vector<2x32xf32>
    %1152 = vector.extract_strided_slice %1139 {offsets = [0, 64], sizes = [2, 32], strides = [1, 1]} : vector<2x128xf32> to vector<2x32xf32>
    %1153 = math.tanh %1152 : vector<2x32xf32>
    %1154 = vector.extract_strided_slice %1139 {offsets = [0, 96], sizes = [2, 32], strides = [1, 1]} : vector<2x128xf32> to vector<2x32xf32>
    %1155 = arith.negf %1154 : vector<2x32xf32>
    %1156 = math.exp %1155 : vector<2x32xf32>
    %cst_213 = arith.constant 1.000000e+00 : f32
    %1157 = vector.broadcast %cst_213 : f32 to vector<2x32xf32>
    %1158 = arith.addf %1157, %1156 : vector<2x32xf32>
    %1159 = arith.divf %1157, %1158 : vector<2x32xf32>
    %1160 = arith.mulf %1151, %1106 : vector<2x32xf32>
    %1161 = arith.mulf %1145, %1153 : vector<2x32xf32>
    %1162 = arith.addf %1160, %1161 : vector<2x32xf32>
    %1163 = math.tanh %1162 : vector<2x32xf32>
    %1164 = arith.mulf %1159, %1163 : vector<2x32xf32>
    %1165 = tpu.concatenate %1135, %1162, %1137, %1164 in 1 : vector<2x32xf32>, vector<2x32xf32>, vector<2x32xf32>, vector<2x32xf32> -> vector<2x128xf32>
    %c4_214 = arith.constant 4 : index
    %c0_215 = arith.constant 0 : index
    %1166 = vector.load %arg20[%c4_214, %c0_215] : memref<12x128xf32, #tpu.memory_space<vmem>>, vector<2x128xf32>
    tpu.vector_store %arg20[%c4_214, %c0_215], %1165 {strides = array<i32>} : memref<12x128xf32, #tpu.memory_space<vmem>>, vector<2x128xf32>,
    %1167 = vector.extract_strided_slice %978 {offsets = [6, 0], sizes = [2, 128], strides = [1, 1]} : vector<12x128xf32> to vector<2x128xf32>
    %1168 = arith.addf %1167, %1051 : vector<2x128xf32>
    %1169 = vector.extract_strided_slice %1168 {offsets = [0, 0], sizes = [2, 32], strides = [1, 1]} : vector<2x128xf32> to vector<2x32xf32>
    %1170 = arith.negf %1169 : vector<2x32xf32>
    %1171 = math.exp %1170 : vector<2x32xf32>
    %cst_216 = arith.constant 1.000000e+00 : f32
    %1172 = vector.broadcast %cst_216 : f32 to vector<2x32xf32>
    %1173 = arith.addf %1172, %1171 : vector<2x32xf32>
    %1174 = arith.divf %1172, %1173 : vector<2x32xf32>
    %1175 = vector.extract_strided_slice %1168 {offsets = [0, 32], sizes = [2, 32], strides = [1, 1]} : vector<2x128xf32> to vector<2x32xf32>
    %1176 = arith.negf %1175 : vector<2x32xf32>
    %1177 = math.exp %1176 : vector<2x32xf32>
    %cst_217 = arith.constant 1.000000e+00 : f32
    %1178 = vector.broadcast %cst_217 : f32 to vector<2x32xf32>
    %1179 = arith.addf %1178, %1177 : vector<2x32xf32>
    %1180 = arith.divf %1178, %1179 : vector<2x32xf32>
    %1181 = vector.extract_strided_slice %1168 {offsets = [0, 64], sizes = [2, 32], strides = [1, 1]} : vector<2x128xf32> to vector<2x32xf32>
    %1182 = math.tanh %1181 : vector<2x32xf32>
    %1183 = vector.extract_strided_slice %1168 {offsets = [0, 96], sizes = [2, 32], strides = [1, 1]} : vector<2x128xf32> to vector<2x32xf32>
    %1184 = arith.negf %1183 : vector<2x32xf32>
    %1185 = math.exp %1184 : vector<2x32xf32>
    %cst_218 = arith.constant 1.000000e+00 : f32
    %1186 = vector.broadcast %cst_218 : f32 to vector<2x32xf32>
    %1187 = arith.addf %1186, %1185 : vector<2x32xf32>
    %1188 = arith.divf %1186, %1187 : vector<2x32xf32>
    %1189 = arith.mulf %1180, %1135 : vector<2x32xf32>
    %1190 = arith.mulf %1174, %1182 : vector<2x32xf32>
    %1191 = arith.addf %1189, %1190 : vector<2x32xf32>
    %1192 = math.tanh %1191 : vector<2x32xf32>
    %1193 = arith.mulf %1188, %1192 : vector<2x32xf32>
    %cst_219 = arith.constant dense<0.000000e+00> : vector<2x128xf32>
    %1194 = tpu.matmul %1193, %970, %cst_219 {dimension_numbers = #tpu.dot_dimension_numbers<[1], [0], [0], [1], [0, 0, 1, 1], [], []>} : vector<2x32xf32>, vector<32x128xf32>, vector<2x128xf32> -> vector<2x128xf32>
    %1195 = arith.addf %1194, %1054 : vector<2x128xf32>
    %1196 = vector.extract_strided_slice %1195 {offsets = [0, 0], sizes = [2, 32], strides = [1, 1]} : vector<2x128xf32> to vector<2x32xf32>
    %1197 = arith.negf %1196 : vector<2x32xf32>
    %1198 = math.exp %1197 : vector<2x32xf32>
    %cst_220 = arith.constant 1.000000e+00 : f32
    %1199 = vector.broadcast %cst_220 : f32 to vector<2x32xf32>
    %1200 = arith.addf %1199, %1198 : vector<2x32xf32>
    %1201 = arith.divf %1199, %1200 : vector<2x32xf32>
    %1202 = vector.extract_strided_slice %1195 {offsets = [0, 32], sizes = [2, 32], strides = [1, 1]} : vector<2x128xf32> to vector<2x32xf32>
    %1203 = arith.negf %1202 : vector<2x32xf32>
    %1204 = math.exp %1203 : vector<2x32xf32>
    %cst_221 = arith.constant 1.000000e+00 : f32
    %1205 = vector.broadcast %cst_221 : f32 to vector<2x32xf32>
    %1206 = arith.addf %1205, %1204 : vector<2x32xf32>
    %1207 = arith.divf %1205, %1206 : vector<2x32xf32>
    %1208 = vector.extract_strided_slice %1195 {offsets = [0, 64], sizes = [2, 32], strides = [1, 1]} : vector<2x128xf32> to vector<2x32xf32>
    %1209 = math.tanh %1208 : vector<2x32xf32>
    %1210 = vector.extract_strided_slice %1195 {offsets = [0, 96], sizes = [2, 32], strides = [1, 1]} : vector<2x128xf32> to vector<2x32xf32>
    %1211 = arith.negf %1210 : vector<2x32xf32>
    %1212 = math.exp %1211 : vector<2x32xf32>
    %cst_222 = arith.constant 1.000000e+00 : f32
    %1213 = vector.broadcast %cst_222 : f32 to vector<2x32xf32>
    %1214 = arith.addf %1213, %1212 : vector<2x32xf32>
    %1215 = arith.divf %1213, %1214 : vector<2x32xf32>
    %1216 = arith.mulf %1207, %1162 : vector<2x32xf32>
    %1217 = arith.mulf %1201, %1209 : vector<2x32xf32>
    %1218 = arith.addf %1216, %1217 : vector<2x32xf32>
    %1219 = math.tanh %1218 : vector<2x32xf32>
    %1220 = arith.mulf %1215, %1219 : vector<2x32xf32>
    %1221 = tpu.concatenate %1191, %1218, %1193, %1220 in 1 : vector<2x32xf32>, vector<2x32xf32>, vector<2x32xf32>, vector<2x32xf32> -> vector<2x128xf32>
    %c6_223 = arith.constant 6 : index
    %c0_224 = arith.constant 0 : index
    %1222 = vector.load %arg20[%c6_223, %c0_224] : memref<12x128xf32, #tpu.memory_space<vmem>>, vector<2x128xf32>
    tpu.vector_store %arg20[%c6_223, %c0_224], %1221 {strides = array<i32>} : memref<12x128xf32, #tpu.memory_space<vmem>>, vector<2x128xf32>,
    %1223 = vector.extract_strided_slice %978 {offsets = [8, 0], sizes = [2, 128], strides = [1, 1]} : vector<12x128xf32> to vector<2x128xf32>
    %1224 = arith.addf %1223, %1051 : vector<2x128xf32>
    %1225 = vector.extract_strided_slice %1224 {offsets = [0, 0], sizes = [2, 32], strides = [1, 1]} : vector<2x128xf32> to vector<2x32xf32>
    %1226 = arith.negf %1225 : vector<2x32xf32>
    %1227 = math.exp %1226 : vector<2x32xf32>
    %cst_225 = arith.constant 1.000000e+00 : f32
    %1228 = vector.broadcast %cst_225 : f32 to vector<2x32xf32>
    %1229 = arith.addf %1228, %1227 : vector<2x32xf32>
    %1230 = arith.divf %1228, %1229 : vector<2x32xf32>
    %1231 = vector.extract_strided_slice %1224 {offsets = [0, 32], sizes = [2, 32], strides = [1, 1]} : vector<2x128xf32> to vector<2x32xf32>
    %1232 = arith.negf %1231 : vector<2x32xf32>
    %1233 = math.exp %1232 : vector<2x32xf32>
    %cst_226 = arith.constant 1.000000e+00 : f32
    %1234 = vector.broadcast %cst_226 : f32 to vector<2x32xf32>
    %1235 = arith.addf %1234, %1233 : vector<2x32xf32>
    %1236 = arith.divf %1234, %1235 : vector<2x32xf32>
    %1237 = vector.extract_strided_slice %1224 {offsets = [0, 64], sizes = [2, 32], strides = [1, 1]} : vector<2x128xf32> to vector<2x32xf32>
    %1238 = math.tanh %1237 : vector<2x32xf32>
    %1239 = vector.extract_strided_slice %1224 {offsets = [0, 96], sizes = [2, 32], strides = [1, 1]} : vector<2x128xf32> to vector<2x32xf32>
    %1240 = arith.negf %1239 : vector<2x32xf32>
    %1241 = math.exp %1240 : vector<2x32xf32>
    %cst_227 = arith.constant 1.000000e+00 : f32
    %1242 = vector.broadcast %cst_227 : f32 to vector<2x32xf32>
    %1243 = arith.addf %1242, %1241 : vector<2x32xf32>
    %1244 = arith.divf %1242, %1243 : vector<2x32xf32>
    %1245 = arith.mulf %1236, %1191 : vector<2x32xf32>
    %1246 = arith.mulf %1230, %1238 : vector<2x32xf32>
    %1247 = arith.addf %1245, %1246 : vector<2x32xf32>
    %1248 = math.tanh %1247 : vector<2x32xf32>
    %1249 = arith.mulf %1244, %1248 : vector<2x32xf32>
    %cst_228 = arith.constant dense<0.000000e+00> : vector<2x128xf32>
    %1250 = tpu.matmul %1249, %970, %cst_228 {dimension_numbers = #tpu.dot_dimension_numbers<[1], [0], [0], [1], [0, 0, 1, 1], [], []>} : vector<2x32xf32>, vector<32x128xf32>, vector<2x128xf32> -> vector<2x128xf32>
    %1251 = arith.addf %1250, %1054 : vector<2x128xf32>
    %1252 = vector.extract_strided_slice %1251 {offsets = [0, 0], sizes = [2, 32], strides = [1, 1]} : vector<2x128xf32> to vector<2x32xf32>
    %1253 = arith.negf %1252 : vector<2x32xf32>
    %1254 = math.exp %1253 : vector<2x32xf32>
    %cst_229 = arith.constant 1.000000e+00 : f32
    %1255 = vector.broadcast %cst_229 : f32 to vector<2x32xf32>
    %1256 = arith.addf %1255, %1254 : vector<2x32xf32>
    %1257 = arith.divf %1255, %1256 : vector<2x32xf32>
    %1258 = vector.extract_strided_slice %1251 {offsets = [0, 32], sizes = [2, 32], strides = [1, 1]} : vector<2x128xf32> to vector<2x32xf32>
    %1259 = arith.negf %1258 : vector<2x32xf32>
    %1260 = math.exp %1259 : vector<2x32xf32>
    %cst_230 = arith.constant 1.000000e+00 : f32
    %1261 = vector.broadcast %cst_230 : f32 to vector<2x32xf32>
    %1262 = arith.addf %1261, %1260 : vector<2x32xf32>
    %1263 = arith.divf %1261, %1262 : vector<2x32xf32>
    %1264 = vector.extract_strided_slice %1251 {offsets = [0, 64], sizes = [2, 32], strides = [1, 1]} : vector<2x128xf32> to vector<2x32xf32>
    %1265 = math.tanh %1264 : vector<2x32xf32>
    %1266 = vector.extract_strided_slice %1251 {offsets = [0, 96], sizes = [2, 32], strides = [1, 1]} : vector<2x128xf32> to vector<2x32xf32>
    %1267 = arith.negf %1266 : vector<2x32xf32>
    %1268 = math.exp %1267 : vector<2x32xf32>
    %cst_231 = arith.constant 1.000000e+00 : f32
    %1269 = vector.broadcast %cst_231 : f32 to vector<2x32xf32>
    %1270 = arith.addf %1269, %1268 : vector<2x32xf32>
    %1271 = arith.divf %1269, %1270 : vector<2x32xf32>
    %1272 = arith.mulf %1263, %1218 : vector<2x32xf32>
    %1273 = arith.mulf %1257, %1265 : vector<2x32xf32>
    %1274 = arith.addf %1272, %1273 : vector<2x32xf32>
    %1275 = math.tanh %1274 : vector<2x32xf32>
    %1276 = arith.mulf %1271, %1275 : vector<2x32xf32>
    %1277 = tpu.concatenate %1247, %1274, %1249, %1276 in 1 : vector<2x32xf32>, vector<2x32xf32>, vector<2x32xf32>, vector<2x32xf32> -> vector<2x128xf32>
    %c8_232 = arith.constant 8 : index
    %c0_233 = arith.constant 0 : index
    %1278 = vector.load %arg20[%c8_232, %c0_233] : memref<12x128xf32, #tpu.memory_space<vmem>>, vector<2x128xf32>
    tpu.vector_store %arg20[%c8_232, %c0_233], %1277 {strides = array<i32>} : memref<12x128xf32, #tpu.memory_space<vmem>>, vector<2x128xf32>,
    %1279 = vector.extract_strided_slice %978 {offsets = [10, 0], sizes = [2, 128], strides = [1, 1]} : vector<12x128xf32> to vector<2x128xf32>
    %1280 = arith.addf %1279, %1051 : vector<2x128xf32>
    %1281 = vector.extract_strided_slice %1280 {offsets = [0, 0], sizes = [2, 32], strides = [1, 1]} : vector<2x128xf32> to vector<2x32xf32>
    %1282 = arith.negf %1281 : vector<2x32xf32>
    %1283 = math.exp %1282 : vector<2x32xf32>
    %cst_234 = arith.constant 1.000000e+00 : f32
    %1284 = vector.broadcast %cst_234 : f32 to vector<2x32xf32>
    %1285 = arith.addf %1284, %1283 : vector<2x32xf32>
    %1286 = arith.divf %1284, %1285 : vector<2x32xf32>
    %1287 = vector.extract_strided_slice %1280 {offsets = [0, 32], sizes = [2, 32], strides = [1, 1]} : vector<2x128xf32> to vector<2x32xf32>
    %1288 = arith.negf %1287 : vector<2x32xf32>
    %1289 = math.exp %1288 : vector<2x32xf32>
    %cst_235 = arith.constant 1.000000e+00 : f32
    %1290 = vector.broadcast %cst_235 : f32 to vector<2x32xf32>
    %1291 = arith.addf %1290, %1289 : vector<2x32xf32>
    %1292 = arith.divf %1290, %1291 : vector<2x32xf32>
    %1293 = vector.extract_strided_slice %1280 {offsets = [0, 64], sizes = [2, 32], strides = [1, 1]} : vector<2x128xf32> to vector<2x32xf32>
    %1294 = math.tanh %1293 : vector<2x32xf32>
    %1295 = vector.extract_strided_slice %1280 {offsets = [0, 96], sizes = [2, 32], strides = [1, 1]} : vector<2x128xf32> to vector<2x32xf32>
    %1296 = arith.negf %1295 : vector<2x32xf32>
    %1297 = math.exp %1296 : vector<2x32xf32>
    %cst_236 = arith.constant 1.000000e+00 : f32
    %1298 = vector.broadcast %cst_236 : f32 to vector<2x32xf32>
    %1299 = arith.addf %1298, %1297 : vector<2x32xf32>
    %1300 = arith.divf %1298, %1299 : vector<2x32xf32>
    %1301 = arith.mulf %1292, %1247 : vector<2x32xf32>
    %1302 = arith.mulf %1286, %1294 : vector<2x32xf32>
    %1303 = arith.addf %1301, %1302 : vector<2x32xf32>
    %1304 = math.tanh %1303 : vector<2x32xf32>
    %1305 = arith.mulf %1300, %1304 : vector<2x32xf32>
    %cst_237 = arith.constant dense<0.000000e+00> : vector<2x128xf32>
    %1306 = tpu.matmul %1305, %970, %cst_237 {dimension_numbers = #tpu.dot_dimension_numbers<[1], [0], [0], [1], [0, 0, 1, 1], [], []>} : vector<2x32xf32>, vector<32x128xf32>, vector<2x128xf32> -> vector<2x128xf32>
    %1307 = arith.addf %1306, %1054 : vector<2x128xf32>
    %1308 = vector.extract_strided_slice %1307 {offsets = [0, 0], sizes = [2, 32], strides = [1, 1]} : vector<2x128xf32> to vector<2x32xf32>
    %1309 = arith.negf %1308 : vector<2x32xf32>
    %1310 = math.exp %1309 : vector<2x32xf32>
    %cst_238 = arith.constant 1.000000e+00 : f32
    %1311 = vector.broadcast %cst_238 : f32 to vector<2x32xf32>
    %1312 = arith.addf %1311, %1310 : vector<2x32xf32>
    %1313 = arith.divf %1311, %1312 : vector<2x32xf32>
    %1314 = vector.extract_strided_slice %1307 {offsets = [0, 32], sizes = [2, 32], strides = [1, 1]} : vector<2x128xf32> to vector<2x32xf32>
    %1315 = arith.negf %1314 : vector<2x32xf32>
    %1316 = math.exp %1315 : vector<2x32xf32>
    %cst_239 = arith.constant 1.000000e+00 : f32
    %1317 = vector.broadcast %cst_239 : f32 to vector<2x32xf32>
    %1318 = arith.addf %1317, %1316 : vector<2x32xf32>
    %1319 = arith.divf %1317, %1318 : vector<2x32xf32>
    %1320 = vector.extract_strided_slice %1307 {offsets = [0, 64], sizes = [2, 32], strides = [1, 1]} : vector<2x128xf32> to vector<2x32xf32>
    %1321 = math.tanh %1320 : vector<2x32xf32>
    %1322 = vector.extract_strided_slice %1307 {offsets = [0, 96], sizes = [2, 32], strides = [1, 1]} : vector<2x128xf32> to vector<2x32xf32>
    %1323 = arith.negf %1322 : vector<2x32xf32>
    %1324 = math.exp %1323 : vector<2x32xf32>
    %cst_240 = arith.constant 1.000000e+00 : f32
    %1325 = vector.broadcast %cst_240 : f32 to vector<2x32xf32>
    %1326 = arith.addf %1325, %1324 : vector<2x32xf32>
    %1327 = arith.divf %1325, %1326 : vector<2x32xf32>
    %1328 = arith.mulf %1319, %1274 : vector<2x32xf32>
    %1329 = arith.mulf %1313, %1321 : vector<2x32xf32>
    %1330 = arith.addf %1328, %1329 : vector<2x32xf32>
    %1331 = math.tanh %1330 : vector<2x32xf32>
    %1332 = arith.mulf %1327, %1331 : vector<2x32xf32>
    %1333 = tpu.concatenate %1303, %1330, %1305, %1332 in 1 : vector<2x32xf32>, vector<2x32xf32>, vector<2x32xf32>, vector<2x32xf32> -> vector<2x128xf32>
    %c10_241 = arith.constant 10 : index
    %c0_242 = arith.constant 0 : index
    %1334 = vector.load %arg20[%c10_241, %c0_242] : memref<12x128xf32, #tpu.memory_space<vmem>>, vector<2x128xf32>
    tpu.vector_store %arg20[%c10_241, %c0_242], %1333 {strides = array<i32>} : memref<12x128xf32, #tpu.memory_space<vmem>>, vector<2x128xf32>,
    %c0_243 = arith.constant 0 : index
    %c0_244 = arith.constant 0 : index
    %1335 = vector.load %arg20[%c0_243, %c0_244] : memref<12x128xf32, #tpu.memory_space<vmem>>, vector<12x128xf32>
    %c0_245 = arith.constant 0 : index
    %c0_246 = arith.constant 0 : index
    %1336 = vector.load %arg15[%c0_245, %c0_246] : memref<128x128xf32, #tpu.memory_space<vmem>>, vector<128x128xf32>
    %cst_247 = arith.constant dense<0.000000e+00> : vector<12x128xf32>
    %1337 = tpu.matmul %1335, %1336, %cst_247 {dimension_numbers = #tpu.dot_dimension_numbers<[1], [0], [0], [1], [0, 0, 1, 1], [], []>} : vector<12x128xf32>, vector<128x128xf32>, vector<12x128xf32> -> vector<12x128xf32>
    %c0_248 = arith.constant 0 : index
    %c0_249 = arith.constant 0 : index
    %1338 = vector.load %arg16[%c0_248, %c0_249] : memref<1x128xf32, #tpu.memory_space<vmem>>, vector<1x128xf32>
    %1339 = vector.broadcast %1338 : vector<1x128xf32> to vector<12x128xf32>
    %1340 = arith.addf %1337, %1339 : vector<12x128xf32>
    %cst_250 = arith.constant dense<0xFF800000> : vector<12xf32>
    %1341 = vector.multi_reduction <maximumf>, %1340, %cst_250 [1] : vector<12x128xf32> to vector<12xf32>
    %1342 = vector.shape_cast %1341 : vector<12xf32> to vector<12x1xf32>
    %1343 = vector.broadcast %1342 : vector<12x1xf32> to vector<12x128xf32>
    %1344 = arith.subf %1340, %1343 : vector<12x128xf32>
    %1345 = math.exp %1344 : vector<12x128xf32>
    %cst_251 = arith.constant dense<0.000000e+00> : vector<12xf32>
    %1346 = vector.multi_reduction <add>, %1345, %cst_251 [1] : vector<12x128xf32> to vector<12xf32>
    %1347 = vector.shape_cast %1346 : vector<12xf32> to vector<12x1xf32>
    %1348 = math.log %1347 : vector<12x1xf32>
    %1349 = vector.broadcast %1348 : vector<12x1xf32> to vector<12x128xf32>
    %1350 = arith.subf %1344, %1349 : vector<12x128xf32>
    %c0_252 = arith.constant 0 : index
    %c0_253 = arith.constant 0 : index
    %1351 = vector.load %arg19[%c0_252, %c0_253] : memref<12x128xf32, #tpu.memory_space<vmem>>, vector<12x128xf32>
    tpu.vector_store %arg19[%c0_252, %c0_253], %1350 {strides = array<i32>} : memref<12x128xf32, #tpu.memory_space<vmem>>, vector<12x128xf32>,
    return
  }
}

</mosaic_0001>

<llo_original>
// kernel: seq2seq_forward.1
$region0: #{seq2seq_forward.1}
  #allocation0 [shape = 'u32[]', space=smem, size = 0x4, offset = 0x4, fixed_abs, tag = 'smem constant byte address 0x4 - core index']
  #allocation1 [shape = 'u32[72,128]{1,0:T(1,128)}', space=vmem, size = 0x9000, scoped, tag = 'internal scratch']
  #allocation2 [shape = 'f32[16,32]{1,0:T(8,128)}', space=vmem, size = 0x2000, scoped, tag = 'scratch operand']
  %s0 = inlined_call_operand.vmem [shape: f32[16,16], index: 0, kind: input, shape index: {}]
  %s1 = inlined_call_operand.vmem [shape: f32[12,16], index: 1, kind: input, shape index: {}]
  %s2 = inlined_call_operand.vmem [shape: f32[16,128], index: 2, kind: input, shape index: {}]
  %s3 = inlined_call_operand.vmem [shape: f32[32,128], index: 3, kind: input, shape index: {}]
  %s4 = inlined_call_operand.vmem [shape: f32[1,128], index: 4, kind: input, shape index: {}]
  %s5 = inlined_call_operand.vmem [shape: f32[32,128], index: 5, kind: input, shape index: {}]
  %s6 = inlined_call_operand.vmem [shape: f32[32,128], index: 6, kind: input, shape index: {}]
  %s7 = inlined_call_operand.vmem [shape: f32[1,128], index: 7, kind: input, shape index: {}]
  %s8 = inlined_call_operand.vmem [shape: f32[16,128], index: 8, kind: input, shape index: {}]
  %s9 = inlined_call_operand.vmem [shape: f32[32,128], index: 9, kind: input, shape index: {}]
  %s10 = inlined_call_operand.vmem [shape: f32[32,128], index: 10, kind: input, shape index: {}]
  %s11 = inlined_call_operand.vmem [shape: f32[1,128], index: 11, kind: input, shape index: {}]
  %s12 = inlined_call_operand.vmem [shape: f32[32,128], index: 12, kind: input, shape index: {}]
  %s13 = inlined_call_operand.vmem [shape: f32[32,128], index: 13, kind: input, shape index: {}]
  %s14 = inlined_call_operand.vmem [shape: f32[1,128], index: 14, kind: input, shape index: {}]
  %s15 = inlined_call_operand.vmem [shape: f32[128,128], index: 15, kind: input, shape index: {}]
  %s16 = inlined_call_operand.vmem [shape: f32[1,128], index: 16, kind: input, shape index: {}]
  %s17 = inlined_call_operand.vmem [shape: f32[2,2,32], index: 17, kind: input, shape index: {}]
  %s18 = inlined_call_operand.vmem [shape: f32[2,2,32], index: 18, kind: input, shape index: {}]
  %s19 = inlined_call_operand.vmem [shape: f32[12,128], index: 19, kind: output, shape index: {0}]
  %s20 = inlined_call_operand.vmem [shape: f32[12,128], index: 20, kind: output, shape index: {1}]
  %21 = xla_tuple %s19, %s20
  %s22 = sld [smem:[#allocation0]]
  $region94: #{seq2seq_forward.1} parent=0
    _
  %s24 = ssub.s32 1, %s22
  %s25 = scalar_select 0, %s24, %s22
  // Predicated region
  $region2: #{seq2seq_forward.1} parent=0 // pred_check
    _
  $region3: #{seq2seq_forward.1} parent=0 // pred_check_branch
    %27 = sbr.rel (0) target = $region5
  $region4: #{seq2seq_forward.1} parent=0 // pred_region
    _
  $region5: #{seq2seq_forward.1} parent=0 // pred_fallthru
    _
  // Predicated region
  $region6: #{seq2seq_forward.1} parent=0 // pred_check
    _
  $region7: #{seq2seq_forward.1} parent=0 // pred_check_branch
    %29 = sbr.rel (0) target = $region9
  $region8: #{seq2seq_forward.1} parent=0 // pred_region
    _
  $region9: #{seq2seq_forward.1} parent=0 // pred_fallthru
    _
  // Predicated region
  $region10: #{seq2seq_forward.1} parent=0 // pred_check
    _
  $region11: #{seq2seq_forward.1} parent=0 // pred_check_branch
    %31 = sbr.rel (0) target = $region13
  $region12: #{seq2seq_forward.1} parent=0 // pred_region
    _
  $region13: #{seq2seq_forward.1} parent=0 // pred_fallthru
    _
  // Predicated region
  $region14: #{seq2seq_forward.1} parent=0 // pred_check
    _
  $region15: #{seq2seq_forward.1} parent=0 // pred_check_branch
    %33 = sbr.rel (0) target = $region17
  $region16: #{seq2seq_forward.1} parent=0 // pred_region
    _
  $region17: #{seq2seq_forward.1} parent=0 // pred_fallthru
    _
  // Predicated region
  $region18: #{seq2seq_forward.1} parent=0 // pred_check
    _
  $region19: #{seq2seq_forward.1} parent=0 // pred_check_branch
    %35 = sbr.rel (0) target = $region21
  $region20: #{seq2seq_forward.1} parent=0 // pred_region
    _
  $region21: #{seq2seq_forward.1} parent=0 // pred_fallthru
    _
  // Predicated region
  $region22: #{seq2seq_forward.1} parent=0 // pred_check
    _
  $region23: #{seq2seq_forward.1} parent=0 // pred_check_branch
    %37 = sbr.rel (0) target = $region25
  $region24: #{seq2seq_forward.1} parent=0 // pred_region
    _
  $region25: #{seq2seq_forward.1} parent=0 // pred_fallthru
    _
  // Predicated region
  $region26: #{seq2seq_forward.1} parent=0 // pred_check
    _
  $region27: #{seq2seq_forward.1} parent=0 // pred_check_branch
    %39 = sbr.rel (0) target = $region29
  $region28: #{seq2seq_forward.1} parent=0 // pred_region
    _
  $region29: #{seq2seq_forward.1} parent=0 // pred_fallthru
    _
  // Predicated region
  $region30: #{seq2seq_forward.1} parent=0 // pred_check
    _
  $region31: #{seq2seq_forward.1} parent=0 // pred_check_branch
    %41 = sbr.rel (0) target = $region33
  $region32: #{seq2seq_forward.1} parent=0 // pred_region
    _
  $region33: #{seq2seq_forward.1} parent=0 // pred_fallthru
    _
  // Predicated region
  $region34: #{seq2seq_forward.1} parent=0 // pred_check
    _
  $region35: #{seq2seq_forward.1} parent=0 // pred_check_branch
    %43 = sbr.rel (0) target = $region37
  $region36: #{seq2seq_forward.1} parent=0 // pred_region
    _
  $region37: #{seq2seq_forward.1} parent=0 // pred_fallthru
    _
  // Predicated region
  $region38: #{seq2seq_forward.1} parent=0 // pred_check
    _
  $region39: #{seq2seq_forward.1} parent=0 // pred_check_branch
    %45 = sbr.rel (0) target = $region41
  $region40: #{seq2seq_forward.1} parent=0 // pred_region
    _
  $region41: #{seq2seq_forward.1} parent=0 // pred_fallthru
    _
  // Predicated region
  $region42: #{seq2seq_forward.1} parent=0 // pred_check
    _
  $region43: #{seq2seq_forward.1} parent=0 // pred_check_branch
    %47 = sbr.rel (0) target = $region45
  $region44: #{seq2seq_forward.1} parent=0 // pred_region
    _
  $region45: #{seq2seq_forward.1} parent=0 // pred_fallthru
    _
  // Predicated region
  $region46: #{seq2seq_forward.1} parent=0 // pred_check
    _
  $region47: #{seq2seq_forward.1} parent=0 // pred_check_branch
    %49 = sbr.rel (0) target = $region49
  $region48: #{seq2seq_forward.1} parent=0 // pred_region
    _
  $region49: #{seq2seq_forward.1} parent=0 // pred_fallthru
    _
  // Predicated region
  $region50: #{seq2seq_forward.1} parent=0 // pred_check
    _
  $region51: #{seq2seq_forward.1} parent=0 // pred_check_branch
    %51 = sbr.rel (0) target = $region53
  $region52: #{seq2seq_forward.1} parent=0 // pred_region
    _
  $region53: #{seq2seq_forward.1} parent=0 // pred_fallthru
    _
  // Predicated region
  $region54: #{seq2seq_forward.1} parent=0 // pred_check
    _
  $region55: #{seq2seq_forward.1} parent=0 // pred_check_branch
    %53 = sbr.rel (0) target = $region57
  $region56: #{seq2seq_forward.1} parent=0 // pred_region
    _
  $region57: #{seq2seq_forward.1} parent=0 // pred_fallthru
    _
  // Predicated region
  $region58: #{seq2seq_forward.1} parent=0 // pred_check
    _
  $region59: #{seq2seq_forward.1} parent=0 // pred_check_branch
    %55 = sbr.rel (0) target = $region61
  $region60: #{seq2seq_forward.1} parent=0 // pred_region
    _
  $region61: #{seq2seq_forward.1} parent=0 // pred_fallthru
    _
  // Predicated region
  $region62: #{seq2seq_forward.1} parent=0 // pred_check
    _
  $region63: #{seq2seq_forward.1} parent=0 // pred_check_branch
    %57 = sbr.rel (0) target = $region65
  $region64: #{seq2seq_forward.1} parent=0 // pred_region
    _
  $region65: #{seq2seq_forward.1} parent=0 // pred_fallthru
    _
  // Predicated region
  $region66: #{seq2seq_forward.1} parent=0 // pred_check
    _
  $region67: #{seq2seq_forward.1} parent=0 // pred_check_branch
    %59 = sbr.rel (0) target = $region69
  $region68: #{seq2seq_forward.1} parent=0 // pred_region
    _
  $region69: #{seq2seq_forward.1} parent=0 // pred_fallthru
    _
  // Predicated region
  $region70: #{seq2seq_forward.1} parent=0 // pred_check
    _
  $region71: #{seq2seq_forward.1} parent=0 // pred_check_branch
    %61 = sbr.rel (0) target = $region73
  $region72: #{seq2seq_forward.1} parent=0 // pred_region
    _
  $region73: #{seq2seq_forward.1} parent=0 // pred_fallthru
    _
  // Predicated region
  $region74: #{seq2seq_forward.1} parent=0 // pred_check
    _
  $region75: #{seq2seq_forward.1} parent=0 // pred_check_branch
    %63 = sbr.rel (0) target = $region77
  $region76: #{seq2seq_forward.1} parent=0 // pred_region
    _
  $region77: #{seq2seq_forward.1} parent=0 // pred_fallthru
    _
  %v64 = vld [vmem:[%s0] sm:$0xff]
  %v65 = vld [vmem:[%s0 + $0x8] sm:$0xff]
  %v66 = vld [vmem:[%s2] sm:$0xff]
  %v67 = vld [vmem:[%s2 + $0x8] sm:$0xff]
  %v68 = vld [vmem:[%s4] sm:$0x1]
  %v70 = vperm.slane %v68, 0
  %vm72 = vcmask 130048
  %v74 = vsel %vm72, %v64, 0
  %v77 = vsel %vm72, %v65, 0
  %79 = vmatpush.msra.mxu0 0.0
  %80 = vmatpush.msra.mxu0 0.0
  %81 = vmatpush.msra.mxu0 0.0
  %82 = vmatpush.msra.mxu0 0.0
  %83 = vmatpush.msra.mxu0 0.0
  %84 = vmatpush.msra.mxu0 0.0
  %85 = vmatpush.msra.mxu0 0.0
  %86 = vmatpush.msra.mxu0 0.0
  %87 = vmatpush.msra.mxu0 0.0
  %88 = vmatpush.msra.mxu0 0.0
  %89 = vmatpush.msra.mxu0 0.0
  %90 = vmatpush.msra.mxu0 0.0
  %91 = vmatpush.msra.mxu0 0.0
  %92 = vmatpush.msra.mxu0 0.0
  %93 = vmatpush.msra.mxu0 %v67
  %94 = vmatpush.msra.mxu0 %v66
  %95 = vmatmul.f32.gmra.mxu0 %v74
  %v96 = vpop.f32.mrf.mxu0
  %v97 = vadd.f32 %v70, %v96
  %98 = vmatmul.f32.gmra.mxu0 %v77
  %v99 = vpop.f32.mrf.mxu0
  %v100 = vadd.f32 %v70, %v99
  %101 = vdwg.mxu0
  %v102 = vld [vmem:[%s3] sm:$0xff]
  %v103 = vld [vmem:[%s3 + $0x8] sm:$0xff]
  %v104 = vld [vmem:[%s3 + $0x10] sm:$0xff]
  %v105 = vld [vmem:[%s3 + $0x18] sm:$0xff]
  %vm106 = vcmask 261120
  %v108 = vsel %vm106, 0.0, 0
  %110 = vmatpush.msra.mxu0 0.0
  %111 = vmatpush.msra.mxu0 0.0
  %112 = vmatpush.msra.mxu0 0.0
  %113 = vmatpush.msra.mxu0 0.0
  %114 = vmatpush.msra.mxu0 0.0
  %115 = vmatpush.msra.mxu0 0.0
  %116 = vmatpush.msra.mxu0 0.0
  %117 = vmatpush.msra.mxu0 0.0
  %118 = vmatpush.msra.mxu0 0.0
  %119 = vmatpush.msra.mxu0 0.0
  %120 = vmatpush.msra.mxu0 0.0
  %121 = vmatpush.msra.mxu0 0.0
  %122 = vmatpush.msra.mxu0 %v105
  %123 = vmatpush.msra.mxu0 %v104
  %124 = vmatpush.msra.mxu0 %v103
  %125 = vmatpush.msra.mxu0 %v102
  %126 = vmatmul.f32.gmra.mxu0 %v108
  %v127 = vpop.f32.mrf.mxu0
  %v128 = vadd.f32 0.0, %v127
  %129 = vdwg.mxu0
  %v130 = vadd.f32 %v97, %v128
  %v132 = vrot.slane %v128, 2
  %v134 = vadd.f32 %v100, %v132
  %v135 = vxor.u32 %v130, 2147483648
  %v136 = vmul.f32 %v135, 1.442695
  %v137 = vpow.pop %v136
  %v138 = vadd.f32 %v137, 1.0
  %v139 = vrcp.pop %v138
  %v140 = vmul.f32 %v138, %v139
  %v141 = vsub.f32 1.0, %v140
  %v142 = vmul.f32 %v139, %v141
  %v143 = vadd.f32 %v139, %v142
  %vm144 = vweird.f32 %v138
  %vm145 = vweird.f32 %v139
  %vm146 = vmor %vm144, %vm145
  %v147 = vsel %vm146, %v139, %v143
  %v148 = vand.u32 2147483647, %v138
  %vm149 = vcmp.eq.f32.partialorder %v148, 8.507059e+37
  %v150 = vand.u32 %v138, 2147483648
  %v151 = vor.u32 1.1754944e-38, %v150
  %v152 = vsel %vm149, %v151, %v147
  %v153 = vmul.f32 1.0, %v152
  %v154 = vtanh.pop %v130
  %v155 = vmul.f32 %v153, 0.0
  %157 = vrot.lane.b32.xlu0 %v154, 96
  %v158 = vpop.permute.xlu0 %157
  %v160 = vmul.f32 %v153, %v158
  %162 = vrot.lane.b32.xlu0 %v160, 16
  %v163 = vpop.permute.xlu0 %162
  %v165 = vadd.f32 %v155, %v163
  %v166 = vtanh.pop %v165
  %168 = vrot.lane.b32.xlu0 %v166, 32
  %v169 = vpop.permute.xlu0 %168
  %v171 = vmul.f32 %v153, %v169
  %v172 = vxor.u32 %v134, 2147483648
  %v173 = vmul.f32 %v172, 1.442695
  %v174 = vpow.pop %v173
  %v175 = vadd.f32 %v174, 1.0
  %v176 = vrcp.pop %v175
  %v177 = vmul.f32 %v175, %v176
  %v178 = vsub.f32 1.0, %v177
  %v179 = vmul.f32 %v176, %v178
  %v180 = vadd.f32 %v176, %v179
  %vm181 = vweird.f32 %v175
  %vm182 = vweird.f32 %v176
  %vm183 = vmor %vm181, %vm182
  %v184 = vsel %vm183, %v176, %v180
  %v185 = vand.u32 2147483647, %v175
  %vm186 = vcmp.eq.f32.partialorder %v185, 8.507059e+37
  %v187 = vand.u32 %v175, 2147483648
  %v188 = vor.u32 1.1754944e-38, %v187
  %v189 = vsel %vm186, %v188, %v184
  %v190 = vmul.f32 1.0, %v189
  %v191 = vtanh.pop %v134
  %v192 = vmul.f32 %v190, 0.0
  %194 = vrot.lane.b32.xlu0 %v191, 96
  %v195 = vpop.permute.xlu0 %194
  %v197 = vmul.f32 %v190, %v195
  %199 = vrot.lane.b32.xlu0 %v197, 16
  %v200 = vpop.permute.xlu0 %199
  %v202 = vadd.f32 %v192, %v200
  %v203 = vtanh.pop %v202
  %205 = vrot.lane.b32.xlu0 %v203, 32
  %v206 = vpop.permute.xlu0 %205
  %v208 = vmul.f32 %v190, %v206
  %210 = vrot.lane.b32.xlu0 %v171, 80
  %v211 = vpop.permute.xlu0 %210
  %vm213 = vcmask 123904
  %214 = vst.msk [vmem:[#allocation2] sm:$0x3] %vm213, %v211
  %216 = vrot.lane.b32.xlu0 %v208, 32
  %v217 = vpop.permute.xlu0 %216
  %vm219 = vcmask 261254
  %220 = vst.msk [vmem:[#allocation2 + $0x8] sm:$0xc0] %vm219, %v217
  %v221 = vrot.slane %v208, 6
  %222 = vrot.lane.b32.xlu0 %v221, 32
  %v223 = vpop.permute.xlu0 %222
  %v225 = vsel %vm72, %v211, %v223
  %v227 = vsel %vm106, %v225, 0
  %229 = vmatpush.msra.mxu0 0.0
  %230 = vmatpush.msra.mxu0 0.0
  %231 = vmatpush.msra.mxu0 0.0
  %232 = vmatpush.msra.mxu0 0.0
  %233 = vmatpush.msra.mxu0 0.0
  %234 = vmatpush.msra.mxu0 0.0
  %235 = vmatpush.msra.mxu0 0.0
  %236 = vmatpush.msra.mxu0 0.0
  %237 = vmatpush.msra.mxu0 0.0
  %238 = vmatpush.msra.mxu0 0.0
  %239 = vmatpush.msra.mxu0 0.0
  %240 = vmatpush.msra.mxu0 0.0
  %241 = vmatpush.msra.mxu0 %v105
  %242 = vmatpush.msra.mxu0 %v104
  %243 = vmatpush.msra.mxu0 %v103
  %244 = vmatpush.msra.mxu0 %v102
  %245 = vmatmul.f32.gmra.mxu0 %v227
  %v246 = vpop.f32.mrf.mxu0
  %v247 = vadd.f32 0.0, %v246
  %248 = vdwg.mxu0
  %v250 = vrot.slane %v247, 6
  %v252 = vadd.f32 %v97, %v250
  %v253 = vrot.slane %v247, 4
  %v255 = vadd.f32 %v100, %v253
  %v256 = vxor.u32 %v252, 2147483648
  %v257 = vmul.f32 %v256, 1.442695
  %v258 = vpow.pop %v257
  %v259 = vadd.f32 %v258, 1.0
  %v260 = vrcp.pop %v259
  %v261 = vmul.f32 %v259, %v260
  %v262 = vsub.f32 1.0, %v261
  %v263 = vmul.f32 %v260, %v262
  %v264 = vadd.f32 %v260, %v263
  %vm265 = vweird.f32 %v259
  %vm266 = vweird.f32 %v260
  %vm267 = vmor %vm265, %vm266
  %v268 = vsel %vm267, %v260, %v264
  %v269 = vand.u32 2147483647, %v259
  %vm270 = vcmp.eq.f32.partialorder %v269, 8.507059e+37
  %v271 = vand.u32 %v259, 2147483648
  %v272 = vor.u32 1.1754944e-38, %v271
  %v273 = vsel %vm270, %v272, %v268
  %v274 = vmul.f32 1.0, %v273
  %v275 = vtanh.pop %v252
  %v277 = vrot.slane %v165, 6
  %v279 = vmul.f32 %v274, %v277
  %281 = vrot.lane.b32.xlu0 %v275, 96
  %v282 = vpop.permute.xlu0 %281
  %v284 = vmul.f32 %v274, %v282
  %286 = vrot.lane.b32.xlu0 %v284, 16
  %v287 = vpop.permute.xlu0 %286
  %v289 = vadd.f32 %v279, %v287
  %v290 = vtanh.pop %v289
  %292 = vrot.lane.b32.xlu0 %v290, 32
  %v293 = vpop.permute.xlu0 %292
  %v295 = vmul.f32 %v274, %v293
  %v296 = vxor.u32 %v255, 2147483648
  %v297 = vmul.f32 %v296, 1.442695
  %v298 = vpow.pop %v297
  %v299 = vadd.f32 %v298, 1.0
  %v300 = vrcp.pop %v299
  %v301 = vmul.f32 %v299, %v300
  %v302 = vsub.f32 1.0, %v301
  %v303 = vmul.f32 %v300, %v302
  %v304 = vadd.f32 %v300, %v303
  %vm305 = vweird.f32 %v299
  %vm306 = vweird.f32 %v300
  %vm307 = vmor %vm305, %vm306
  %v308 = vsel %vm307, %v300, %v304
  %v309 = vand.u32 2147483647, %v299
  %vm310 = vcmp.eq.f32.partialorder %v309, 8.507059e+37
  %v311 = vand.u32 %v299, 2147483648
  %v312 = vor.u32 1.1754944e-38, %v311
  %v313 = vsel %vm310, %v312, %v308
  %v314 = vmul.f32 1.0, %v313
  %v315 = vtanh.pop %v255
  %v317 = vrot.slane %v202, 2
  %v319 = vmul.f32 %v314, %v317
  %321 = vrot.lane.b32.xlu0 %v315, 96
  %v322 = vpop.permute.xlu0 %321
  %v324 = vmul.f32 %v314, %v322
  %326 = vrot.lane.b32.xlu0 %v324, 16
  %v327 = vpop.permute.xlu0 %326
  %v329 = vadd.f32 %v319, %v327
  %v330 = vtanh.pop %v329
  %332 = vrot.lane.b32.xlu0 %v330, 32
  %v333 = vpop.permute.xlu0 %332
  %v335 = vmul.f32 %v314, %v333
  %337 = vrot.lane.b32.xlu0 %v295, 80
  %v338 = vpop.permute.xlu0 %337
  %vm340 = vcmask 125954
  %341 = vst.msk [vmem:[#allocation2] sm:$0xc] %vm340, %v338
  %343 = vrot.lane.b32.xlu0 %v335, 32
  %v344 = vpop.permute.xlu0 %343
  %vm346 = vcmask 259204
  %347 = vst.msk [vmem:[#allocation2 + $0x8] sm:$0x30] %vm346, %v344
  %v348 = vrot.slane %v335, 2
  %349 = vrot.lane.b32.xlu0 %v348, 32
  %v350 = vpop.permute.xlu0 %349
  %v352 = vsel %vm72, %v338, %v350
  %v354 = vrot.slane %v352, 2
  %v355 = vsel %vm106, %v354, 0
  %357 = vmatpush.msra.mxu0 0.0
  %358 = vmatpush.msra.mxu0 0.0
  %359 = vmatpush.msra.mxu0 0.0
  %360 = vmatpush.msra.mxu0 0.0
  %361 = vmatpush.msra.mxu0 0.0
  %362 = vmatpush.msra.mxu0 0.0
  %363 = vmatpush.msra.mxu0 0.0
  %364 = vmatpush.msra.mxu0 0.0
  %365 = vmatpush.msra.mxu0 0.0
  %366 = vmatpush.msra.mxu0 0.0
  %367 = vmatpush.msra.mxu0 0.0
  %368 = vmatpush.msra.mxu0 0.0
  %369 = vmatpush.msra.mxu0 %v105
  %370 = vmatpush.msra.mxu0 %v104
  %371 = vmatpush.msra.mxu0 %v103
  %372 = vmatpush.msra.mxu0 %v102
  %373 = vmatmul.f32.gmra.mxu0 %v355
  %v374 = vpop.f32.mrf.mxu0
  %v375 = vadd.f32 0.0, %v374
  %376 = vdwg.mxu0
  %v378 = vrot.slane %v375, 4
  %v380 = vadd.f32 %v97, %v378
  %v381 = vrot.slane %v375, 6
  %v383 = vadd.f32 %v100, %v381
  %v384 = vxor.u32 %v380, 2147483648
  %v385 = vmul.f32 %v384, 1.442695
  %v386 = vpow.pop %v385
  %v387 = vadd.f32 %v386, 1.0
  %v388 = vrcp.pop %v387
  %v389 = vmul.f32 %v387, %v388
  %v390 = vsub.f32 1.0, %v389
  %v391 = vmul.f32 %v388, %v390
  %v392 = vadd.f32 %v388, %v391
  %vm393 = vweird.f32 %v387
  %vm394 = vweird.f32 %v388
  %vm395 = vmor %vm393, %vm394
  %v396 = vsel %vm395, %v388, %v392
  %v397 = vand.u32 2147483647, %v387
  %vm398 = vcmp.eq.f32.partialorder %v397, 8.507059e+37
  %v399 = vand.u32 %v387, 2147483648
  %v400 = vor.u32 1.1754944e-38, %v399
  %v401 = vsel %vm398, %v400, %v396
  %v402 = vmul.f32 1.0, %v401
  %v403 = vtanh.pop %v380
  %v405 = vrot.slane %v289, 6
  %v407 = vmul.f32 %v402, %v405
  %409 = vrot.lane.b32.xlu0 %v403, 96
  %v410 = vpop.permute.xlu0 %409
  %v412 = vmul.f32 %v402, %v410
  %414 = vrot.lane.b32.xlu0 %v412, 16
  %v415 = vpop.permute.xlu0 %414
  %v417 = vadd.f32 %v407, %v415
  %v418 = vtanh.pop %v417
  %420 = vrot.lane.b32.xlu0 %v418, 32
  %v421 = vpop.permute.xlu0 %420
  %v423 = vmul.f32 %v402, %v421
  %v424 = vxor.u32 %v383, 2147483648
  %v425 = vmul.f32 %v424, 1.442695
  %v426 = vpow.pop %v425
  %v427 = vadd.f32 %v426, 1.0
  %v428 = vrcp.pop %v427
  %v429 = vmul.f32 %v427, %v428
  %v430 = vsub.f32 1.0, %v429
  %v431 = vmul.f32 %v428, %v430
  %v432 = vadd.f32 %v428, %v431
  %vm433 = vweird.f32 %v427
  %vm434 = vweird.f32 %v428
  %vm435 = vmor %vm433, %vm434
  %v436 = vsel %vm435, %v428, %v432
  %v437 = vand.u32 2147483647, %v427
  %vm438 = vcmp.eq.f32.partialorder %v437, 8.507059e+37
  %v439 = vand.u32 %v427, 2147483648
  %v440 = vor.u32 1.1754944e-38, %v439
  %v441 = vsel %vm438, %v440, %v436
  %v442 = vmul.f32 1.0, %v441
  %v443 = vtanh.pop %v383
  %v445 = vrot.slane %v329, 2
  %v447 = vmul.f32 %v442, %v445
  %449 = vrot.lane.b32.xlu0 %v443, 96
  %v450 = vpop.permute.xlu0 %449
  %v452 = vmul.f32 %v442, %v450
  %454 = vrot.lane.b32.xlu0 %v452, 16
  %v455 = vpop.permute.xlu0 %454
  %v457 = vadd.f32 %v447, %v455
  %v458 = vtanh.pop %v457
  %460 = vrot.lane.b32.xlu0 %v458, 32
  %v461 = vpop.permute.xlu0 %460
  %v463 = vmul.f32 %v442, %v461
  %465 = vrot.lane.b32.xlu0 %v423, 80
  %v466 = vpop.permute.xlu0 %465
  %vm468 = vcmask 128004
  %469 = vst.msk [vmem:[#allocation2] sm:$0x30] %vm468, %v466
  %471 = vrot.lane.b32.xlu0 %v463, 32
  %v472 = vpop.permute.xlu0 %471
  %vm474 = vcmask 257154
  %475 = vst.msk [vmem:[#allocation2 + $0x8] sm:$0xc] %vm474, %v472
  %v476 = vrot.slane %v463, 6
  %477 = vrot.lane.b32.xlu0 %v476, 32
  %v478 = vpop.permute.xlu0 %477
  %v480 = vsel %vm72, %v466, %v478
  %v482 = vrot.slane %v480, 4
  %v483 = vsel %vm106, %v482, 0
  %485 = vmatpush.msra.mxu0 0.0
  %486 = vmatpush.msra.mxu0 0.0
  %487 = vmatpush.msra.mxu0 0.0
  %488 = vmatpush.msra.mxu0 0.0
  %489 = vmatpush.msra.mxu0 0.0
  %490 = vmatpush.msra.mxu0 0.0
  %491 = vmatpush.msra.mxu0 0.0
  %492 = vmatpush.msra.mxu0 0.0
  %493 = vmatpush.msra.mxu0 0.0
  %494 = vmatpush.msra.mxu0 0.0
  %495 = vmatpush.msra.mxu0 0.0
  %496 = vmatpush.msra.mxu0 0.0
  %497 = vmatpush.msra.mxu0 %v105
  %498 = vmatpush.msra.mxu0 %v104
  %499 = vmatpush.msra.mxu0 %v103
  %500 = vmatpush.msra.mxu0 %v102
  %501 = vmatmul.f32.gmra.mxu0 %v483
  %v502 = vpop.f32.mrf.mxu0
  %v503 = vadd.f32 0.0, %v502
  %504 = vdwg.mxu0
  %v506 = vrot.slane %v503, 2
  %v508 = vadd.f32 %v97, %v506
  %v509 = vadd.f32 %v100, %v503
  %v510 = vxor.u32 %v508, 2147483648
  %v511 = vmul.f32 %v510, 1.442695
  %v512 = vpow.pop %v511
  %v513 = vadd.f32 %v512, 1.0
  %v514 = vrcp.pop %v513
  %v515 = vmul.f32 %v513, %v514
  %v516 = vsub.f32 1.0, %v515
  %v517 = vmul.f32 %v514, %v516
  %v518 = vadd.f32 %v514, %v517
  %vm519 = vweird.f32 %v513
  %vm520 = vweird.f32 %v514
  %vm521 = vmor %vm519, %vm520
  %v522 = vsel %vm521, %v514, %v518
  %v523 = vand.u32 2147483647, %v513
  %vm524 = vcmp.eq.f32.partialorder %v523, 8.507059e+37
  %v525 = vand.u32 %v513, 2147483648
  %v526 = vor.u32 1.1754944e-38, %v525
  %v527 = vsel %vm524, %v526, %v522
  %v528 = vmul.f32 1.0, %v527
  %v529 = vtanh.pop %v508
  %v531 = vrot.slane %v417, 6
  %v533 = vmul.f32 %v528, %v531
  %535 = vrot.lane.b32.xlu0 %v529, 96
  %v536 = vpop.permute.xlu0 %535
  %v538 = vmul.f32 %v528, %v536
  %540 = vrot.lane.b32.xlu0 %v538, 16
  %v541 = vpop.permute.xlu0 %540
  %v543 = vadd.f32 %v533, %v541
  %v544 = vtanh.pop %v543
  %546 = vrot.lane.b32.xlu0 %v544, 32
  %v547 = vpop.permute.xlu0 %546
  %v549 = vmul.f32 %v528, %v547
  %v550 = vxor.u32 %v509, 2147483648
  %v551 = vmul.f32 %v550, 1.442695
  %v552 = vpow.pop %v551
  %v553 = vadd.f32 %v552, 1.0
  %v554 = vrcp.pop %v553
  %v555 = vmul.f32 %v553, %v554
  %v556 = vsub.f32 1.0, %v555
  %v557 = vmul.f32 %v554, %v556
  %v558 = vadd.f32 %v554, %v557
  %vm559 = vweird.f32 %v553
  %vm560 = vweird.f32 %v554
  %vm561 = vmor %vm559, %vm560
  %v562 = vsel %vm561, %v554, %v558
  %v563 = vand.u32 2147483647, %v553
  %vm564 = vcmp.eq.f32.partialorder %v563, 8.507059e+37
  %v565 = vand.u32 %v553, 2147483648
  %v566 = vor.u32 1.1754944e-38, %v565
  %v567 = vsel %vm564, %v566, %v562
  %v568 = vmul.f32 1.0, %v567
  %v569 = vtanh.pop %v509
  %v571 = vrot.slane %v457, 2
  %v573 = vmul.f32 %v568, %v571
  %575 = vrot.lane.b32.xlu0 %v569, 96
  %v576 = vpop.permute.xlu0 %575
  %v578 = vmul.f32 %v568, %v576
  %580 = vrot.lane.b32.xlu0 %v578, 16
  %v581 = vpop.permute.xlu0 %580
  %v583 = vadd.f32 %v573, %v581
  %v584 = vtanh.pop %v583
  %586 = vrot.lane.b32.xlu0 %v584, 32
  %v587 = vpop.permute.xlu0 %586
  %v589 = vmul.f32 %v568, %v587
  %591 = vrot.lane.b32.xlu0 %v549, 80
  %v592 = vpop.permute.xlu0 %591
  %vm594 = vcmask 130054
  %595 = vst.msk [vmem:[#allocation2] sm:$0xc0] %vm594, %v592
  %597 = vrot.lane.b32.xlu0 %v589, 32
  %v598 = vpop.permute.xlu0 %597
  %vm600 = vcmask 255104
  %601 = vst.msk [vmem:[#allocation2 + $0x8] sm:$0x3] %vm600, %v598
  %v602 = vrot.slane %v589, 2
  %603 = vrot.lane.b32.xlu0 %v602, 32
  %v604 = vpop.permute.xlu0 %603
  %v606 = vsel %vm72, %v592, %v604
  %v608 = vrot.slane %v606, 6
  %v609 = vsel %vm106, %v608, 0
  %611 = vmatpush.msra.mxu0 0.0
  %612 = vmatpush.msra.mxu0 0.0
  %613 = vmatpush.msra.mxu0 0.0
  %614 = vmatpush.msra.mxu0 0.0
  %615 = vmatpush.msra.mxu0 0.0
  %616 = vmatpush.msra.mxu0 0.0
  %617 = vmatpush.msra.mxu0 0.0
  %618 = vmatpush.msra.mxu0 0.0
  %619 = vmatpush.msra.mxu0 0.0
  %620 = vmatpush.msra.mxu0 0.0
  %621 = vmatpush.msra.mxu0 0.0
  %622 = vmatpush.msra.mxu0 0.0
  %623 = vmatpush.msra.mxu0 %v105
  %624 = vmatpush.msra.mxu0 %v104
  %625 = vmatpush.msra.mxu0 %v103
  %626 = vmatpush.msra.mxu0 %v102
  %627 = vmatmul.f32.gmra.mxu0 %v609
  %v628 = vpop.f32.mrf.mxu0
  %v629 = vadd.f32 0.0, %v628
  %630 = vdwg.mxu0
  %v631 = vadd.f32 %v100, %v629
  %v633 = vrot.slane %v629, 2
  %v635 = vadd.f32 %v97, %v633
  %v636 = vxor.u32 %v631, 2147483648
  %v637 = vmul.f32 %v636, 1.442695
  %v638 = vpow.pop %v637
  %v639 = vadd.f32 %v638, 1.0
  %v640 = vrcp.pop %v639
  %v641 = vmul.f32 %v639, %v640
  %v642 = vsub.f32 1.0, %v641
  %v643 = vmul.f32 %v640, %v642
  %v644 = vadd.f32 %v640, %v643
  %vm645 = vweird.f32 %v639
  %vm646 = vweird.f32 %v640
  %vm647 = vmor %vm645, %vm646
  %v648 = vsel %vm647, %v640, %v644
  %v649 = vand.u32 2147483647, %v639
  %vm650 = vcmp.eq.f32.partialorder %v649, 8.507059e+37
  %v651 = vand.u32 %v639, 2147483648
  %v652 = vor.u32 1.1754944e-38, %v651
  %v653 = vsel %vm650, %v652, %v648
  %v654 = vmul.f32 1.0, %v653
  %v655 = vtanh.pop %v631
  %v657 = vrot.slane %v543, 6
  %v659 = vmul.f32 %v654, %v657
  %661 = vrot.lane.b32.xlu0 %v655, 96
  %v662 = vpop.permute.xlu0 %661
  %v664 = vmul.f32 %v654, %v662
  %666 = vrot.lane.b32.xlu0 %v664, 16
  %v667 = vpop.permute.xlu0 %666
  %v669 = vadd.f32 %v659, %v667
  %v670 = vtanh.pop %v669
  %672 = vrot.lane.b32.xlu0 %v670, 32
  %v673 = vpop.permute.xlu0 %672
  %v675 = vmul.f32 %v654, %v673
  %v676 = vxor.u32 %v635, 2147483648
  %v677 = vmul.f32 %v676, 1.442695
  %v678 = vpow.pop %v677
  %v679 = vadd.f32 %v678, 1.0
  %v680 = vrcp.pop %v679
  %v681 = vmul.f32 %v679, %v680
  %v682 = vsub.f32 1.0, %v681
  %v683 = vmul.f32 %v680, %v682
  %v684 = vadd.f32 %v680, %v683
  %vm685 = vweird.f32 %v679
  %vm686 = vweird.f32 %v680
  %vm687 = vmor %vm685, %vm686
  %v688 = vsel %vm687, %v680, %v684
  %v689 = vand.u32 2147483647, %v679
  %vm690 = vcmp.eq.f32.partialorder %v689, 8.507059e+37
  %v691 = vand.u32 %v679, 2147483648
  %v692 = vor.u32 1.1754944e-38, %v691
  %v693 = vsel %vm690, %v692, %v688
  %v694 = vmul.f32 1.0, %v693
  %v695 = vtanh.pop %v635
  %v697 = vrot.slane %v583, 2
  %v699 = vmul.f32 %v694, %v697
  %701 = vrot.lane.b32.xlu0 %v695, 96
  %v702 = vpop.permute.xlu0 %701
  %v704 = vmul.f32 %v694, %v702
  %706 = vrot.lane.b32.xlu0 %v704, 16
  %v707 = vpop.permute.xlu0 %706
  %v709 = vadd.f32 %v699, %v707
  %v710 = vtanh.pop %v709
  %712 = vrot.lane.b32.xlu0 %v710, 32
  %v713 = vpop.permute.xlu0 %712
  %v715 = vmul.f32 %v694, %v713
  %717 = vrot.lane.b32.xlu0 %v675, 80
  %v718 = vpop.permute.xlu0 %717
  %720 = vst.msk [vmem:[#allocation2 + $0x8] sm:$0x3] %vm213, %v718
  %722 = vrot.lane.b32.xlu0 %v715, 32
  %v723 = vpop.permute.xlu0 %722
  %725 = vst.msk [vmem:[#allocation2] sm:$0xc0] %vm219, %v723
  %v726 = vrot.slane %v715, 6
  %727 = vrot.lane.b32.xlu0 %v726, 32
  %v728 = vpop.permute.xlu0 %727
  %v730 = vsel %vm72, %v718, %v728
  %v732 = vsel %vm106, %v730, 0
  %734 = vmatpush.msra.mxu0 0.0
  %735 = vmatpush.msra.mxu0 0.0
  %736 = vmatpush.msra.mxu0 0.0
  %737 = vmatpush.msra.mxu0 0.0
  %738 = vmatpush.msra.mxu0 0.0
  %739 = vmatpush.msra.mxu0 0.0
  %740 = vmatpush.msra.mxu0 0.0
  %741 = vmatpush.msra.mxu0 0.0
  %742 = vmatpush.msra.mxu0 0.0
  %743 = vmatpush.msra.mxu0 0.0
  %744 = vmatpush.msra.mxu0 0.0
  %745 = vmatpush.msra.mxu0 0.0
  %746 = vmatpush.msra.mxu0 %v105
  %747 = vmatpush.msra.mxu0 %v104
  %748 = vmatpush.msra.mxu0 %v103
  %749 = vmatpush.msra.mxu0 %v102
  %750 = vmatmul.f32.gmra.mxu0 %v732
  %v751 = vpop.f32.mrf.mxu0
  %v752 = vadd.f32 0.0, %v751
  %753 = vdwg.mxu0
  %v755 = vrot.slane %v752, 6
  %v757 = vadd.f32 %v100, %v755
  %v758 = vrot.slane %v752, 4
  %v760 = vadd.f32 %v97, %v758
  %v761 = vxor.u32 %v757, 2147483648
  %v762 = vmul.f32 %v761, 1.442695
  %v763 = vpow.pop %v762
  %v764 = vadd.f32 %v763, 1.0
  %v765 = vrcp.pop %v764
  %v766 = vmul.f32 %v764, %v765
  %v767 = vsub.f32 1.0, %v766
  %v768 = vmul.f32 %v765, %v767
  %v769 = vadd.f32 %v765, %v768
  %vm770 = vweird.f32 %v764
  %vm771 = vweird.f32 %v765
  %vm772 = vmor %vm770, %vm771
  %v773 = vsel %vm772, %v765, %v769
  %v774 = vand.u32 2147483647, %v764
  %vm775 = vcmp.eq.f32.partialorder %v774, 8.507059e+37
  %v776 = vand.u32 %v764, 2147483648
  %v777 = vor.u32 1.1754944e-38, %v776
  %v778 = vsel %vm775, %v777, %v773
  %v779 = vmul.f32 1.0, %v778
  %v780 = vtanh.pop %v757
  %v782 = vrot.slane %v669, 6
  %v784 = vmul.f32 %v779, %v782
  %786 = vrot.lane.b32.xlu0 %v780, 96
  %v787 = vpop.permute.xlu0 %786
  %v789 = vmul.f32 %v779, %v787
  %791 = vrot.lane.b32.xlu0 %v789, 16
  %v792 = vpop.permute.xlu0 %791
  %v794 = vadd.f32 %v784, %v792
  %v795 = vtanh.pop %v794
  %797 = vrot.lane.b32.xlu0 %v795, 32
  %v798 = vpop.permute.xlu0 %797
  %v800 = vmul.f32 %v779, %v798
  %v801 = vxor.u32 %v760, 2147483648
  %v802 = vmul.f32 %v801, 1.442695
  %v803 = vpow.pop %v802
  %v804 = vadd.f32 %v803, 1.0
  %v805 = vrcp.pop %v804
  %v806 = vmul.f32 %v804, %v805
  %v807 = vsub.f32 1.0, %v806
  %v808 = vmul.f32 %v805, %v807
  %v809 = vadd.f32 %v805, %v808
  %vm810 = vweird.f32 %v804
  %vm811 = vweird.f32 %v805
  %vm812 = vmor %vm810, %vm811
  %v813 = vsel %vm812, %v805, %v809
  %v814 = vand.u32 2147483647, %v804
  %vm815 = vcmp.eq.f32.partialorder %v814, 8.507059e+37
  %v816 = vand.u32 %v804, 2147483648
  %v817 = vor.u32 1.1754944e-38, %v816
  %v818 = vsel %vm815, %v817, %v813
  %v819 = vmul.f32 1.0, %v818
  %v820 = vtanh.pop %v760
  %v822 = vrot.slane %v709, 2
  %v824 = vmul.f32 %v819, %v822
  %826 = vrot.lane.b32.xlu0 %v820, 96
  %v827 = vpop.permute.xlu0 %826
  %v829 = vmul.f32 %v819, %v827
  %831 = vrot.lane.b32.xlu0 %v829, 16
  %v832 = vpop.permute.xlu0 %831
  %v834 = vadd.f32 %v824, %v832
  %v835 = vtanh.pop %v834
  %837 = vrot.lane.b32.xlu0 %v835, 32
  %v838 = vpop.permute.xlu0 %837
  %v840 = vmul.f32 %v819, %v838
  %842 = vrot.lane.b32.xlu0 %v800, 80
  %v843 = vpop.permute.xlu0 %842
  %845 = vst.msk [vmem:[#allocation2 + $0x8] sm:$0xc] %vm340, %v843
  %847 = vrot.lane.b32.xlu0 %v840, 32
  %v848 = vpop.permute.xlu0 %847
  %850 = vst.msk [vmem:[#allocation2] sm:$0x30] %vm346, %v848
  %v851 = vrot.slane %v840, 2
  %852 = vrot.lane.b32.xlu0 %v851, 32
  %v853 = vpop.permute.xlu0 %852
  %v855 = vsel %vm72, %v843, %v853
  %v857 = vrot.slane %v855, 2
  %v858 = vsel %vm106, %v857, 0
  %860 = vmatpush.msra.mxu0 0.0
  %861 = vmatpush.msra.mxu0 0.0
  %862 = vmatpush.msra.mxu0 0.0
  %863 = vmatpush.msra.mxu0 0.0
  %864 = vmatpush.msra.mxu0 0.0
  %865 = vmatpush.msra.mxu0 0.0
  %866 = vmatpush.msra.mxu0 0.0
  %867 = vmatpush.msra.mxu0 0.0
  %868 = vmatpush.msra.mxu0 0.0
  %869 = vmatpush.msra.mxu0 0.0
  %870 = vmatpush.msra.mxu0 0.0
  %871 = vmatpush.msra.mxu0 0.0
  %872 = vmatpush.msra.mxu0 %v105
  %873 = vmatpush.msra.mxu0 %v104
  %874 = vmatpush.msra.mxu0 %v103
  %875 = vmatpush.msra.mxu0 %v102
  %876 = vmatmul.f32.gmra.mxu0 %v858
  %v877 = vpop.f32.mrf.mxu0
  %v878 = vadd.f32 0.0, %v877
  %879 = vdwg.mxu0
  %v881 = vrot.slane %v878, 4
  %v883 = vadd.f32 %v100, %v881
  %v884 = vrot.slane %v878, 6
  %v886 = vadd.f32 %v97, %v884
  %v887 = vxor.u32 %v883, 2147483648
  %v888 = vmul.f32 %v887, 1.442695
  %v889 = vpow.pop %v888
  %v890 = vadd.f32 %v889, 1.0
  %v891 = vrcp.pop %v890
  %v892 = vmul.f32 %v890, %v891
  %v893 = vsub.f32 1.0, %v892
  %v894 = vmul.f32 %v891, %v893
  %v895 = vadd.f32 %v891, %v894
  %vm896 = vweird.f32 %v890
  %vm897 = vweird.f32 %v891
  %vm898 = vmor %vm896, %vm897
  %v899 = vsel %vm898, %v891, %v895
  %v900 = vand.u32 2147483647, %v890
  %vm901 = vcmp.eq.f32.partialorder %v900, 8.507059e+37
  %v902 = vand.u32 %v890, 2147483648
  %v903 = vor.u32 1.1754944e-38, %v902
  %v904 = vsel %vm901, %v903, %v899
  %v905 = vmul.f32 1.0, %v904
  %v906 = vtanh.pop %v883
  %v908 = vrot.slane %v794, 6
  %v910 = vmul.f32 %v905, %v908
  %912 = vrot.lane.b32.xlu0 %v906, 96
  %v913 = vpop.permute.xlu0 %912
  %v915 = vmul.f32 %v905, %v913
  %917 = vrot.lane.b32.xlu0 %v915, 16
  %v918 = vpop.permute.xlu0 %917
  %v920 = vadd.f32 %v910, %v918
  %v921 = vtanh.pop %v920
  %923 = vrot.lane.b32.xlu0 %v921, 32
  %v924 = vpop.permute.xlu0 %923
  %v926 = vmul.f32 %v905, %v924
  %v927 = vxor.u32 %v886, 2147483648
  %v928 = vmul.f32 %v927, 1.442695
  %v929 = vpow.pop %v928
  %v930 = vadd.f32 %v929, 1.0
  %v931 = vrcp.pop %v930
  %v932 = vmul.f32 %v930, %v931
  %v933 = vsub.f32 1.0, %v932
  %v934 = vmul.f32 %v931, %v933
  %v935 = vadd.f32 %v931, %v934
  %vm936 = vweird.f32 %v930
  %vm937 = vweird.f32 %v931
  %vm938 = vmor %vm936, %vm937
  %v939 = vsel %vm938, %v931, %v935
  %v940 = vand.u32 2147483647, %v930
  %vm941 = vcmp.eq.f32.partialorder %v940, 8.507059e+37
  %v942 = vand.u32 %v930, 2147483648
  %v943 = vor.u32 1.1754944e-38, %v942
  %v944 = vsel %vm941, %v943, %v939
  %v945 = vmul.f32 1.0, %v944
  %v946 = vtanh.pop %v886
  %v948 = vrot.slane %v834, 2
  %v950 = vmul.f32 %v945, %v948
  %952 = vrot.lane.b32.xlu0 %v946, 96
  %v953 = vpop.permute.xlu0 %952
  %v955 = vmul.f32 %v945, %v953
  %957 = vrot.lane.b32.xlu0 %v955, 16
  %v958 = vpop.permute.xlu0 %957
  %v960 = vadd.f32 %v950, %v958
  %v961 = vtanh.pop %v960
  %963 = vrot.lane.b32.xlu0 %v961, 32
  %v964 = vpop.permute.xlu0 %963
  %v966 = vmul.f32 %v945, %v964
  %968 = vrot.lane.b32.xlu0 %v926, 80
  %v969 = vpop.permute.xlu0 %968
  %971 = vst.msk [vmem:[#allocation2 + $0x8] sm:$0x30] %vm468, %v969
  %973 = vrot.lane.b32.xlu0 %v966, 32
  %v974 = vpop.permute.xlu0 %973
  %976 = vst.msk [vmem:[#allocation2] sm:$0xc] %vm474, %v974
  %v977 = vrot.slane %v966, 6
  %978 = vrot.lane.b32.xlu0 %v977, 32
  %v979 = vpop.permute.xlu0 %978
  %v981 = vsel %vm72, %v969, %v979
  %v983 = vrot.slane %v981, 4
  %v984 = vsel %vm106, %v983, 0
  %986 = vmatpush.msra.mxu0 0.0
  %987 = vmatpush.msra.mxu0 0.0
  %988 = vmatpush.msra.mxu0 0.0
  %989 = vmatpush.msra.mxu0 0.0
  %990 = vmatpush.msra.mxu0 0.0
  %991 = vmatpush.msra.mxu0 0.0
  %992 = vmatpush.msra.mxu0 0.0
  %993 = vmatpush.msra.mxu0 0.0
  %994 = vmatpush.msra.mxu0 0.0
  %995 = vmatpush.msra.mxu0 0.0
  %996 = vmatpush.msra.mxu0 0.0
  %997 = vmatpush.msra.mxu0 0.0
  %998 = vmatpush.msra.mxu0 %v105
  %999 = vmatpush.msra.mxu0 %v104
  %1000 = vmatpush.msra.mxu0 %v103
  %1001 = vmatpush.msra.mxu0 %v102
  %1002 = vmatmul.f32.gmra.mxu0 %v984
  %v1003 = vpop.f32.mrf.mxu0
  %v1004 = vadd.f32 0.0, %v1003
  %1005 = vdwg.mxu0
  %v1007 = vrot.slane %v1004, 2
  %v1009 = vadd.f32 %v100, %v1007
  %v1010 = vadd.f32 %v97, %v1004
  %v1011 = vxor.u32 %v1009, 2147483648
  %v1012 = vmul.f32 %v1011, 1.442695
  %v1013 = vpow.pop %v1012
  %v1014 = vadd.f32 %v1013, 1.0
  %v1015 = vrcp.pop %v1014
  %v1016 = vmul.f32 %v1014, %v1015
  %v1017 = vsub.f32 1.0, %v1016
  %v1018 = vmul.f32 %v1015, %v1017
  %v1019 = vadd.f32 %v1015, %v1018
  %vm1020 = vweird.f32 %v1014
  %vm1021 = vweird.f32 %v1015
  %vm1022 = vmor %vm1020, %vm1021
  %v1023 = vsel %vm1022, %v1015, %v1019
  %v1024 = vand.u32 2147483647, %v1014
  %vm1025 = vcmp.eq.f32.partialorder %v1024, 8.507059e+37
  %v1026 = vand.u32 %v1014, 2147483648
  %v1027 = vor.u32 1.1754944e-38, %v1026
  %v1028 = vsel %vm1025, %v1027, %v1023
  %v1029 = vmul.f32 1.0, %v1028
  %v1030 = vtanh.pop %v1009
  %v1032 = vrot.slane %v920, 6
  %v1034 = vmul.f32 %v1029, %v1032
  %1036 = vrot.lane.b32.xlu0 %v1030, 96
  %v1037 = vpop.permute.xlu0 %1036
  %v1039 = vmul.f32 %v1029, %v1037
  %1041 = vrot.lane.b32.xlu0 %v1039, 16
  %v1042 = vpop.permute.xlu0 %1041
  %v1044 = vadd.f32 %v1034, %v1042
  %v1045 = vtanh.pop %v1044
  %1047 = vrot.lane.b32.xlu0 %v1045, 32
  %v1048 = vpop.permute.xlu0 %1047
  %v1050 = vmul.f32 %v1029, %v1048
  %v1051 = vxor.u32 %v1010, 2147483648
  %v1052 = vmul.f32 %v1051, 1.442695
  %v1053 = vpow.pop %v1052
  %v1054 = vadd.f32 %v1053, 1.0
  %v1055 = vrcp.pop %v1054
  %v1056 = vmul.f32 %v1054, %v1055
  %v1057 = vsub.f32 1.0, %v1056
  %v1058 = vmul.f32 %v1055, %v1057
  %v1059 = vadd.f32 %v1055, %v1058
  %vm1060 = vweird.f32 %v1054
  %vm1061 = vweird.f32 %v1055
  %vm1062 = vmor %vm1060, %vm1061
  %v1063 = vsel %vm1062, %v1055, %v1059
  %v1064 = vand.u32 2147483647, %v1054
  %vm1065 = vcmp.eq.f32.partialorder %v1064, 8.507059e+37
  %v1066 = vand.u32 %v1054, 2147483648
  %v1067 = vor.u32 1.1754944e-38, %v1066
  %v1068 = vsel %vm1065, %v1067, %v1063
  %v1069 = vmul.f32 1.0, %v1068
  %v1070 = vtanh.pop %v1010
  %v1072 = vrot.slane %v960, 2
  %v1074 = vmul.f32 %v1069, %v1072
  %1076 = vrot.lane.b32.xlu0 %v1070, 96
  %v1077 = vpop.permute.xlu0 %1076
  %v1079 = vmul.f32 %v1069, %v1077
  %1081 = vrot.lane.b32.xlu0 %v1079, 16
  %v1082 = vpop.permute.xlu0 %1081
  %v1084 = vadd.f32 %v1074, %v1082
  %v1085 = vtanh.pop %v1084
  %1087 = vrot.lane.b32.xlu0 %v1085, 32
  %v1088 = vpop.permute.xlu0 %1087
  %v1090 = vmul.f32 %v1069, %v1088
  %1092 = vrot.lane.b32.xlu0 %v1050, 80
  %v1093 = vpop.permute.xlu0 %1092
  %1095 = vst.msk [vmem:[#allocation2 + $0x8] sm:$0xc0] %vm594, %v1093
  %1097 = vrot.lane.b32.xlu0 %v1090, 32
  %v1098 = vpop.permute.xlu0 %1097
  %1100 = vst.msk [vmem:[#allocation2] sm:$0x3] %vm600, %v1098
  %v1101 = vld [vmem:[#allocation2] sm:$0xff]
  %v1102 = vld [vmem:[#allocation2 + $0x8] sm:$0xff]
  %v1103 = vld [vmem:[%s5] sm:$0xff]
  %v1104 = vld [vmem:[%s5 + $0x8] sm:$0xff]
  %v1105 = vld [vmem:[%s5 + $0x10] sm:$0xff]
  %v1106 = vld [vmem:[%s5 + $0x18] sm:$0xff]
  %v1107 = vld [vmem:[%s7] sm:$0x1]
  %v1109 = vperm.slane %v1107, 0
  %v1112 = vsel %vm106, %v1101, 0
  %v1115 = vsel %vm106, %v1102, 0
  %1117 = vmatpush.msra.mxu0 0.0
  %1118 = vmatpush.msra.mxu0 0.0
  %1119 = vmatpush.msra.mxu0 0.0
  %1120 = vmatpush.msra.mxu0 0.0
  %1121 = vmatpush.msra.mxu0 0.0
  %1122 = vmatpush.msra.mxu0 0.0
  %1123 = vmatpush.msra.mxu0 0.0
  %1124 = vmatpush.msra.mxu0 0.0
  %1125 = vmatpush.msra.mxu0 0.0
  %1126 = vmatpush.msra.mxu0 0.0
  %1127 = vmatpush.msra.mxu0 0.0
  %1128 = vmatpush.msra.mxu0 0.0
  %1129 = vmatpush.msra.mxu0 %v1106
  %1130 = vmatpush.msra.mxu0 %v1105
  %1131 = vmatpush.msra.mxu0 %v1104
  %1132 = vmatpush.msra.mxu0 %v1103
  %1133 = vmatmul.f32.gmra.mxu0 %v1112
  %v1134 = vpop.f32.mrf.mxu0
  %v1135 = vadd.f32 %v1109, %v1134
  %1136 = vmatmul.f32.gmra.mxu0 %v1115
  %v1137 = vpop.f32.mrf.mxu0
  %v1138 = vadd.f32 %v1109, %v1137
  %1139 = vdwg.mxu0
  %v1140 = vld [vmem:[%s6] sm:$0xff]
  %v1141 = vld [vmem:[%s6 + $0x8] sm:$0xff]
  %v1142 = vld [vmem:[%s6 + $0x10] sm:$0xff]
  %v1143 = vld [vmem:[%s6 + $0x18] sm:$0xff]
  %1144 = vmatpush.msra.mxu0 0.0
  %1145 = vmatpush.msra.mxu0 0.0
  %1146 = vmatpush.msra.mxu0 0.0
  %1147 = vmatpush.msra.mxu0 0.0
  %1148 = vmatpush.msra.mxu0 0.0
  %1149 = vmatpush.msra.mxu0 0.0
  %1150 = vmatpush.msra.mxu0 0.0
  %1151 = vmatpush.msra.mxu0 0.0
  %1152 = vmatpush.msra.mxu0 0.0
  %1153 = vmatpush.msra.mxu0 0.0
  %1154 = vmatpush.msra.mxu0 0.0
  %1155 = vmatpush.msra.mxu0 0.0
  %1156 = vmatpush.msra.mxu0 %v1143
  %1157 = vmatpush.msra.mxu0 %v1142
  %1158 = vmatpush.msra.mxu0 %v1141
  %1159 = vmatpush.msra.mxu0 %v1140
  %1160 = vmatmul.f32.gmra.mxu0 %v108
  %v1161 = vpop.f32.mrf.mxu0
  %v1162 = vadd.f32 0.0, %v1161
  %1163 = vdwg.mxu0
  %v1164 = vadd.f32 %v1135, %v1162
  %v1166 = vrot.slane %v1162, 2
  %v1168 = vadd.f32 %v1138, %v1166
  %v1169 = vxor.u32 %v1164, 2147483648
  %v1170 = vmul.f32 %v1169, 1.442695
  %v1171 = vpow.pop %v1170
  %v1172 = vadd.f32 %v1171, 1.0
  %v1173 = vrcp.pop %v1172
  %v1174 = vmul.f32 %v1172, %v1173
  %v1175 = vsub.f32 1.0, %v1174
  %v1176 = vmul.f32 %v1173, %v1175
  %v1177 = vadd.f32 %v1173, %v1176
  %vm1178 = vweird.f32 %v1172
  %vm1179 = vweird.f32 %v1173
  %vm1180 = vmor %vm1178, %vm1179
  %v1181 = vsel %vm1180, %v1173, %v1177
  %v1182 = vand.u32 2147483647, %v1172
  %vm1183 = vcmp.eq.f32.partialorder %v1182, 8.507059e+37
  %v1184 = vand.u32 %v1172, 2147483648
  %v1185 = vor.u32 1.1754944e-38, %v1184
  %v1186 = vsel %vm1183, %v1185, %v1181
  %v1187 = vmul.f32 1.0, %v1186
  %v1188 = vtanh.pop %v1164
  %v1189 = vmul.f32 %v1187, 0.0
  %1191 = vrot.lane.b32.xlu0 %v1188, 96
  %v1192 = vpop.permute.xlu0 %1191
  %v1194 = vmul.f32 %v1187, %v1192
  %1196 = vrot.lane.b32.xlu0 %v1194, 16
  %v1197 = vpop.permute.xlu0 %1196
  %v1199 = vadd.f32 %v1189, %v1197
  %v1200 = vtanh.pop %v1199
  %1202 = vrot.lane.b32.xlu0 %v1200, 32
  %v1203 = vpop.permute.xlu0 %1202
  %v1205 = vmul.f32 %v1187, %v1203
  %v1206 = vxor.u32 %v1168, 2147483648
  %v1207 = vmul.f32 %v1206, 1.442695
  %v1208 = vpow.pop %v1207
  %v1209 = vadd.f32 %v1208, 1.0
  %v1210 = vrcp.pop %v1209
  %v1211 = vmul.f32 %v1209, %v1210
  %v1212 = vsub.f32 1.0, %v1211
  %v1213 = vmul.f32 %v1210, %v1212
  %v1214 = vadd.f32 %v1210, %v1213
  %vm1215 = vweird.f32 %v1209
  %vm1216 = vweird.f32 %v1210
  %vm1217 = vmor %vm1215, %vm1216
  %v1218 = vsel %vm1217, %v1210, %v1214
  %v1219 = vand.u32 2147483647, %v1209
  %vm1220 = vcmp.eq.f32.partialorder %v1219, 8.507059e+37
  %v1221 = vand.u32 %v1209, 2147483648
  %v1222 = vor.u32 1.1754944e-38, %v1221
  %v1223 = vsel %vm1220, %v1222, %v1218
  %v1224 = vmul.f32 1.0, %v1223
  %v1225 = vtanh.pop %v1168
  %v1226 = vmul.f32 %v1224, 0.0
  %1228 = vrot.lane.b32.xlu0 %v1225, 96
  %v1229 = vpop.permute.xlu0 %1228
  %v1231 = vmul.f32 %v1224, %v1229
  %1233 = vrot.lane.b32.xlu0 %v1231, 16
  %v1234 = vpop.permute.xlu0 %1233
  %v1236 = vadd.f32 %v1226, %v1234
  %v1237 = vtanh.pop %v1236
  %1239 = vrot.lane.b32.xlu0 %v1237, 32
  %v1240 = vpop.permute.xlu0 %1239
  %v1242 = vmul.f32 %v1224, %v1240
  %1244 = vrot.lane.b32.xlu0 %v1205, 80
  %v1245 = vpop.permute.xlu0 %1244
  %v1248 = vrot.slane %v1242, 6
  %1249 = vrot.lane.b32.xlu0 %v1248, 32
  %v1250 = vpop.permute.xlu0 %1249
  %v1252 = vsel %vm72, %v1245, %v1250
  %v1253 = vadd.f32 %v1252, 0.0
  %v1255 = vsel %vm106, %v1252, 0
  %1257 = vmatpush.msra.mxu0 0.0
  %1258 = vmatpush.msra.mxu0 0.0
  %1259 = vmatpush.msra.mxu0 0.0
  %1260 = vmatpush.msra.mxu0 0.0
  %1261 = vmatpush.msra.mxu0 0.0
  %1262 = vmatpush.msra.mxu0 0.0
  %1263 = vmatpush.msra.mxu0 0.0
  %1264 = vmatpush.msra.mxu0 0.0
  %1265 = vmatpush.msra.mxu0 0.0
  %1266 = vmatpush.msra.mxu0 0.0
  %1267 = vmatpush.msra.mxu0 0.0
  %1268 = vmatpush.msra.mxu0 0.0
  %1269 = vmatpush.msra.mxu0 %v1143
  %1270 = vmatpush.msra.mxu0 %v1142
  %1271 = vmatpush.msra.mxu0 %v1141
  %1272 = vmatpush.msra.mxu0 %v1140
  %1273 = vmatmul.f32.gmra.mxu0 %v1255
  %v1274 = vpop.f32.mrf.mxu0
  %v1275 = vadd.f32 0.0, %v1274
  %1276 = vdwg.mxu0
  %v1278 = vrot.slane %v1275, 6
  %v1280 = vadd.f32 %v1135, %v1278
  %v1281 = vrot.slane %v1275, 4
  %v1283 = vadd.f32 %v1138, %v1281
  %v1284 = vxor.u32 %v1280, 2147483648
  %v1285 = vmul.f32 %v1284, 1.442695
  %v1286 = vpow.pop %v1285
  %v1287 = vadd.f32 %v1286, 1.0
  %v1288 = vrcp.pop %v1287
  %v1289 = vmul.f32 %v1287, %v1288
  %v1290 = vsub.f32 1.0, %v1289
  %v1291 = vmul.f32 %v1288, %v1290
  %v1292 = vadd.f32 %v1288, %v1291
  %vm1293 = vweird.f32 %v1287
  %vm1294 = vweird.f32 %v1288
  %vm1295 = vmor %vm1293, %vm1294
  %v1296 = vsel %vm1295, %v1288, %v1292
  %v1297 = vand.u32 2147483647, %v1287
  %vm1298 = vcmp.eq.f32.partialorder %v1297, 8.507059e+37
  %v1299 = vand.u32 %v1287, 2147483648
  %v1300 = vor.u32 1.1754944e-38, %v1299
  %v1301 = vsel %vm1298, %v1300, %v1296
  %v1302 = vmul.f32 1.0, %v1301
  %v1303 = vtanh.pop %v1280
  %v1305 = vrot.slane %v1199, 6
  %v1307 = vmul.f32 %v1302, %v1305
  %1309 = vrot.lane.b32.xlu0 %v1303, 96
  %v1310 = vpop.permute.xlu0 %1309
  %v1312 = vmul.f32 %v1302, %v1310
  %1314 = vrot.lane.b32.xlu0 %v1312, 16
  %v1315 = vpop.permute.xlu0 %1314
  %v1317 = vadd.f32 %v1307, %v1315
  %v1318 = vtanh.pop %v1317
  %1320 = vrot.lane.b32.xlu0 %v1318, 32
  %v1321 = vpop.permute.xlu0 %1320
  %v1323 = vmul.f32 %v1302, %v1321
  %v1324 = vxor.u32 %v1283, 2147483648
  %v1325 = vmul.f32 %v1324, 1.442695
  %v1326 = vpow.pop %v1325
  %v1327 = vadd.f32 %v1326, 1.0
  %v1328 = vrcp.pop %v1327
  %v1329 = vmul.f32 %v1327, %v1328
  %v1330 = vsub.f32 1.0, %v1329
  %v1331 = vmul.f32 %v1328, %v1330
  %v1332 = vadd.f32 %v1328, %v1331
  %vm1333 = vweird.f32 %v1327
  %vm1334 = vweird.f32 %v1328
  %vm1335 = vmor %vm1333, %vm1334
  %v1336 = vsel %vm1335, %v1328, %v1332
  %v1337 = vand.u32 2147483647, %v1327
  %vm1338 = vcmp.eq.f32.partialorder %v1337, 8.507059e+37
  %v1339 = vand.u32 %v1327, 2147483648
  %v1340 = vor.u32 1.1754944e-38, %v1339
  %v1341 = vsel %vm1338, %v1340, %v1336
  %v1342 = vmul.f32 1.0, %v1341
  %v1343 = vtanh.pop %v1283
  %v1345 = vrot.slane %v1236, 2
  %v1347 = vmul.f32 %v1342, %v1345
  %1349 = vrot.lane.b32.xlu0 %v1343, 96
  %v1350 = vpop.permute.xlu0 %1349
  %v1352 = vmul.f32 %v1342, %v1350
  %1354 = vrot.lane.b32.xlu0 %v1352, 16
  %v1355 = vpop.permute.xlu0 %1354
  %v1357 = vadd.f32 %v1347, %v1355
  %v1358 = vtanh.pop %v1357
  %1360 = vrot.lane.b32.xlu0 %v1358, 32
  %v1361 = vpop.permute.xlu0 %1360
  %v1363 = vmul.f32 %v1342, %v1361
  %1365 = vrot.lane.b32.xlu0 %v1323, 80
  %v1366 = vpop.permute.xlu0 %1365
  %v1369 = vrot.slane %v1363, 2
  %1370 = vrot.lane.b32.xlu0 %v1369, 32
  %v1371 = vpop.permute.xlu0 %1370
  %v1373 = vsel %vm72, %v1366, %v1371
  %v1375 = vrot.slane %v1373, 2
  %v1377 = vadd.f32 %v1253, %v1375
  %v1378 = vsel %vm106, %v1375, 0
  %1380 = vmatpush.msra.mxu0 0.0
  %1381 = vmatpush.msra.mxu0 0.0
  %1382 = vmatpush.msra.mxu0 0.0
  %1383 = vmatpush.msra.mxu0 0.0
  %1384 = vmatpush.msra.mxu0 0.0
  %1385 = vmatpush.msra.mxu0 0.0
  %1386 = vmatpush.msra.mxu0 0.0
  %1387 = vmatpush.msra.mxu0 0.0
  %1388 = vmatpush.msra.mxu0 0.0
  %1389 = vmatpush.msra.mxu0 0.0
  %1390 = vmatpush.msra.mxu0 0.0
  %1391 = vmatpush.msra.mxu0 0.0
  %1392 = vmatpush.msra.mxu0 %v1143
  %1393 = vmatpush.msra.mxu0 %v1142
  %1394 = vmatpush.msra.mxu0 %v1141
  %1395 = vmatpush.msra.mxu0 %v1140
  %1396 = vmatmul.f32.gmra.mxu0 %v1378
  %v1397 = vpop.f32.mrf.mxu0
  %v1398 = vadd.f32 0.0, %v1397
  %1399 = vdwg.mxu0
  %v1401 = vrot.slane %v1398, 4
  %v1403 = vadd.f32 %v1135, %v1401
  %v1404 = vrot.slane %v1398, 6
  %v1406 = vadd.f32 %v1138, %v1404
  %v1407 = vxor.u32 %v1403, 2147483648
  %v1408 = vmul.f32 %v1407, 1.442695
  %v1409 = vpow.pop %v1408
  %v1410 = vadd.f32 %v1409, 1.0
  %v1411 = vrcp.pop %v1410
  %v1412 = vmul.f32 %v1410, %v1411
  %v1413 = vsub.f32 1.0, %v1412
  %v1414 = vmul.f32 %v1411, %v1413
  %v1415 = vadd.f32 %v1411, %v1414
  %vm1416 = vweird.f32 %v1410
  %vm1417 = vweird.f32 %v1411
  %vm1418 = vmor %vm1416, %vm1417
  %v1419 = vsel %vm1418, %v1411, %v1415
  %v1420 = vand.u32 2147483647, %v1410
  %vm1421 = vcmp.eq.f32.partialorder %v1420, 8.507059e+37
  %v1422 = vand.u32 %v1410, 2147483648
  %v1423 = vor.u32 1.1754944e-38, %v1422
  %v1424 = vsel %vm1421, %v1423, %v1419
  %v1425 = vmul.f32 1.0, %v1424
  %v1426 = vtanh.pop %v1403
  %v1428 = vrot.slane %v1317, 6
  %v1430 = vmul.f32 %v1425, %v1428
  %1432 = vrot.lane.b32.xlu0 %v1426, 96
  %v1433 = vpop.permute.xlu0 %1432
  %v1435 = vmul.f32 %v1425, %v1433
  %1437 = vrot.lane.b32.xlu0 %v1435, 16
  %v1438 = vpop.permute.xlu0 %1437
  %v1440 = vadd.f32 %v1430, %v1438
  %v1441 = vtanh.pop %v1440
  %1443 = vrot.lane.b32.xlu0 %v1441, 32
  %v1444 = vpop.permute.xlu0 %1443
  %v1446 = vmul.f32 %v1425, %v1444
  %v1447 = vxor.u32 %v1406, 2147483648
  %v1448 = vmul.f32 %v1447, 1.442695
  %v1449 = vpow.pop %v1448
  %v1450 = vadd.f32 %v1449, 1.0
  %v1451 = vrcp.pop %v1450
  %v1452 = vmul.f32 %v1450, %v1451
  %v1453 = vsub.f32 1.0, %v1452
  %v1454 = vmul.f32 %v1451, %v1453
  %v1455 = vadd.f32 %v1451, %v1454
  %vm1456 = vweird.f32 %v1450
  %vm1457 = vweird.f32 %v1451
  %vm1458 = vmor %vm1456, %vm1457
  %v1459 = vsel %vm1458, %v1451, %v1455
  %v1460 = vand.u32 2147483647, %v1450
  %vm1461 = vcmp.eq.f32.partialorder %v1460, 8.507059e+37
  %v1462 = vand.u32 %v1450, 2147483648
  %v1463 = vor.u32 1.1754944e-38, %v1462
  %v1464 = vsel %vm1461, %v1463, %v1459
  %v1465 = vmul.f32 1.0, %v1464
  %v1466 = vtanh.pop %v1406
  %v1468 = vrot.slane %v1357, 2
  %v1470 = vmul.f32 %v1465, %v1468
  %1472 = vrot.lane.b32.xlu0 %v1466, 96
  %v1473 = vpop.permute.xlu0 %1472
  %v1475 = vmul.f32 %v1465, %v1473
  %1477 = vrot.lane.b32.xlu0 %v1475, 16
  %v1478 = vpop.permute.xlu0 %1477
  %v1480 = vadd.f32 %v1470, %v1478
  %v1481 = vtanh.pop %v1480
  %1483 = vrot.lane.b32.xlu0 %v1481, 32
  %v1484 = vpop.permute.xlu0 %1483
  %v1486 = vmul.f32 %v1465, %v1484
  %1488 = vrot.lane.b32.xlu0 %v1446, 80
  %v1489 = vpop.permute.xlu0 %1488
  %v1492 = vrot.slane %v1486, 6
  %1493 = vrot.lane.b32.xlu0 %v1492, 32
  %v1494 = vpop.permute.xlu0 %1493
  %v1496 = vsel %vm72, %v1489, %v1494
  %v1498 = vrot.slane %v1496, 4
  %v1500 = vadd.f32 %v1377, %v1498
  %v1501 = vsel %vm106, %v1498, 0
  %1503 = vmatpush.msra.mxu0 0.0
  %1504 = vmatpush.msra.mxu0 0.0
  %1505 = vmatpush.msra.mxu0 0.0
  %1506 = vmatpush.msra.mxu0 0.0
  %1507 = vmatpush.msra.mxu0 0.0
  %1508 = vmatpush.msra.mxu0 0.0
  %1509 = vmatpush.msra.mxu0 0.0
  %1510 = vmatpush.msra.mxu0 0.0
  %1511 = vmatpush.msra.mxu0 0.0
  %1512 = vmatpush.msra.mxu0 0.0
  %1513 = vmatpush.msra.mxu0 0.0
  %1514 = vmatpush.msra.mxu0 0.0
  %1515 = vmatpush.msra.mxu0 %v1143
  %1516 = vmatpush.msra.mxu0 %v1142
  %1517 = vmatpush.msra.mxu0 %v1141
  %1518 = vmatpush.msra.mxu0 %v1140
  %1519 = vmatmul.f32.gmra.mxu0 %v1501
  %v1520 = vpop.f32.mrf.mxu0
  %v1521 = vadd.f32 0.0, %v1520
  %1522 = vdwg.mxu0
  %v1524 = vrot.slane %v1521, 2
  %v1526 = vadd.f32 %v1135, %v1524
  %v1527 = vadd.f32 %v1138, %v1521
  %v1528 = vxor.u32 %v1526, 2147483648
  %v1529 = vmul.f32 %v1528, 1.442695
  %v1530 = vpow.pop %v1529
  %v1531 = vadd.f32 %v1530, 1.0
  %v1532 = vrcp.pop %v1531
  %v1533 = vmul.f32 %v1531, %v1532
  %v1534 = vsub.f32 1.0, %v1533
  %v1535 = vmul.f32 %v1532, %v1534
  %v1536 = vadd.f32 %v1532, %v1535
  %vm1537 = vweird.f32 %v1531
  %vm1538 = vweird.f32 %v1532
  %vm1539 = vmor %vm1537, %vm1538
  %v1540 = vsel %vm1539, %v1532, %v1536
  %v1541 = vand.u32 2147483647, %v1531
  %vm1542 = vcmp.eq.f32.partialorder %v1541, 8.507059e+37
  %v1543 = vand.u32 %v1531, 2147483648
  %v1544 = vor.u32 1.1754944e-38, %v1543
  %v1545 = vsel %vm1542, %v1544, %v1540
  %v1546 = vmul.f32 1.0, %v1545
  %v1547 = vtanh.pop %v1526
  %v1549 = vrot.slane %v1440, 6
  %v1551 = vmul.f32 %v1546, %v1549
  %1553 = vrot.lane.b32.xlu0 %v1547, 96
  %v1554 = vpop.permute.xlu0 %1553
  %v1556 = vmul.f32 %v1546, %v1554
  %1558 = vrot.lane.b32.xlu0 %v1556, 16
  %v1559 = vpop.permute.xlu0 %1558
  %v1561 = vadd.f32 %v1551, %v1559
  %v1562 = vtanh.pop %v1561
  %1564 = vrot.lane.b32.xlu0 %v1562, 32
  %v1565 = vpop.permute.xlu0 %1564
  %v1567 = vmul.f32 %v1546, %v1565
  %v1568 = vxor.u32 %v1527, 2147483648
  %v1569 = vmul.f32 %v1568, 1.442695
  %v1570 = vpow.pop %v1569
  %v1571 = vadd.f32 %v1570, 1.0
  %v1572 = vrcp.pop %v1571
  %v1573 = vmul.f32 %v1571, %v1572
  %v1574 = vsub.f32 1.0, %v1573
  %v1575 = vmul.f32 %v1572, %v1574
  %v1576 = vadd.f32 %v1572, %v1575
  %vm1577 = vweird.f32 %v1571
  %vm1578 = vweird.f32 %v1572
  %vm1579 = vmor %vm1577, %vm1578
  %v1580 = vsel %vm1579, %v1572, %v1576
  %v1581 = vand.u32 2147483647, %v1571
  %vm1582 = vcmp.eq.f32.partialorder %v1581, 8.507059e+37
  %v1583 = vand.u32 %v1571, 2147483648
  %v1584 = vor.u32 1.1754944e-38, %v1583
  %v1585 = vsel %vm1582, %v1584, %v1580
  %v1586 = vmul.f32 1.0, %v1585
  %v1587 = vtanh.pop %v1527
  %v1589 = vrot.slane %v1480, 2
  %v1591 = vmul.f32 %v1586, %v1589
  %1593 = vrot.lane.b32.xlu0 %v1587, 96
  %v1594 = vpop.permute.xlu0 %1593
  %v1596 = vmul.f32 %v1586, %v1594
  %1598 = vrot.lane.b32.xlu0 %v1596, 16
  %v1599 = vpop.permute.xlu0 %1598
  %v1601 = vadd.f32 %v1591, %v1599
  %v1602 = vtanh.pop %v1601
  %1604 = vrot.lane.b32.xlu0 %v1602, 32
  %v1605 = vpop.permute.xlu0 %1604
  %v1607 = vmul.f32 %v1586, %v1605
  %1609 = vrot.lane.b32.xlu0 %v1567, 80
  %v1610 = vpop.permute.xlu0 %1609
  %v1613 = vrot.slane %v1607, 2
  %1614 = vrot.lane.b32.xlu0 %v1613, 32
  %v1615 = vpop.permute.xlu0 %1614
  %v1617 = vsel %vm72, %v1610, %v1615
  %v1619 = vrot.slane %v1617, 6
  %v1621 = vadd.f32 %v1500, %v1619
  %v1622 = vsel %vm106, %v1619, 0
  %1624 = vmatpush.msra.mxu0 0.0
  %1625 = vmatpush.msra.mxu0 0.0
  %1626 = vmatpush.msra.mxu0 0.0
  %1627 = vmatpush.msra.mxu0 0.0
  %1628 = vmatpush.msra.mxu0 0.0
  %1629 = vmatpush.msra.mxu0 0.0
  %1630 = vmatpush.msra.mxu0 0.0
  %1631 = vmatpush.msra.mxu0 0.0
  %1632 = vmatpush.msra.mxu0 0.0
  %1633 = vmatpush.msra.mxu0 0.0
  %1634 = vmatpush.msra.mxu0 0.0
  %1635 = vmatpush.msra.mxu0 0.0
  %1636 = vmatpush.msra.mxu0 %v1143
  %1637 = vmatpush.msra.mxu0 %v1142
  %1638 = vmatpush.msra.mxu0 %v1141
  %1639 = vmatpush.msra.mxu0 %v1140
  %1640 = vmatmul.f32.gmra.mxu0 %v1622
  %v1641 = vpop.f32.mrf.mxu0
  %v1642 = vadd.f32 0.0, %v1641
  %1643 = vdwg.mxu0
  %v1644 = vadd.f32 %v1138, %v1642
  %v1646 = vrot.slane %v1642, 2
  %v1648 = vadd.f32 %v1135, %v1646
  %v1649 = vxor.u32 %v1644, 2147483648
  %v1650 = vmul.f32 %v1649, 1.442695
  %v1651 = vpow.pop %v1650
  %v1652 = vadd.f32 %v1651, 1.0
  %v1653 = vrcp.pop %v1652
  %v1654 = vmul.f32 %v1652, %v1653
  %v1655 = vsub.f32 1.0, %v1654
  %v1656 = vmul.f32 %v1653, %v1655
  %v1657 = vadd.f32 %v1653, %v1656
  %vm1658 = vweird.f32 %v1652
  %vm1659 = vweird.f32 %v1653
  %vm1660 = vmor %vm1658, %vm1659
  %v1661 = vsel %vm1660, %v1653, %v1657
  %v1662 = vand.u32 2147483647, %v1652
  %vm1663 = vcmp.eq.f32.partialorder %v1662, 8.507059e+37
  %v1664 = vand.u32 %v1652, 2147483648
  %v1665 = vor.u32 1.1754944e-38, %v1664
  %v1666 = vsel %vm1663, %v1665, %v1661
  %v1667 = vmul.f32 1.0, %v1666
  %v1668 = vtanh.pop %v1644
  %v1670 = vrot.slane %v1561, 6
  %v1672 = vmul.f32 %v1667, %v1670
  %1674 = vrot.lane.b32.xlu0 %v1668, 96
  %v1675 = vpop.permute.xlu0 %1674
  %v1677 = vmul.f32 %v1667, %v1675
  %1679 = vrot.lane.b32.xlu0 %v1677, 16
  %v1680 = vpop.permute.xlu0 %1679
  %v1682 = vadd.f32 %v1672, %v1680
  %v1683 = vtanh.pop %v1682
  %1685 = vrot.lane.b32.xlu0 %v1683, 32
  %v1686 = vpop.permute.xlu0 %1685
  %v1688 = vmul.f32 %v1667, %v1686
  %v1689 = vxor.u32 %v1648, 2147483648
  %v1690 = vmul.f32 %v1689, 1.442695
  %v1691 = vpow.pop %v1690
  %v1692 = vadd.f32 %v1691, 1.0
  %v1693 = vrcp.pop %v1692
  %v1694 = vmul.f32 %v1692, %v1693
  %v1695 = vsub.f32 1.0, %v1694
  %v1696 = vmul.f32 %v1693, %v1695
  %v1697 = vadd.f32 %v1693, %v1696
  %vm1698 = vweird.f32 %v1692
  %vm1699 = vweird.f32 %v1693
  %vm1700 = vmor %vm1698, %vm1699
  %v1701 = vsel %vm1700, %v1693, %v1697
  %v1702 = vand.u32 2147483647, %v1692
  %vm1703 = vcmp.eq.f32.partialorder %v1702, 8.507059e+37
  %v1704 = vand.u32 %v1692, 2147483648
  %v1705 = vor.u32 1.1754944e-38, %v1704
  %v1706 = vsel %vm1703, %v1705, %v1701
  %v1707 = vmul.f32 1.0, %v1706
  %v1708 = vtanh.pop %v1648
  %v1710 = vrot.slane %v1601, 2
  %v1712 = vmul.f32 %v1707, %v1710
  %1714 = vrot.lane.b32.xlu0 %v1708, 96
  %v1715 = vpop.permute.xlu0 %1714
  %v1717 = vmul.f32 %v1707, %v1715
  %1719 = vrot.lane.b32.xlu0 %v1717, 16
  %v1720 = vpop.permute.xlu0 %1719
  %v1722 = vadd.f32 %v1712, %v1720
  %v1723 = vtanh.pop %v1722
  %1725 = vrot.lane.b32.xlu0 %v1723, 32
  %v1726 = vpop.permute.xlu0 %1725
  %v1728 = vmul.f32 %v1707, %v1726
  %1730 = vrot.lane.b32.xlu0 %v1688, 80
  %v1731 = vpop.permute.xlu0 %1730
  %v1734 = vrot.slane %v1728, 6
  %1735 = vrot.lane.b32.xlu0 %v1734, 32
  %v1736 = vpop.permute.xlu0 %1735
  %v1738 = vsel %vm72, %v1731, %v1736
  %v1739 = vadd.f32 %v1621, %v1738
  %v1741 = vsel %vm106, %v1738, 0
  %1743 = vmatpush.msra.mxu0 0.0
  %1744 = vmatpush.msra.mxu0 0.0
  %1745 = vmatpush.msra.mxu0 0.0
  %1746 = vmatpush.msra.mxu0 0.0
  %1747 = vmatpush.msra.mxu0 0.0
  %1748 = vmatpush.msra.mxu0 0.0
  %1749 = vmatpush.msra.mxu0 0.0
  %1750 = vmatpush.msra.mxu0 0.0
  %1751 = vmatpush.msra.mxu0 0.0
  %1752 = vmatpush.msra.mxu0 0.0
  %1753 = vmatpush.msra.mxu0 0.0
  %1754 = vmatpush.msra.mxu0 0.0
  %1755 = vmatpush.msra.mxu0 %v1143
  %1756 = vmatpush.msra.mxu0 %v1142
  %1757 = vmatpush.msra.mxu0 %v1141
  %1758 = vmatpush.msra.mxu0 %v1140
  %1759 = vmatmul.f32.gmra.mxu0 %v1741
  %v1760 = vpop.f32.mrf.mxu0
  %v1761 = vadd.f32 0.0, %v1760
  %1762 = vdwg.mxu0
  %v1764 = vrot.slane %v1761, 6
  %v1766 = vadd.f32 %v1138, %v1764
  %v1767 = vrot.slane %v1761, 4
  %v1769 = vadd.f32 %v1135, %v1767
  %v1770 = vxor.u32 %v1766, 2147483648
  %v1771 = vmul.f32 %v1770, 1.442695
  %v1772 = vpow.pop %v1771
  %v1773 = vadd.f32 %v1772, 1.0
  %v1774 = vrcp.pop %v1773
  %v1775 = vmul.f32 %v1773, %v1774
  %v1776 = vsub.f32 1.0, %v1775
  %v1777 = vmul.f32 %v1774, %v1776
  %v1778 = vadd.f32 %v1774, %v1777
  %vm1779 = vweird.f32 %v1773
  %vm1780 = vweird.f32 %v1774
  %vm1781 = vmor %vm1779, %vm1780
  %v1782 = vsel %vm1781, %v1774, %v1778
  %v1783 = vand.u32 2147483647, %v1773
  %vm1784 = vcmp.eq.f32.partialorder %v1783, 8.507059e+37
  %v1785 = vand.u32 %v1773, 2147483648
  %v1786 = vor.u32 1.1754944e-38, %v1785
  %v1787 = vsel %vm1784, %v1786, %v1782
  %v1788 = vmul.f32 1.0, %v1787
  %v1789 = vtanh.pop %v1766
  %v1791 = vrot.slane %v1682, 6
  %v1793 = vmul.f32 %v1788, %v1791
  %1795 = vrot.lane.b32.xlu0 %v1789, 96
  %v1796 = vpop.permute.xlu0 %1795
  %v1798 = vmul.f32 %v1788, %v1796
  %1800 = vrot.lane.b32.xlu0 %v1798, 16
  %v1801 = vpop.permute.xlu0 %1800
  %v1803 = vadd.f32 %v1793, %v1801
  %v1804 = vtanh.pop %v1803
  %1806 = vrot.lane.b32.xlu0 %v1804, 32
  %v1807 = vpop.permute.xlu0 %1806
  %v1809 = vmul.f32 %v1788, %v1807
  %v1810 = vxor.u32 %v1769, 2147483648
  %v1811 = vmul.f32 %v1810, 1.442695
  %v1812 = vpow.pop %v1811
  %v1813 = vadd.f32 %v1812, 1.0
  %v1814 = vrcp.pop %v1813
  %v1815 = vmul.f32 %v1813, %v1814
  %v1816 = vsub.f32 1.0, %v1815
  %v1817 = vmul.f32 %v1814, %v1816
  %v1818 = vadd.f32 %v1814, %v1817
  %vm1819 = vweird.f32 %v1813
  %vm1820 = vweird.f32 %v1814
  %vm1821 = vmor %vm1819, %vm1820
  %v1822 = vsel %vm1821, %v1814, %v1818
  %v1823 = vand.u32 2147483647, %v1813
  %vm1824 = vcmp.eq.f32.partialorder %v1823, 8.507059e+37
  %v1825 = vand.u32 %v1813, 2147483648
  %v1826 = vor.u32 1.1754944e-38, %v1825
  %v1827 = vsel %vm1824, %v1826, %v1822
  %v1828 = vmul.f32 1.0, %v1827
  %v1829 = vtanh.pop %v1769
  %v1831 = vrot.slane %v1722, 2
  %v1833 = vmul.f32 %v1828, %v1831
  %1835 = vrot.lane.b32.xlu0 %v1829, 96
  %v1836 = vpop.permute.xlu0 %1835
  %v1838 = vmul.f32 %v1828, %v1836
  %1840 = vrot.lane.b32.xlu0 %v1838, 16
  %v1841 = vpop.permute.xlu0 %1840
  %v1843 = vadd.f32 %v1833, %v1841
  %v1844 = vtanh.pop %v1843
  %1846 = vrot.lane.b32.xlu0 %v1844, 32
  %v1847 = vpop.permute.xlu0 %1846
  %v1849 = vmul.f32 %v1828, %v1847
  %1851 = vrot.lane.b32.xlu0 %v1809, 80
  %v1852 = vpop.permute.xlu0 %1851
  %v1855 = vrot.slane %v1849, 2
  %1856 = vrot.lane.b32.xlu0 %v1855, 32
  %v1857 = vpop.permute.xlu0 %1856
  %v1859 = vsel %vm72, %v1852, %v1857
  %v1861 = vrot.slane %v1859, 2
  %v1863 = vadd.f32 %v1739, %v1861
  %v1864 = vsel %vm106, %v1861, 0
  %1866 = vmatpush.msra.mxu0 0.0
  %1867 = vmatpush.msra.mxu0 0.0
  %1868 = vmatpush.msra.mxu0 0.0
  %1869 = vmatpush.msra.mxu0 0.0
  %1870 = vmatpush.msra.mxu0 0.0
  %1871 = vmatpush.msra.mxu0 0.0
  %1872 = vmatpush.msra.mxu0 0.0
  %1873 = vmatpush.msra.mxu0 0.0
  %1874 = vmatpush.msra.mxu0 0.0
  %1875 = vmatpush.msra.mxu0 0.0
  %1876 = vmatpush.msra.mxu0 0.0
  %1877 = vmatpush.msra.mxu0 0.0
  %1878 = vmatpush.msra.mxu0 %v1143
  %1879 = vmatpush.msra.mxu0 %v1142
  %1880 = vmatpush.msra.mxu0 %v1141
  %1881 = vmatpush.msra.mxu0 %v1140
  %1882 = vmatmul.f32.gmra.mxu0 %v1864
  %v1883 = vpop.f32.mrf.mxu0
  %v1884 = vadd.f32 0.0, %v1883
  %1885 = vdwg.mxu0
  %v1887 = vrot.slane %v1884, 4
  %v1889 = vadd.f32 %v1138, %v1887
  %v1890 = vrot.slane %v1884, 6
  %v1892 = vadd.f32 %v1135, %v1890
  %v1893 = vxor.u32 %v1889, 2147483648
  %v1894 = vmul.f32 %v1893, 1.442695
  %v1895 = vpow.pop %v1894
  %v1896 = vadd.f32 %v1895, 1.0
  %v1897 = vrcp.pop %v1896
  %v1898 = vmul.f32 %v1896, %v1897
  %v1899 = vsub.f32 1.0, %v1898
  %v1900 = vmul.f32 %v1897, %v1899
  %v1901 = vadd.f32 %v1897, %v1900
  %vm1902 = vweird.f32 %v1896
  %vm1903 = vweird.f32 %v1897
  %vm1904 = vmor %vm1902, %vm1903
  %v1905 = vsel %vm1904, %v1897, %v1901
  %v1906 = vand.u32 2147483647, %v1896
  %vm1907 = vcmp.eq.f32.partialorder %v1906, 8.507059e+37
  %v1908 = vand.u32 %v1896, 2147483648
  %v1909 = vor.u32 1.1754944e-38, %v1908
  %v1910 = vsel %vm1907, %v1909, %v1905
  %v1911 = vmul.f32 1.0, %v1910
  %v1912 = vtanh.pop %v1889
  %v1914 = vrot.slane %v1803, 6
  %v1916 = vmul.f32 %v1911, %v1914
  %1918 = vrot.lane.b32.xlu0 %v1912, 96
  %v1919 = vpop.permute.xlu0 %1918
  %v1921 = vmul.f32 %v1911, %v1919
  %1923 = vrot.lane.b32.xlu0 %v1921, 16
  %v1924 = vpop.permute.xlu0 %1923
  %v1926 = vadd.f32 %v1916, %v1924
  %v1927 = vtanh.pop %v1926
  %1929 = vrot.lane.b32.xlu0 %v1927, 32
  %v1930 = vpop.permute.xlu0 %1929
  %v1932 = vmul.f32 %v1911, %v1930
  %v1933 = vxor.u32 %v1892, 2147483648
  %v1934 = vmul.f32 %v1933, 1.442695
  %v1935 = vpow.pop %v1934
  %v1936 = vadd.f32 %v1935, 1.0
  %v1937 = vrcp.pop %v1936
  %v1938 = vmul.f32 %v1936, %v1937
  %v1939 = vsub.f32 1.0, %v1938
  %v1940 = vmul.f32 %v1937, %v1939
  %v1941 = vadd.f32 %v1937, %v1940
  %vm1942 = vweird.f32 %v1936
  %vm1943 = vweird.f32 %v1937
  %vm1944 = vmor %vm1942, %vm1943
  %v1945 = vsel %vm1944, %v1937, %v1941
  %v1946 = vand.u32 2147483647, %v1936
  %vm1947 = vcmp.eq.f32.partialorder %v1946, 8.507059e+37
  %v1948 = vand.u32 %v1936, 2147483648
  %v1949 = vor.u32 1.1754944e-38, %v1948
  %v1950 = vsel %vm1947, %v1949, %v1945
  %v1951 = vmul.f32 1.0, %v1950
  %v1952 = vtanh.pop %v1892
  %v1954 = vrot.slane %v1843, 2
  %v1956 = vmul.f32 %v1951, %v1954
  %1958 = vrot.lane.b32.xlu0 %v1952, 96
  %v1959 = vpop.permute.xlu0 %1958
  %v1961 = vmul.f32 %v1951, %v1959
  %1963 = vrot.lane.b32.xlu0 %v1961, 16
  %v1964 = vpop.permute.xlu0 %1963
  %v1966 = vadd.f32 %v1956, %v1964
  %v1967 = vtanh.pop %v1966
  %1969 = vrot.lane.b32.xlu0 %v1967, 32
  %v1970 = vpop.permute.xlu0 %1969
  %v1972 = vmul.f32 %v1951, %v1970
  %1974 = vrot.lane.b32.xlu0 %v1932, 80
  %v1975 = vpop.permute.xlu0 %1974
  %v1978 = vrot.slane %v1972, 6
  %1979 = vrot.lane.b32.xlu0 %v1978, 32
  %v1980 = vpop.permute.xlu0 %1979
  %v1982 = vsel %vm72, %v1975, %v1980
  %v1984 = vrot.slane %v1982, 4
  %v1986 = vadd.f32 %v1863, %v1984
  %v1987 = vsel %vm106, %v1984, 0
  %1989 = vmatpush.msra.mxu0 0.0
  %1990 = vmatpush.msra.mxu0 0.0
  %1991 = vmatpush.msra.mxu0 0.0
  %1992 = vmatpush.msra.mxu0 0.0
  %1993 = vmatpush.msra.mxu0 0.0
  %1994 = vmatpush.msra.mxu0 0.0
  %1995 = vmatpush.msra.mxu0 0.0
  %1996 = vmatpush.msra.mxu0 0.0
  %1997 = vmatpush.msra.mxu0 0.0
  %1998 = vmatpush.msra.mxu0 0.0
  %1999 = vmatpush.msra.mxu0 0.0
  %2000 = vmatpush.msra.mxu0 0.0
  %2001 = vmatpush.msra.mxu0 %v1143
  %2002 = vmatpush.msra.mxu0 %v1142
  %2003 = vmatpush.msra.mxu0 %v1141
  %2004 = vmatpush.msra.mxu0 %v1140
  %2005 = vmatmul.f32.gmra.mxu0 %v1987
  %v2006 = vpop.f32.mrf.mxu0
  %v2007 = vadd.f32 0.0, %v2006
  %2008 = vdwg.mxu0
  %v2010 = vrot.slane %v2007, 2
  %v2012 = vadd.f32 %v1138, %v2010
  %v2013 = vadd.f32 %v1135, %v2007
  %v2014 = vxor.u32 %v2012, 2147483648
  %v2015 = vmul.f32 %v2014, 1.442695
  %v2016 = vpow.pop %v2015
  %v2017 = vadd.f32 %v2016, 1.0
  %v2018 = vrcp.pop %v2017
  %v2019 = vmul.f32 %v2017, %v2018
  %v2020 = vsub.f32 1.0, %v2019
  %v2021 = vmul.f32 %v2018, %v2020
  %v2022 = vadd.f32 %v2018, %v2021
  %vm2023 = vweird.f32 %v2017
  %vm2024 = vweird.f32 %v2018
  %vm2025 = vmor %vm2023, %vm2024
  %v2026 = vsel %vm2025, %v2018, %v2022
  %v2027 = vand.u32 2147483647, %v2017
  %vm2028 = vcmp.eq.f32.partialorder %v2027, 8.507059e+37
  %v2029 = vand.u32 %v2017, 2147483648
  %v2030 = vor.u32 1.1754944e-38, %v2029
  %v2031 = vsel %vm2028, %v2030, %v2026
  %v2032 = vmul.f32 1.0, %v2031
  %v2033 = vtanh.pop %v2012
  %v2035 = vrot.slane %v1926, 6
  %v2037 = vmul.f32 %v2032, %v2035
  %2039 = vrot.lane.b32.xlu0 %v2033, 96
  %v2040 = vpop.permute.xlu0 %2039
  %v2042 = vmul.f32 %v2032, %v2040
  %2044 = vrot.lane.b32.xlu0 %v2042, 16
  %v2045 = vpop.permute.xlu0 %2044
  %v2047 = vadd.f32 %v2037, %v2045
  %v2048 = vtanh.pop %v2047
  %2050 = vrot.lane.b32.xlu0 %v2048, 32
  %v2051 = vpop.permute.xlu0 %2050
  %v2053 = vmul.f32 %v2032, %v2051
  %v2054 = vxor.u32 %v2013, 2147483648
  %v2055 = vmul.f32 %v2054, 1.442695
  %v2056 = vpow.pop %v2055
  %v2057 = vadd.f32 %v2056, 1.0
  %v2058 = vrcp.pop %v2057
  %v2059 = vmul.f32 %v2057, %v2058
  %v2060 = vsub.f32 1.0, %v2059
  %v2061 = vmul.f32 %v2058, %v2060
  %v2062 = vadd.f32 %v2058, %v2061
  %vm2063 = vweird.f32 %v2057
  %vm2064 = vweird.f32 %v2058
  %vm2065 = vmor %vm2063, %vm2064
  %v2066 = vsel %vm2065, %v2058, %v2062
  %v2067 = vand.u32 2147483647, %v2057
  %vm2068 = vcmp.eq.f32.partialorder %v2067, 8.507059e+37
  %v2069 = vand.u32 %v2057, 2147483648
  %v2070 = vor.u32 1.1754944e-38, %v2069
  %v2071 = vsel %vm2068, %v2070, %v2066
  %v2072 = vmul.f32 1.0, %v2071
  %v2073 = vtanh.pop %v2013
  %v2075 = vrot.slane %v1966, 2
  %v2077 = vmul.f32 %v2072, %v2075
  %2079 = vrot.lane.b32.xlu0 %v2073, 96
  %v2080 = vpop.permute.xlu0 %2079
  %v2082 = vmul.f32 %v2072, %v2080
  %2084 = vrot.lane.b32.xlu0 %v2082, 16
  %v2085 = vpop.permute.xlu0 %2084
  %v2087 = vadd.f32 %v2077, %v2085
  %v2088 = vtanh.pop %v2087
  %2090 = vrot.lane.b32.xlu0 %v2088, 32
  %v2091 = vpop.permute.xlu0 %2090
  %v2093 = vmul.f32 %v2072, %v2091
  %2095 = vrot.lane.b32.xlu0 %v2053, 80
  %v2096 = vpop.permute.xlu0 %2095
  %v2099 = vrot.slane %v2093, 2
  %2100 = vrot.lane.b32.xlu0 %v2099, 32
  %v2101 = vpop.permute.xlu0 %2100
  %v2103 = vsel %vm72, %v2096, %v2101
  %v2105 = vrot.slane %v2103, 6
  %v2107 = vadd.f32 %v1986, %v2105
  %v2108 = vld [vmem:[%s10] sm:$0xff]
  %v2109 = vld [vmem:[%s10 + $0x8] sm:$0xff]
  %v2110 = vld [vmem:[%s10 + $0x10] sm:$0xff]
  %v2111 = vld [vmem:[%s10 + $0x18] sm:$0xff]
  %v2112 = vld [vmem:[%s12] sm:$0xff]
  %v2113 = vld [vmem:[%s12 + $0x8] sm:$0xff]
  %v2114 = vld [vmem:[%s12 + $0x10] sm:$0xff]
  %v2115 = vld [vmem:[%s12 + $0x18] sm:$0xff]
  %v2116 = vld [vmem:[%s13] sm:$0xff]
  %v2117 = vld [vmem:[%s13 + $0x8] sm:$0xff]
  %v2118 = vld [vmem:[%s13 + $0x10] sm:$0xff]
  %v2119 = vld [vmem:[%s13 + $0x18] sm:$0xff]
  %v2120 = vld [vmem:[%s14] sm:$0x1]
  %v2121 = vld [vmem:[%s1] sm:$0xff]
  %v2122 = vld [vmem:[%s1 + $0x8] sm:$0xf]
  %v2123 = vld [vmem:[%s8] sm:$0xff]
  %v2124 = vld [vmem:[%s8 + $0x8] sm:$0xff]
  %v2125 = vld [vmem:[%s11] sm:$0x1]
  %v2127 = vperm.slane %v2125, 0
  %v2130 = vsel %vm72, %v2121, 0
  %v2133 = vsel %vm72, %v2122, 0
  %2135 = vmatpush.msra.mxu0 0.0
  %2136 = vmatpush.msra.mxu0 0.0
  %2137 = vmatpush.msra.mxu0 0.0
  %2138 = vmatpush.msra.mxu0 0.0
  %2139 = vmatpush.msra.mxu0 0.0
  %2140 = vmatpush.msra.mxu0 0.0
  %2141 = vmatpush.msra.mxu0 0.0
  %2142 = vmatpush.msra.mxu0 0.0
  %2143 = vmatpush.msra.mxu0 0.0
  %2144 = vmatpush.msra.mxu0 0.0
  %2145 = vmatpush.msra.mxu0 0.0
  %2146 = vmatpush.msra.mxu0 0.0
  %2147 = vmatpush.msra.mxu0 0.0
  %2148 = vmatpush.msra.mxu0 0.0
  %2149 = vmatpush.msra.mxu0 %v2124
  %2150 = vmatpush.msra.mxu0 %v2123
  %2151 = vmatmul.f32.gmra.mxu0 %v2130
  %v2152 = vpop.f32.mrf.mxu0
  %v2153 = vadd.f32 %v2127, %v2152
  %2154 = vmatmul.f32.gmra.mxu0 %v2133
  %v2155 = vpop.f32.mrf.mxu0
  %v2156 = vadd.f32 %v2127, %v2155
  %2157 = vdwg.mxu0
  %v2158 = vld [vmem:[%s9] sm:$0xff]
  %v2159 = vld [vmem:[%s9 + $0x8] sm:$0xff]
  %v2160 = vld [vmem:[%s9 + $0x10] sm:$0xff]
  %v2161 = vld [vmem:[%s9 + $0x18] sm:$0xff]
  %v2163 = vsel %vm106, %v2107, 0
  %2165 = vmatpush.msra.mxu0 0.0
  %2166 = vmatpush.msra.mxu0 0.0
  %2167 = vmatpush.msra.mxu0 0.0
  %2168 = vmatpush.msra.mxu0 0.0
  %2169 = vmatpush.msra.mxu0 0.0
  %2170 = vmatpush.msra.mxu0 0.0
  %2171 = vmatpush.msra.mxu0 0.0
  %2172 = vmatpush.msra.mxu0 0.0
  %2173 = vmatpush.msra.mxu0 0.0
  %2174 = vmatpush.msra.mxu0 0.0
  %2175 = vmatpush.msra.mxu0 0.0
  %2176 = vmatpush.msra.mxu0 0.0
  %2177 = vmatpush.msra.mxu0 %v2161
  %2178 = vmatpush.msra.mxu0 %v2160
  %2179 = vmatpush.msra.mxu0 %v2159
  %2180 = vmatpush.msra.mxu0 %v2158
  %2181 = vmatmul.f32.gmra.mxu0 %v2163
  %v2182 = vpop.f32.mrf.mxu0
  %v2183 = vadd.f32 0.0, %v2182
  %2184 = vdwg.mxu0
  %v2185 = vadd.f32 %v2153, %v2183
  %v2186 = vld [vmem:[%s17] sm:$0x3]
  %v2188 = vsel %vm106, %v2186, 0
  %2190 = vmatpush.msra.mxu0 0.0
  %2191 = vmatpush.msra.mxu0 0.0
  %2192 = vmatpush.msra.mxu0 0.0
  %2193 = vmatpush.msra.mxu0 0.0
  %2194 = vmatpush.msra.mxu0 0.0
  %2195 = vmatpush.msra.mxu0 0.0
  %2196 = vmatpush.msra.mxu0 0.0
  %2197 = vmatpush.msra.mxu0 0.0
  %2198 = vmatpush.msra.mxu0 0.0
  %2199 = vmatpush.msra.mxu0 0.0
  %2200 = vmatpush.msra.mxu0 0.0
  %2201 = vmatpush.msra.mxu0 0.0
  %2202 = vmatpush.msra.mxu0 %v2111
  %2203 = vmatpush.msra.mxu0 %v2110
  %2204 = vmatpush.msra.mxu0 %v2109
  %2205 = vmatpush.msra.mxu0 %v2108
  %2206 = vmatmul.f32.gmra.mxu0 %v2188
  %v2207 = vpop.f32.mrf.mxu0
  %v2208 = vadd.f32 0.0, %v2207
  %2209 = vdwg.mxu0
  %v2210 = vadd.f32 %v2185, %v2208
  %v2211 = vld [vmem:[%s18] sm:$0x3]
  %v2212 = vxor.u32 %v2210, 2147483648
  %v2213 = vmul.f32 %v2212, 1.442695
  %v2214 = vpow.pop %v2213
  %v2215 = vadd.f32 %v2214, 1.0
  %v2216 = vrcp.pop %v2215
  %v2217 = vmul.f32 %v2215, %v2216
  %v2218 = vsub.f32 1.0, %v2217
  %v2219 = vmul.f32 %v2216, %v2218
  %v2220 = vadd.f32 %v2216, %v2219
  %vm2221 = vweird.f32 %v2215
  %vm2222 = vweird.f32 %v2216
  %vm2223 = vmor %vm2221, %vm2222
  %v2224 = vsel %vm2223, %v2216, %v2220
  %v2225 = vand.u32 2147483647, %v2215
  %vm2226 = vcmp.eq.f32.partialorder %v2225, 8.507059e+37
  %v2227 = vand.u32 %v2215, 2147483648
  %v2228 = vor.u32 1.1754944e-38, %v2227
  %v2229 = vsel %vm2226, %v2228, %v2224
  %v2230 = vmul.f32 1.0, %v2229
  %v2231 = vtanh.pop %v2210
  %2233 = vrot.lane.b32.xlu0 %v2211, 32
  %v2234 = vpop.permute.xlu0 %2233
  %v2236 = vmul.f32 %v2230, %v2234
  %2238 = vrot.lane.b32.xlu0 %v2231, 64
  %v2239 = vpop.permute.xlu0 %2238
  %v2241 = vmul.f32 %v2230, %v2239
  %2243 = vrot.lane.b32.xlu0 %v2241, 32
  %v2244 = vpop.permute.xlu0 %2243
  %v2246 = vadd.f32 %v2236, %v2244
  %v2247 = vtanh.pop %v2246
  %2249 = vrot.lane.b32.xlu0 %v2247, 64
  %v2250 = vpop.permute.xlu0 %2249
  %v2252 = vmul.f32 %v2230, %v2250
  %s2253 = scalar_lea.vmem %s17, 2
  %v2254 = vld [vmem:[%s2253] sm:$0x3]
  %v2256 = vsel %vm106, %v2254, 0
  %2258 = vmatpush.msra.mxu0 0.0
  %2259 = vmatpush.msra.mxu0 0.0
  %2260 = vmatpush.msra.mxu0 0.0
  %2261 = vmatpush.msra.mxu0 0.0
  %2262 = vmatpush.msra.mxu0 0.0
  %2263 = vmatpush.msra.mxu0 0.0
  %2264 = vmatpush.msra.mxu0 0.0
  %2265 = vmatpush.msra.mxu0 0.0
  %2266 = vmatpush.msra.mxu0 0.0
  %2267 = vmatpush.msra.mxu0 0.0
  %2268 = vmatpush.msra.mxu0 0.0
  %2269 = vmatpush.msra.mxu0 0.0
  %2270 = vmatpush.msra.mxu0 %v2119
  %2271 = vmatpush.msra.mxu0 %v2118
  %2272 = vmatpush.msra.mxu0 %v2117
  %2273 = vmatpush.msra.mxu0 %v2116
  %2274 = vmatmul.f32.gmra.mxu0 %v2256
  %v2275 = vpop.f32.mrf.mxu0
  %v2276 = vadd.f32 0.0, %v2275
  %2277 = vdwg.mxu0
  %2279 = vrot.lane.b32.xlu0 %v2252, 32
  %v2280 = vpop.permute.xlu0 %2279
  %v2281 = vsel %vm106, %v2280, 0
  %2283 = vmatpush.msra.mxu0 0.0
  %2284 = vmatpush.msra.mxu0 0.0
  %2285 = vmatpush.msra.mxu0 0.0
  %2286 = vmatpush.msra.mxu0 0.0
  %2287 = vmatpush.msra.mxu0 0.0
  %2288 = vmatpush.msra.mxu0 0.0
  %2289 = vmatpush.msra.mxu0 0.0
  %2290 = vmatpush.msra.mxu0 0.0
  %2291 = vmatpush.msra.mxu0 0.0
  %2292 = vmatpush.msra.mxu0 0.0
  %2293 = vmatpush.msra.mxu0 0.0
  %2294 = vmatpush.msra.mxu0 0.0
  %2295 = vmatpush.msra.mxu0 %v2115
  %2296 = vmatpush.msra.mxu0 %v2114
  %2297 = vmatpush.msra.mxu0 %v2113
  %2298 = vmatpush.msra.mxu0 %v2112
  %2299 = vmatmul.f32.gmra.mxu0 %v2281
  %v2300 = vpop.f32.mrf.mxu0
  %v2301 = vadd.f32 %v2276, %v2300
  %2302 = vdwg.mxu0
  %v2304 = vperm.slane %v2120, 0
  %v2306 = vadd.f32 %v2301, %v2304
  %s2307 = scalar_lea.vmem %s18, 2
  %v2308 = vld [vmem:[%s2307] sm:$0x3]
  %v2309 = vxor.u32 %v2306, 2147483648
  %v2310 = vmul.f32 %v2309, 1.442695
  %v2311 = vpow.pop %v2310
  %v2312 = vadd.f32 %v2311, 1.0
  %v2313 = vrcp.pop %v2312
  %v2314 = vmul.f32 %v2312, %v2313
  %v2315 = vsub.f32 1.0, %v2314
  %v2316 = vmul.f32 %v2313, %v2315
  %v2317 = vadd.f32 %v2313, %v2316
  %vm2318 = vweird.f32 %v2312
  %vm2319 = vweird.f32 %v2313
  %vm2320 = vmor %vm2318, %vm2319
  %v2321 = vsel %vm2320, %v2313, %v2317
  %v2322 = vand.u32 2147483647, %v2312
  %vm2323 = vcmp.eq.f32.partialorder %v2322, 8.507059e+37
  %v2324 = vand.u32 %v2312, 2147483648
  %v2325 = vor.u32 1.1754944e-38, %v2324
  %v2326 = vsel %vm2323, %v2325, %v2321
  %v2327 = vmul.f32 1.0, %v2326
  %v2328 = vtanh.pop %v2306
  %2330 = vrot.lane.b32.xlu0 %v2308, 32
  %v2331 = vpop.permute.xlu0 %2330
  %v2333 = vmul.f32 %v2327, %v2331
  %2335 = vrot.lane.b32.xlu0 %v2328, 64
  %v2336 = vpop.permute.xlu0 %2335
  %v2338 = vmul.f32 %v2327, %v2336
  %2340 = vrot.lane.b32.xlu0 %v2338, 32
  %v2341 = vpop.permute.xlu0 %2340
  %v2343 = vadd.f32 %v2333, %v2341
  %v2344 = vtanh.pop %v2343
  %2346 = vrot.lane.b32.xlu0 %v2344, 64
  %v2347 = vpop.permute.xlu0 %2346
  %v2349 = vmul.f32 %v2327, %v2347
  %2351 = vrot.lane.b32.xlu0 %v2246, 96
  %v2352 = vpop.permute.xlu0 %2351
  %2354 = vrot.lane.b32.xlu0 %v2252, 96
  %v2355 = vpop.permute.xlu0 %2354
  %v2357 = vsel %vm106, %v2352, %v2343
  %vm2358 = vcmask 523264
  %v2359 = vsel %vm2358, %v2357, %v2355
  %vm2360 = vcmask 785408
  %v2361 = vsel %vm2360, %v2359, %v2349
  %2362 = vst [vmem:[%s20] sm:$0x3] %v2361
  %2363 = vmatpush.msra.mxu0 0.0
  %2364 = vmatpush.msra.mxu0 0.0
  %2365 = vmatpush.msra.mxu0 0.0
  %2366 = vmatpush.msra.mxu0 0.0
  %2367 = vmatpush.msra.mxu0 0.0
  %2368 = vmatpush.msra.mxu0 0.0
  %2369 = vmatpush.msra.mxu0 0.0
  %2370 = vmatpush.msra.mxu0 0.0
  %2371 = vmatpush.msra.mxu0 0.0
  %2372 = vmatpush.msra.mxu0 0.0
  %2373 = vmatpush.msra.mxu0 0.0
  %2374 = vmatpush.msra.mxu0 0.0
  %2375 = vmatpush.msra.mxu0 %v2111
  %2376 = vmatpush.msra.mxu0 %v2110
  %2377 = vmatpush.msra.mxu0 %v2109
  %2378 = vmatpush.msra.mxu0 %v2108
  %2379 = vmatmul.f32.gmra.mxu0 %v2281
  %v2380 = vpop.f32.mrf.mxu0
  %v2381 = vadd.f32 0.0, %v2380
  %2382 = vdwg.mxu0
  %v2383 = vadd.f32 %v2183, %v2381
  %2385 = vrot.lane.b32.xlu0 %v2349, 32
  %v2386 = vpop.permute.xlu0 %2385
  %v2387 = vsel %vm106, %v2386, 0
  %2389 = vmatpush.msra.mxu0 0.0
  %2390 = vmatpush.msra.mxu0 0.0
  %2391 = vmatpush.msra.mxu0 0.0
  %2392 = vmatpush.msra.mxu0 0.0
  %2393 = vmatpush.msra.mxu0 0.0
  %2394 = vmatpush.msra.mxu0 0.0
  %2395 = vmatpush.msra.mxu0 0.0
  %2396 = vmatpush.msra.mxu0 0.0
  %2397 = vmatpush.msra.mxu0 0.0
  %2398 = vmatpush.msra.mxu0 0.0
  %2399 = vmatpush.msra.mxu0 0.0
  %2400 = vmatpush.msra.mxu0 0.0
  %2401 = vmatpush.msra.mxu0 %v2119
  %2402 = vmatpush.msra.mxu0 %v2118
  %2403 = vmatpush.msra.mxu0 %v2117
  %2404 = vmatpush.msra.mxu0 %v2116
  %2405 = vmatmul.f32.gmra.mxu0 %v2387
  %v2406 = vpop.f32.mrf.mxu0
  %v2407 = vadd.f32 %v2304, %v2406
  %2408 = vdwg.mxu0
  %v2410 = vrot.slane %v2383, 6
  %v2412 = vadd.f32 %v2153, %v2410
  %v2413 = vxor.u32 %v2412, 2147483648
  %v2414 = vmul.f32 %v2413, 1.442695
  %v2415 = vpow.pop %v2414
  %v2416 = vadd.f32 %v2415, 1.0
  %v2417 = vrcp.pop %v2416
  %v2418 = vmul.f32 %v2416, %v2417
  %v2419 = vsub.f32 1.0, %v2418
  %v2420 = vmul.f32 %v2417, %v2419
  %v2421 = vadd.f32 %v2417, %v2420
  %vm2422 = vweird.f32 %v2416
  %vm2423 = vweird.f32 %v2417
  %vm2424 = vmor %vm2422, %vm2423
  %v2425 = vsel %vm2424, %v2417, %v2421
  %v2426 = vand.u32 2147483647, %v2416
  %vm2427 = vcmp.eq.f32.partialorder %v2426, 8.507059e+37
  %v2428 = vand.u32 %v2416, 2147483648
  %v2429 = vor.u32 1.1754944e-38, %v2428
  %v2430 = vsel %vm2427, %v2429, %v2425
  %v2431 = vmul.f32 1.0, %v2430
  %v2432 = vtanh.pop %v2412
  %v2433 = vrot.slane %v2246, 6
  %v2435 = vmul.f32 %v2431, %v2433
  %2437 = vrot.lane.b32.xlu0 %v2432, 64
  %v2438 = vpop.permute.xlu0 %2437
  %v2440 = vmul.f32 %v2431, %v2438
  %2442 = vrot.lane.b32.xlu0 %v2440, 32
  %v2443 = vpop.permute.xlu0 %2442
  %v2445 = vadd.f32 %v2435, %v2443
  %v2446 = vtanh.pop %v2445
  %2448 = vrot.lane.b32.xlu0 %v2446, 64
  %v2449 = vpop.permute.xlu0 %2448
  %v2451 = vmul.f32 %v2431, %v2449
  %v2453 = vrot.slane %v2451, 2
  %2454 = vrot.lane.b32.xlu0 %v2453, 32
  %v2455 = vpop.permute.xlu0 %2454
  %v2456 = vsel %vm106, %v2455, 0
  %2458 = vmatpush.msra.mxu0 0.0
  %2459 = vmatpush.msra.mxu0 0.0
  %2460 = vmatpush.msra.mxu0 0.0
  %2461 = vmatpush.msra.mxu0 0.0
  %2462 = vmatpush.msra.mxu0 0.0
  %2463 = vmatpush.msra.mxu0 0.0
  %2464 = vmatpush.msra.mxu0 0.0
  %2465 = vmatpush.msra.mxu0 0.0
  %2466 = vmatpush.msra.mxu0 0.0
  %2467 = vmatpush.msra.mxu0 0.0
  %2468 = vmatpush.msra.mxu0 0.0
  %2469 = vmatpush.msra.mxu0 0.0
  %2470 = vmatpush.msra.mxu0 %v2115
  %2471 = vmatpush.msra.mxu0 %v2114
  %2472 = vmatpush.msra.mxu0 %v2113
  %2473 = vmatpush.msra.mxu0 %v2112
  %2474 = vmatmul.f32.gmra.mxu0 %v2456
  %v2475 = vpop.f32.mrf.mxu0
  %v2476 = vadd.f32 %v2407, %v2475
  %2477 = vdwg.mxu0
  %v2478 = vxor.u32 %v2476, 2147483648
  %v2479 = vmul.f32 %v2478, 1.442695
  %v2480 = vpow.pop %v2479
  %v2481 = vadd.f32 %v2480, 1.0
  %v2482 = vrcp.pop %v2481
  %v2483 = vmul.f32 %v2481, %v2482
  %v2484 = vsub.f32 1.0, %v2483
  %v2485 = vmul.f32 %v2482, %v2484
  %v2486 = vadd.f32 %v2482, %v2485
  %vm2487 = vweird.f32 %v2481
  %vm2488 = vweird.f32 %v2482
  %vm2489 = vmor %vm2487, %vm2488
  %v2490 = vsel %vm2489, %v2482, %v2486
  %v2491 = vand.u32 2147483647, %v2481
  %vm2492 = vcmp.eq.f32.partialorder %v2491, 8.507059e+37
  %v2493 = vand.u32 %v2481, 2147483648
  %v2494 = vor.u32 1.1754944e-38, %v2493
  %v2495 = vsel %vm2492, %v2494, %v2490
  %v2496 = vmul.f32 1.0, %v2495
  %v2497 = vtanh.pop %v2476
  %v2498 = vmul.f32 %v2496, %v2343
  %2500 = vrot.lane.b32.xlu0 %v2497, 64
  %v2501 = vpop.permute.xlu0 %2500
  %v2503 = vmul.f32 %v2496, %v2501
  %2505 = vrot.lane.b32.xlu0 %v2503, 32
  %v2506 = vpop.permute.xlu0 %2505
  %v2508 = vadd.f32 %v2498, %v2506
  %v2509 = vtanh.pop %v2508
  %2511 = vrot.lane.b32.xlu0 %v2509, 64
  %v2512 = vpop.permute.xlu0 %2511
  %v2514 = vmul.f32 %v2496, %v2512
  %2516 = vrot.lane.b32.xlu0 %v2445, 96
  %v2517 = vpop.permute.xlu0 %2516
  %v2520 = vrot.slane %v2508, 6
  %2522 = vrot.lane.b32.xlu0 %v2451, 96
  %v2523 = vpop.permute.xlu0 %2522
  %v2526 = vrot.slane %v2514, 6
  %v2528 = vsel %vm106, %v2517, %v2520
  %v2529 = vsel %vm2358, %v2528, %v2523
  %v2530 = vsel %vm2360, %v2529, %v2526
  %2531 = vst [vmem:[%s20] sm:$0xc] %v2530
  %v2532 = vrot.slane %v2383, 4
  %v2534 = vadd.f32 %v2153, %v2532
  %v2535 = vxor.u32 %v2534, 2147483648
  %v2536 = vmul.f32 %v2535, 1.442695
  %v2537 = vpow.pop %v2536
  %v2538 = vadd.f32 %v2537, 1.0
  %v2539 = vrcp.pop %v2538
  %v2540 = vmul.f32 %v2538, %v2539
  %v2541 = vsub.f32 1.0, %v2540
  %v2542 = vmul.f32 %v2539, %v2541
  %v2543 = vadd.f32 %v2539, %v2542
  %vm2544 = vweird.f32 %v2538
  %vm2545 = vweird.f32 %v2539
  %vm2546 = vmor %vm2544, %vm2545
  %v2547 = vsel %vm2546, %v2539, %v2543
  %v2548 = vand.u32 2147483647, %v2538
  %vm2549 = vcmp.eq.f32.partialorder %v2548, 8.507059e+37
  %v2550 = vand.u32 %v2538, 2147483648
  %v2551 = vor.u32 1.1754944e-38, %v2550
  %v2552 = vsel %vm2549, %v2551, %v2547
  %v2553 = vmul.f32 1.0, %v2552
  %v2554 = vtanh.pop %v2534
  %v2555 = vrot.slane %v2445, 6
  %v2557 = vmul.f32 %v2553, %v2555
  %2559 = vrot.lane.b32.xlu0 %v2554, 64
  %v2560 = vpop.permute.xlu0 %2559
  %v2562 = vmul.f32 %v2553, %v2560
  %2564 = vrot.lane.b32.xlu0 %v2562, 32
  %v2565 = vpop.permute.xlu0 %2564
  %v2567 = vadd.f32 %v2557, %v2565
  %v2568 = vtanh.pop %v2567
  %2570 = vrot.lane.b32.xlu0 %v2568, 64
  %v2571 = vpop.permute.xlu0 %2570
  %v2573 = vmul.f32 %v2553, %v2571
  %v2575 = vrot.slane %v2573, 4
  %2576 = vrot.lane.b32.xlu0 %v2575, 32
  %v2577 = vpop.permute.xlu0 %2576
  %v2578 = vsel %vm106, %v2577, 0
  %2580 = vmatpush.msra.mxu0 0.0
  %2581 = vmatpush.msra.mxu0 0.0
  %2582 = vmatpush.msra.mxu0 0.0
  %2583 = vmatpush.msra.mxu0 0.0
  %2584 = vmatpush.msra.mxu0 0.0
  %2585 = vmatpush.msra.mxu0 0.0
  %2586 = vmatpush.msra.mxu0 0.0
  %2587 = vmatpush.msra.mxu0 0.0
  %2588 = vmatpush.msra.mxu0 0.0
  %2589 = vmatpush.msra.mxu0 0.0
  %2590 = vmatpush.msra.mxu0 0.0
  %2591 = vmatpush.msra.mxu0 0.0
  %2592 = vmatpush.msra.mxu0 %v2115
  %2593 = vmatpush.msra.mxu0 %v2114
  %2594 = vmatpush.msra.mxu0 %v2113
  %2595 = vmatpush.msra.mxu0 %v2112
  %2596 = vmatmul.f32.gmra.mxu0 %v2578
  %v2597 = vpop.f32.mrf.mxu0
  %v2598 = vadd.f32 %v2407, %v2597
  %2599 = vdwg.mxu0
  %v2600 = vxor.u32 %v2598, 2147483648
  %v2601 = vmul.f32 %v2600, 1.442695
  %v2602 = vpow.pop %v2601
  %v2603 = vadd.f32 %v2602, 1.0
  %v2604 = vrcp.pop %v2603
  %v2605 = vmul.f32 %v2603, %v2604
  %v2606 = vsub.f32 1.0, %v2605
  %v2607 = vmul.f32 %v2604, %v2606
  %v2608 = vadd.f32 %v2604, %v2607
  %vm2609 = vweird.f32 %v2603
  %vm2610 = vweird.f32 %v2604
  %vm2611 = vmor %vm2609, %vm2610
  %v2612 = vsel %vm2611, %v2604, %v2608
  %v2613 = vand.u32 2147483647, %v2603
  %vm2614 = vcmp.eq.f32.partialorder %v2613, 8.507059e+37
  %v2615 = vand.u32 %v2603, 2147483648
  %v2616 = vor.u32 1.1754944e-38, %v2615
  %v2617 = vsel %vm2614, %v2616, %v2612
  %v2618 = vmul.f32 1.0, %v2617
  %v2619 = vtanh.pop %v2598
  %v2620 = vmul.f32 %v2618, %v2508
  %2622 = vrot.lane.b32.xlu0 %v2619, 64
  %v2623 = vpop.permute.xlu0 %2622
  %v2625 = vmul.f32 %v2618, %v2623
  %2627 = vrot.lane.b32.xlu0 %v2625, 32
  %v2628 = vpop.permute.xlu0 %2627
  %v2630 = vadd.f32 %v2620, %v2628
  %v2631 = vtanh.pop %v2630
  %2633 = vrot.lane.b32.xlu0 %v2631, 64
  %v2634 = vpop.permute.xlu0 %2633
  %v2636 = vmul.f32 %v2618, %v2634
  %2638 = vrot.lane.b32.xlu0 %v2567, 96
  %v2639 = vpop.permute.xlu0 %2638
  %v2642 = vrot.slane %v2630, 4
  %2644 = vrot.lane.b32.xlu0 %v2573, 96
  %v2645 = vpop.permute.xlu0 %2644
  %v2648 = vrot.slane %v2636, 4
  %v2650 = vsel %vm106, %v2639, %v2642
  %v2651 = vsel %vm2358, %v2650, %v2645
  %v2652 = vsel %vm2360, %v2651, %v2648
  %2653 = vst [vmem:[%s20] sm:$0x30] %v2652
  %v2654 = vrot.slane %v2383, 2
  %v2656 = vadd.f32 %v2153, %v2654
  %v2657 = vxor.u32 %v2656, 2147483648
  %v2658 = vmul.f32 %v2657, 1.442695
  %v2659 = vpow.pop %v2658
  %v2660 = vadd.f32 %v2659, 1.0
  %v2661 = vrcp.pop %v2660
  %v2662 = vmul.f32 %v2660, %v2661
  %v2663 = vsub.f32 1.0, %v2662
  %v2664 = vmul.f32 %v2661, %v2663
  %v2665 = vadd.f32 %v2661, %v2664
  %vm2666 = vweird.f32 %v2660
  %vm2667 = vweird.f32 %v2661
  %vm2668 = vmor %vm2666, %vm2667
  %v2669 = vsel %vm2668, %v2661, %v2665
  %v2670 = vand.u32 2147483647, %v2660
  %vm2671 = vcmp.eq.f32.partialorder %v2670, 8.507059e+37
  %v2672 = vand.u32 %v2660, 2147483648
  %v2673 = vor.u32 1.1754944e-38, %v2672
  %v2674 = vsel %vm2671, %v2673, %v2669
  %v2675 = vmul.f32 1.0, %v2674
  %v2676 = vtanh.pop %v2656
  %v2677 = vrot.slane %v2567, 6
  %v2679 = vmul.f32 %v2675, %v2677
  %2681 = vrot.lane.b32.xlu0 %v2676, 64
  %v2682 = vpop.permute.xlu0 %2681
  %v2684 = vmul.f32 %v2675, %v2682
  %2686 = vrot.lane.b32.xlu0 %v2684, 32
  %v2687 = vpop.permute.xlu0 %2686
  %v2689 = vadd.f32 %v2679, %v2687
  %v2690 = vtanh.pop %v2689
  %2692 = vrot.lane.b32.xlu0 %v2690, 64
  %v2693 = vpop.permute.xlu0 %2692
  %v2695 = vmul.f32 %v2675, %v2693
  %v2697 = vrot.slane %v2695, 6
  %2698 = vrot.lane.b32.xlu0 %v2697, 32
  %v2699 = vpop.permute.xlu0 %2698
  %v2700 = vsel %vm106, %v2699, 0
  %2702 = vmatpush.msra.mxu0 0.0
  %2703 = vmatpush.msra.mxu0 0.0
  %2704 = vmatpush.msra.mxu0 0.0
  %2705 = vmatpush.msra.mxu0 0.0
  %2706 = vmatpush.msra.mxu0 0.0
  %2707 = vmatpush.msra.mxu0 0.0
  %2708 = vmatpush.msra.mxu0 0.0
  %2709 = vmatpush.msra.mxu0 0.0
  %2710 = vmatpush.msra.mxu0 0.0
  %2711 = vmatpush.msra.mxu0 0.0
  %2712 = vmatpush.msra.mxu0 0.0
  %2713 = vmatpush.msra.mxu0 0.0
  %2714 = vmatpush.msra.mxu0 %v2115
  %2715 = vmatpush.msra.mxu0 %v2114
  %2716 = vmatpush.msra.mxu0 %v2113
  %2717 = vmatpush.msra.mxu0 %v2112
  %2718 = vmatmul.f32.gmra.mxu0 %v2700
  %v2719 = vpop.f32.mrf.mxu0
  %v2720 = vadd.f32 %v2407, %v2719
  %2721 = vdwg.mxu0
  %v2722 = vxor.u32 %v2720, 2147483648
  %v2723 = vmul.f32 %v2722, 1.442695
  %v2724 = vpow.pop %v2723
  %v2725 = vadd.f32 %v2724, 1.0
  %v2726 = vrcp.pop %v2725
  %v2727 = vmul.f32 %v2725, %v2726
  %v2728 = vsub.f32 1.0, %v2727
  %v2729 = vmul.f32 %v2726, %v2728
  %v2730 = vadd.f32 %v2726, %v2729
  %vm2731 = vweird.f32 %v2725
  %vm2732 = vweird.f32 %v2726
  %vm2733 = vmor %vm2731, %vm2732
  %v2734 = vsel %vm2733, %v2726, %v2730
  %v2735 = vand.u32 2147483647, %v2725
  %vm2736 = vcmp.eq.f32.partialorder %v2735, 8.507059e+37
  %v2737 = vand.u32 %v2725, 2147483648
  %v2738 = vor.u32 1.1754944e-38, %v2737
  %v2739 = vsel %vm2736, %v2738, %v2734
  %v2740 = vmul.f32 1.0, %v2739
  %v2741 = vtanh.pop %v2720
  %v2742 = vmul.f32 %v2740, %v2630
  %2744 = vrot.lane.b32.xlu0 %v2741, 64
  %v2745 = vpop.permute.xlu0 %2744
  %v2747 = vmul.f32 %v2740, %v2745
  %2749 = vrot.lane.b32.xlu0 %v2747, 32
  %v2750 = vpop.permute.xlu0 %2749
  %v2752 = vadd.f32 %v2742, %v2750
  %v2753 = vtanh.pop %v2752
  %2755 = vrot.lane.b32.xlu0 %v2753, 64
  %v2756 = vpop.permute.xlu0 %2755
  %v2758 = vmul.f32 %v2740, %v2756
  %2760 = vrot.lane.b32.xlu0 %v2689, 96
  %v2761 = vpop.permute.xlu0 %2760
  %v2764 = vrot.slane %v2752, 2
  %2766 = vrot.lane.b32.xlu0 %v2695, 96
  %v2767 = vpop.permute.xlu0 %2766
  %v2770 = vrot.slane %v2758, 2
  %v2772 = vsel %vm106, %v2761, %v2764
  %v2773 = vsel %vm2358, %v2772, %v2767
  %v2774 = vsel %vm2360, %v2773, %v2770
  %2775 = vst [vmem:[%s20] sm:$0xc0] %v2774
  %v2776 = vadd.f32 %v2156, %v2383
  %v2777 = vxor.u32 %v2776, 2147483648
  %v2778 = vmul.f32 %v2777, 1.442695
  %v2779 = vpow.pop %v2778
  %v2780 = vadd.f32 %v2779, 1.0
  %v2781 = vrcp.pop %v2780
  %v2782 = vmul.f32 %v2780, %v2781
  %v2783 = vsub.f32 1.0, %v2782
  %v2784 = vmul.f32 %v2781, %v2783
  %v2785 = vadd.f32 %v2781, %v2784
  %vm2786 = vweird.f32 %v2780
  %vm2787 = vweird.f32 %v2781
  %vm2788 = vmor %vm2786, %vm2787
  %v2789 = vsel %vm2788, %v2781, %v2785
  %v2790 = vand.u32 2147483647, %v2780
  %vm2791 = vcmp.eq.f32.partialorder %v2790, 8.507059e+37
  %v2792 = vand.u32 %v2780, 2147483648
  %v2793 = vor.u32 1.1754944e-38, %v2792
  %v2794 = vsel %vm2791, %v2793, %v2789
  %v2795 = vmul.f32 1.0, %v2794
  %v2796 = vtanh.pop %v2776
  %v2797 = vrot.slane %v2689, 6
  %v2799 = vmul.f32 %v2795, %v2797
  %2801 = vrot.lane.b32.xlu0 %v2796, 64
  %v2802 = vpop.permute.xlu0 %2801
  %v2804 = vmul.f32 %v2795, %v2802
  %2806 = vrot.lane.b32.xlu0 %v2804, 32
  %v2807 = vpop.permute.xlu0 %2806
  %v2809 = vadd.f32 %v2799, %v2807
  %v2810 = vtanh.pop %v2809
  %2812 = vrot.lane.b32.xlu0 %v2810, 64
  %v2813 = vpop.permute.xlu0 %2812
  %v2815 = vmul.f32 %v2795, %v2813
  %2817 = vrot.lane.b32.xlu0 %v2815, 32
  %v2818 = vpop.permute.xlu0 %2817
  %v2819 = vsel %vm106, %v2818, 0
  %2821 = vmatpush.msra.mxu0 0.0
  %2822 = vmatpush.msra.mxu0 0.0
  %2823 = vmatpush.msra.mxu0 0.0
  %2824 = vmatpush.msra.mxu0 0.0
  %2825 = vmatpush.msra.mxu0 0.0
  %2826 = vmatpush.msra.mxu0 0.0
  %2827 = vmatpush.msra.mxu0 0.0
  %2828 = vmatpush.msra.mxu0 0.0
  %2829 = vmatpush.msra.mxu0 0.0
  %2830 = vmatpush.msra.mxu0 0.0
  %2831 = vmatpush.msra.mxu0 0.0
  %2832 = vmatpush.msra.mxu0 0.0
  %2833 = vmatpush.msra.mxu0 %v2115
  %2834 = vmatpush.msra.mxu0 %v2114
  %2835 = vmatpush.msra.mxu0 %v2113
  %2836 = vmatpush.msra.mxu0 %v2112
  %2837 = vmatmul.f32.gmra.mxu0 %v2819
  %v2838 = vpop.f32.mrf.mxu0
  %v2839 = vadd.f32 %v2407, %v2838
  %2840 = vdwg.mxu0
  %v2841 = vxor.u32 %v2839, 2147483648
  %v2842 = vmul.f32 %v2841, 1.442695
  %v2843 = vpow.pop %v2842
  %v2844 = vadd.f32 %v2843, 1.0
  %v2845 = vrcp.pop %v2844
  %v2846 = vmul.f32 %v2844, %v2845
  %v2847 = vsub.f32 1.0, %v2846
  %v2848 = vmul.f32 %v2845, %v2847
  %v2849 = vadd.f32 %v2845, %v2848
  %vm2850 = vweird.f32 %v2844
  %vm2851 = vweird.f32 %v2845
  %vm2852 = vmor %vm2850, %vm2851
  %v2853 = vsel %vm2852, %v2845, %v2849
  %v2854 = vand.u32 2147483647, %v2844
  %vm2855 = vcmp.eq.f32.partialorder %v2854, 8.507059e+37
  %v2856 = vand.u32 %v2844, 2147483648
  %v2857 = vor.u32 1.1754944e-38, %v2856
  %v2858 = vsel %vm2855, %v2857, %v2853
  %v2859 = vmul.f32 1.0, %v2858
  %v2860 = vtanh.pop %v2839
  %v2861 = vmul.f32 %v2859, %v2752
  %2863 = vrot.lane.b32.xlu0 %v2860, 64
  %v2864 = vpop.permute.xlu0 %2863
  %v2866 = vmul.f32 %v2859, %v2864
  %2868 = vrot.lane.b32.xlu0 %v2866, 32
  %v2869 = vpop.permute.xlu0 %2868
  %v2871 = vadd.f32 %v2861, %v2869
  %v2872 = vtanh.pop %v2871
  %2874 = vrot.lane.b32.xlu0 %v2872, 64
  %v2875 = vpop.permute.xlu0 %2874
  %v2877 = vmul.f32 %v2859, %v2875
  %2879 = vrot.lane.b32.xlu0 %v2809, 96
  %v2880 = vpop.permute.xlu0 %2879
  %2882 = vrot.lane.b32.xlu0 %v2815, 96
  %v2883 = vpop.permute.xlu0 %2882
  %v2885 = vsel %vm106, %v2880, %v2871
  %v2886 = vsel %vm2358, %v2885, %v2883
  %v2887 = vsel %vm2360, %v2886, %v2877
  %2888 = vst [vmem:[%s20 + $0x8] sm:$0x3] %v2887
  %v2889 = vadd.f32 %v2156, %v2410
  %v2890 = vxor.u32 %v2889, 2147483648
  %v2891 = vmul.f32 %v2890, 1.442695
  %v2892 = vpow.pop %v2891
  %v2893 = vadd.f32 %v2892, 1.0
  %v2894 = vrcp.pop %v2893
  %v2895 = vmul.f32 %v2893, %v2894
  %v2896 = vsub.f32 1.0, %v2895
  %v2897 = vmul.f32 %v2894, %v2896
  %v2898 = vadd.f32 %v2894, %v2897
  %vm2899 = vweird.f32 %v2893
  %vm2900 = vweird.f32 %v2894
  %vm2901 = vmor %vm2899, %vm2900
  %v2902 = vsel %vm2901, %v2894, %v2898
  %v2903 = vand.u32 2147483647, %v2893
  %vm2904 = vcmp.eq.f32.partialorder %v2903, 8.507059e+37
  %v2905 = vand.u32 %v2893, 2147483648
  %v2906 = vor.u32 1.1754944e-38, %v2905
  %v2907 = vsel %vm2904, %v2906, %v2902
  %v2908 = vmul.f32 1.0, %v2907
  %v2909 = vtanh.pop %v2889
  %v2910 = vrot.slane %v2809, 6
  %v2912 = vmul.f32 %v2908, %v2910
  %2914 = vrot.lane.b32.xlu0 %v2909, 64
  %v2915 = vpop.permute.xlu0 %2914
  %v2917 = vmul.f32 %v2908, %v2915
  %2919 = vrot.lane.b32.xlu0 %v2917, 32
  %v2920 = vpop.permute.xlu0 %2919
  %v2922 = vadd.f32 %v2912, %v2920
  %v2923 = vtanh.pop %v2922
  %2925 = vrot.lane.b32.xlu0 %v2923, 64
  %v2926 = vpop.permute.xlu0 %2925
  %v2928 = vmul.f32 %v2908, %v2926
  %v2930 = vrot.slane %v2928, 2
  %2931 = vrot.lane.b32.xlu0 %v2930, 32
  %v2932 = vpop.permute.xlu0 %2931
  %v2933 = vsel %vm106, %v2932, 0
  %2935 = vmatpush.msra.mxu0 0.0
  %2936 = vmatpush.msra.mxu0 0.0
  %2937 = vmatpush.msra.mxu0 0.0
  %2938 = vmatpush.msra.mxu0 0.0
  %2939 = vmatpush.msra.mxu0 0.0
  %2940 = vmatpush.msra.mxu0 0.0
  %2941 = vmatpush.msra.mxu0 0.0
  %2942 = vmatpush.msra.mxu0 0.0
  %2943 = vmatpush.msra.mxu0 0.0
  %2944 = vmatpush.msra.mxu0 0.0
  %2945 = vmatpush.msra.mxu0 0.0
  %2946 = vmatpush.msra.mxu0 0.0
  %2947 = vmatpush.msra.mxu0 %v2115
  %2948 = vmatpush.msra.mxu0 %v2114
  %2949 = vmatpush.msra.mxu0 %v2113
  %2950 = vmatpush.msra.mxu0 %v2112
  %2951 = vmatmul.f32.gmra.mxu0 %v2933
  %v2952 = vpop.f32.mrf.mxu0
  %v2953 = vadd.f32 %v2407, %v2952
  %2954 = vdwg.mxu0
  %v2955 = vxor.u32 %v2953, 2147483648
  %v2956 = vmul.f32 %v2955, 1.442695
  %v2957 = vpow.pop %v2956
  %v2958 = vadd.f32 %v2957, 1.0
  %v2959 = vrcp.pop %v2958
  %v2960 = vmul.f32 %v2958, %v2959
  %v2961 = vsub.f32 1.0, %v2960
  %v2962 = vmul.f32 %v2959, %v2961
  %v2963 = vadd.f32 %v2959, %v2962
  %vm2964 = vweird.f32 %v2958
  %vm2965 = vweird.f32 %v2959
  %vm2966 = vmor %vm2964, %vm2965
  %v2967 = vsel %vm2966, %v2959, %v2963
  %v2968 = vand.u32 2147483647, %v2958
  %vm2969 = vcmp.eq.f32.partialorder %v2968, 8.507059e+37
  %v2970 = vand.u32 %v2958, 2147483648
  %v2971 = vor.u32 1.1754944e-38, %v2970
  %v2972 = vsel %vm2969, %v2971, %v2967
  %v2973 = vmul.f32 1.0, %v2972
  %v2974 = vtanh.pop %v2953
  %v2975 = vmul.f32 %v2973, %v2871
  %2977 = vrot.lane.b32.xlu0 %v2974, 64
  %v2978 = vpop.permute.xlu0 %2977
  %v2980 = vmul.f32 %v2973, %v2978
  %2982 = vrot.lane.b32.xlu0 %v2980, 32
  %v2983 = vpop.permute.xlu0 %2982
  %v2985 = vadd.f32 %v2975, %v2983
  %v2986 = vtanh.pop %v2985
  %2988 = vrot.lane.b32.xlu0 %v2986, 64
  %v2989 = vpop.permute.xlu0 %2988
  %v2991 = vmul.f32 %v2973, %v2989
  %2993 = vrot.lane.b32.xlu0 %v2922, 96
  %v2994 = vpop.permute.xlu0 %2993
  %v2997 = vrot.slane %v2985, 6
  %2999 = vrot.lane.b32.xlu0 %v2928, 96
  %v3000 = vpop.permute.xlu0 %2999
  %v3003 = vrot.slane %v2991, 6
  %v3005 = vsel %vm106, %v2994, %v2997
  %v3006 = vsel %vm2358, %v3005, %v3000
  %v3007 = vsel %vm2360, %v3006, %v3003
  %3008 = vst [vmem:[%s20 + $0x8] sm:$0xc] %v3007
  %v3009 = vld [vmem:[%s20] sm:$0xff]
  %v3010 = vld [vmem:[%s20 + $0x8] sm:$0xf]
  %v3011 = vld [vmem:[%s15] sm:$0xff]
  %v3012 = vld [vmem:[%s15 + $0x8] sm:$0xff]
  %v3013 = vld [vmem:[%s15 + $0x10] sm:$0xff]
  %v3014 = vld [vmem:[%s15 + $0x18] sm:$0xff]
  %v3015 = vld [vmem:[%s15 + $0x20] sm:$0xff]
  %v3016 = vld [vmem:[%s15 + $0x28] sm:$0xff]
  %v3017 = vld [vmem:[%s15 + $0x30] sm:$0xff]
  %v3018 = vld [vmem:[%s15 + $0x38] sm:$0xff]
  %v3019 = vld [vmem:[%s15 + $0x40] sm:$0xff]
  %v3020 = vld [vmem:[%s15 + $0x48] sm:$0xff]
  %v3021 = vld [vmem:[%s15 + $0x50] sm:$0xff]
  %v3022 = vld [vmem:[%s15 + $0x58] sm:$0xff]
  %v3023 = vld [vmem:[%s15 + $0x60] sm:$0xff]
  %v3024 = vld [vmem:[%s15 + $0x68] sm:$0xff]
  %v3025 = vld [vmem:[%s15 + $0x70] sm:$0xff]
  %v3026 = vld [vmem:[%s15 + $0x78] sm:$0xff]
  %v3027 = vld [vmem:[%s16] sm:$0x1]
  %v3029 = vperm.slane %v3027, 0
  %3031 = vmatpush.msra.mxu0 %v3026
  %3032 = vmatpush.msra.mxu0 %v3025
  %3033 = vmatpush.msra.mxu0 %v3024
  %3034 = vmatpush.msra.mxu0 %v3023
  %3035 = vmatpush.msra.mxu0 %v3022
  %3036 = vmatpush.msra.mxu0 %v3021
  %3037 = vmatpush.msra.mxu0 %v3020
  %3038 = vmatpush.msra.mxu0 %v3019
  %3039 = vmatpush.msra.mxu0 %v3018
  %3040 = vmatpush.msra.mxu0 %v3017
  %3041 = vmatpush.msra.mxu0 %v3016
  %3042 = vmatpush.msra.mxu0 %v3015
  %3043 = vmatpush.msra.mxu0 %v3014
  %3044 = vmatpush.msra.mxu0 %v3013
  %3045 = vmatpush.msra.mxu0 %v3012
  %3046 = vmatpush.msra.mxu0 %v3011
  %3047 = vmatmul.f32.gmra.mxu0 %v3009
  %v3048 = vpop.f32.mrf.mxu0
  %v3049 = vadd.f32 %v3029, %v3048
  %3050 = vmatmul.f32.gmra.mxu0 %v3010
  %v3051 = vpop.f32.mrf.mxu0
  %v3052 = vadd.f32 %v3029, %v3051
  %3053 = vdwg.mxu0
  %3054 = vmax.xlane.f32.xlu0 %v3049
  %v3055 = vpop.xlane.xlu0 %3054
  %vm3056 = vcmask 1043456
  %v3057 = vsel %vm3056, %v3052, -inf
  %3058 = vmax.xlane.f32.xlu0 %v3057
  %v3059 = vpop.xlane.xlu0 %3058
  %v3060 = vsub.f32 %v3049, %v3055
  %v3061 = vsub.f32 %v3052, %v3059
  %v3062 = vmul.f32 %v3060, 1.442695
  %v3063 = vpow.pop %v3062
  %v3064 = vmul.f32 %v3061, 1.442695
  %v3065 = vpow.pop %v3064
  %3066 = vadd.xlane.f32.xlu0 %v3063
  %v3067 = vpop.xlane.xlu0 %3066
  %v3068 = vsel %vm3056, %v3065, 0.0
  %3069 = vadd.xlane.f32.xlu0 %v3068
  %v3070 = vpop.xlane.xlu0 %3069
  %v3071 = vlog2.pop %v3067
  %v3072 = vmul.f32 %v3071, 0.6931472
  %v3073 = vlog2.pop %v3070
  %v3074 = vmul.f32 %v3073, 0.6931472
  %v3075 = vsub.f32 %v3060, %v3072
  %v3076 = vsub.f32 %v3061, %v3074
  %3077 = vst [vmem:[%s19] sm:$0xff] %v3075
  %3078 = vst [vmem:[%s19 + $0x8] sm:$0xf] %v3076
  // Predicated region
  $region78: #{seq2seq_forward.1} parent=0 // pred_check
    _
  $region79: #{seq2seq_forward.1} parent=0 // pred_check_branch
    %3080 = sbr.rel (0) target = $region81
  $region80: #{seq2seq_forward.1} parent=0 // pred_region
    _
  $region81: #{seq2seq_forward.1} parent=0 // pred_fallthru
    _
  // Predicated region
  $region82: #{seq2seq_forward.1} parent=0 // pred_check
    _
  $region83: #{seq2seq_forward.1} parent=0 // pred_check_branch
    %3082 = sbr.rel (0) target = $region85
  $region84: #{seq2seq_forward.1} parent=0 // pred_region
    _
  $region85: #{seq2seq_forward.1} parent=0 // pred_fallthru
    _
  // Predicated region
  $region86: #{seq2seq_forward.1} parent=0 // pred_check
    _
  $region87: #{seq2seq_forward.1} parent=0 // pred_check_branch
    %3084 = sbr.rel (0) target = $region89
  $region88: #{seq2seq_forward.1} parent=0 // pred_region
    _
  $region89: #{seq2seq_forward.1} parent=0 // pred_fallthru
    _
  // Predicated region
  $region90: #{seq2seq_forward.1} parent=0 // pred_check
    _
  $region91: #{seq2seq_forward.1} parent=0 // pred_check_branch
    %3086 = sbr.rel (0) target = $region93
  $region92: #{seq2seq_forward.1} parent=0 // pred_region
    _
  $region93: #{seq2seq_forward.1} parent=0 // pred_fallthru
    _

</llo_original>
